<compile_context>
chip_gen: v5e
topology: v5e:2x2
jax: 0.10.0
libtpu: 0.0.40
codegen_flags: <defaults>
</compile_context>

<pallas_src>
import functools

import numpy as np
import jax
import jax.numpy as jnp
from jax import lax
from jax.experimental import pallas as pl
from jax.experimental.pallas import tpu as pltpu

SPIKE_DIM = 95   # module default
VEL_DIM = 2
LEN_TRIAL = 25
LOW_DIM = 64     # low_dim
HID = 64         # hidden_dims[0]
LAT = 8          # latent_dim

PARAM_ORDER = ("w_readin", "enc_wih", "enc_whh", "enc_b",
               "mu_w", "mu_b", "lv_w", "lv_b",
               "sde_wih", "sde_whh", "sde_b",
               "fc1_w", "fc1_b", "fc2_w", "fc2_b",
               "vde_w")


# ----------------------------- Pallas kernel ------------------------------ #
def vae_kernel(train, T, Bp, *refs):
    """Single-invocation kernel: whole sequence resident in VMEM, loop unrolled."""
    if train:
        x_ref, eps_ref = refs[0], refs[1]
        rest = refs[2:]
    else:
        x_ref = refs[0]
        eps_ref = None
        rest = refs[1:]

    (w_readin, enc_wih, enc_whh, enc_b,
     mu_w, mu_b, lv_w, lv_b,
     sde_wih, sde_whh, sde_b,
     fc1_w, fc1_b, fc2_w, fc2_b, vde_w,
     re_sp_ref, vel_ref, mu_ref, lv_ref,
     enc_hs, sde_hs) = rest

    f32 = jnp.float32

    # ---- Phase 1: batched (non-recurrent) input projection over all T*Bp rows.
    x_all = x_ref[...]                                                  # [T*Bp, S]
    xl = jnp.dot(x_all, w_readin[...], preferred_element_type=f32)      # [T*Bp, 64]
    xproj = jnp.dot(xl, enc_wih[...], preferred_element_type=f32) + enc_b[...]

    # ---- Phase 2: encoder recurrence -- only the serial W_hh dot + tanh in loop.
    enc_whh_v = enc_whh[...]
    h = jnp.zeros((Bp, HID), f32)                                        # h_0 = 0
    for t in range(T):                                                   # unrolled
        h = jnp.tanh(xproj[t * Bp:(t + 1) * Bp, :]
                     + jnp.dot(h, enc_whh_v, preferred_element_type=f32))
        enc_hs[t * Bp:(t + 1) * Bp, :] = h

    # ---- Phase 3: batched mu / log_var / reparameterization.
    H = enc_hs[...]                                                      # [T*Bp, 64]
    mu = jnp.dot(H, mu_w[...], preferred_element_type=f32) + mu_b[...]
    lv = jnp.dot(H, lv_w[...], preferred_element_type=f32) + lv_b[...]
    mu_ref[...] = mu
    lv_ref[...] = lv
    if train:
        z = eps_ref[...] * jnp.exp(0.5 * lv) + mu
    else:
        z = mu

    # velocity readout: vde_fc_minus_0(z); the python copy loop in forward() is
    # an identity when T == len_trial.
    vel_ref[...] = jnp.dot(z, vde_w[...], preferred_element_type=f32)

    # ---- Phase 4: batched sde input projection.
    zproj = jnp.dot(z, sde_wih[...], preferred_element_type=f32) + sde_b[...]

    # ---- Phase 5: sde recurrence (serial part only).
    sde_whh_v = sde_whh[...]
    hs = jnp.zeros((Bp, LAT), f32)                                       # h_0 = 0
    for t in range(T):                                                   # unrolled
        hs = jnp.tanh(zproj[t * Bp:(t + 1) * Bp, :]
                      + jnp.dot(hs, sde_whh_v, preferred_element_type=f32))
        sde_hs[t * Bp:(t + 1) * Bp, :] = hs

    # ---- Phase 6: batched readouts fc1 -> fc2 (no nonlinearity, as in forward()).
    HS = sde_hs[...]                                                     # [T*Bp, 8]
    r1 = jnp.dot(HS, fc1_w[...], preferred_element_type=f32) + fc1_b[...]
    re_sp_ref[...] = jnp.dot(r1, fc2_w[...], preferred_element_type=f32) + fc2_b[...]


# ------------------------------- Wrapper ----------------------------------- #
@functools.partial(jax.jit, static_argnames=("train_flag",))
def vae_forward(params, x, train_flag=False, eps=None):
    """x: [B, T, spike_dim] float32. Returns (re_sp, vel_hat, mu, log_var), batch-major."""
    B, T, S = x.shape
    assert T == LEN_TRIAL, "forward() assumes T == len_trial"
    Bp = max(8, ((B + 7) // 8) * 8)          # pad batch to full sublanes

    def to_seq2d(a, d):
        a = jnp.transpose(a, (1, 0, 2)).astype(jnp.float32)              # [T, B, d]
        a = jnp.pad(a, ((0, 0), (0, Bp - B), (0, 0)))                    # [T, Bp, d]
        return a.reshape(T * Bp, d)                                      # [T*Bp, d]

    inputs = [to_seq2d(x, S)]
    if train_flag:
        assert eps is not None, "train mode needs externally supplied eps"
        inputs.append(to_seq2d(eps, LAT))
    param_vals = [params[k].astype(jnp.float32) for k in PARAM_ORDER]
    inputs += param_vals

    vmem = pltpu.MemorySpace.VMEM
    out_shape = [jax.ShapeDtypeStruct((T * Bp, S), jnp.float32),
                 jax.ShapeDtypeStruct((T * Bp, VEL_DIM), jnp.float32),
                 jax.ShapeDtypeStruct((T * Bp, LAT), jnp.float32),
                 jax.ShapeDtypeStruct((T * Bp, LAT), jnp.float32)]

    re2, vel2, mu2, lv2 = pl.pallas_call(
        functools.partial(vae_kernel, bool(train_flag), T, Bp),
        in_specs=[pl.BlockSpec(memory_space=vmem)] * len(inputs),
        out_specs=[pl.BlockSpec(memory_space=vmem)] * 4,
        out_shape=out_shape,
        scratch_shapes=[pltpu.VMEM((T * Bp, HID), jnp.float32),   # encoder hidden states
                        pltpu.VMEM((T * Bp, LAT), jnp.float32)],  # sde hidden states
    )(*inputs)

    def to_btd(a2, d):
        return jnp.transpose(a2.reshape(T, Bp, d), (1, 0, 2))[:B]

    return (to_btd(re2, S), to_btd(vel2, VEL_DIM),
            to_btd(mu2, LAT), to_btd(lv2, LAT))


# ------------------------- Deterministic parameters ------------------------ #
def init_params(key, spike_dim=SPIKE_DIM, vel_dim=VEL_DIM):
    """Weights stored already transposed to [in, out]; RNN biases (b_ih+b_hh) combined."""
    keys = jax.random.split(key, 16)

    def u(k, shape, scale=0.1):
        return scale * jax.random.uniform(k, shape, jnp.float32, -1.0, 1.0)

    return dict(
        w_readin=u(keys[0], (spike_dim, LOW_DIM)),
        enc_wih=u(keys[1], (LOW_DIM, HID)),
        enc_whh=u(keys[2], (HID, HID)),
        enc_b=u(keys[3], (1, HID)),
        mu_w=u(keys[4], (HID, LAT)),
        mu_b=u(keys[5], (1, LAT)),
        lv_w=u(keys[6], (HID, LAT)),
        lv_b=u(keys[7], (1, LAT)),
        sde_wih=u(keys[8], (LAT, LAT)),
        sde_whh=u(keys[9], (LAT, LAT)),
        sde_b=u(keys[10], (1, LAT)),
        fc1_w=u(keys[11], (LAT, HID)),
        fc1_b=u(keys[12], (1, HID)),
        fc2_w=u(keys[13], (HID, spike_dim)),
        fc2_b=u(keys[14], (1, spike_dim)),
        vde_w=u(keys[15], (LAT, vel_dim)),
    )


# ----------------------------- Pure-JAX reference -------------------------- #
def vae_ref(params, x, train_flag=False, eps=None):
    B, T, S = x.shape
    xl = x @ params["w_readin"]

    def enc_step(h, xt):
        h = jnp.tanh(xt @ params["enc_wih"] + h @ params["enc_whh"] + params["enc_b"])
        return h, h

    _, hs = lax.scan(enc_step, jnp.zeros((B, HID), jnp.float32),
                     jnp.transpose(xl, (1, 0, 2)))
    hs = jnp.transpose(hs, (1, 0, 2))
    mu = hs @ params["mu_w"] + params["mu_b"]
    lv = hs @ params["lv_w"] + params["lv_b"]
    z = eps * jnp.exp(0.5 * lv) + mu if train_flag else mu

    def sde_step(h, zt):
        h = jnp.tanh(zt @ params["sde_wih"] + h @ params["sde_whh"] + params["sde_b"])
        return h, h

    _, ss = lax.scan(sde_step, jnp.zeros((B, LAT), jnp.float32),
                     jnp.transpose(z, (1, 0, 2)))
    ss = jnp.transpose(ss, (1, 0, 2))
    re_sp = (ss @ params["fc1_w"] + params["fc1_b"]) @ params["fc2_w"] + params["fc2_b"]
    vel = z @ params["vde_w"]
    return re_sp, vel, mu, lv


if __name__ == "__main__":
    key = jax.random.PRNGKey(0)
    pkey, xkey, ekey = jax.random.split(key, 3)
    params = init_params(pkey)

    B, T = 2, LEN_TRIAL
    x = jax.random.normal(xkey, (B, T, SPIKE_DIM), dtype=jnp.float32)

    # eval path (train_flag=False => z = mu); no eps array allocated / passed.
    outs = jax.block_until_ready(vae_forward(params, x, train_flag=False))
    refs = vae_ref(params, x, train_flag=False)
    for o, r in zip(outs, refs):
        np.testing.assert_allclose(np.asarray(o), np.asarray(r), rtol=2e-4, atol=2e-4)

    # train path: reparameterization noise supplied deterministically from JAX PRNG
    eps = jax.random.normal(ekey, (B, T, LAT), dtype=jnp.float32)
    outs_tr = jax.block_until_ready(vae_forward(params, x, train_flag=True, eps=eps))
    refs_tr = vae_ref(params, x, train_flag=True, eps=eps)
    for o, r in zip(outs_tr, refs_tr):
        np.testing.assert_allclose(np.asarray(o), np.asarray(r), rtol=2e-4, atol=2e-4)

    print("KERNEL_OK")
</pallas_src>

<mosaic_0001>
module attributes {stable_mosaic.version = 11 : i64} {
  func.func @vae_kernel(%arg0: memref<200x95xf32, #tpu.memory_space<vmem>>, %arg1: memref<95x64xf32, #tpu.memory_space<vmem>>, %arg2: memref<64x64xf32, #tpu.memory_space<vmem>>, %arg3: memref<64x64xf32, #tpu.memory_space<vmem>>, %arg4: memref<1x64xf32, #tpu.memory_space<vmem>>, %arg5: memref<64x8xf32, #tpu.memory_space<vmem>>, %arg6: memref<1x8xf32, #tpu.memory_space<vmem>>, %arg7: memref<64x8xf32, #tpu.memory_space<vmem>>, %arg8: memref<1x8xf32, #tpu.memory_space<vmem>>, %arg9: memref<8x8xf32, #tpu.memory_space<vmem>>, %arg10: memref<8x8xf32, #tpu.memory_space<vmem>>, %arg11: memref<1x8xf32, #tpu.memory_space<vmem>>, %arg12: memref<8x64xf32, #tpu.memory_space<vmem>>, %arg13: memref<1x64xf32, #tpu.memory_space<vmem>>, %arg14: memref<64x95xf32, #tpu.memory_space<vmem>>, %arg15: memref<1x95xf32, #tpu.memory_space<vmem>>, %arg16: memref<8x2xf32, #tpu.memory_space<vmem>>, %arg17: memref<200x95xf32, #tpu.memory_space<vmem>>, %arg18: memref<200x2xf32, #tpu.memory_space<vmem>>, %arg19: memref<200x8xf32, #tpu.memory_space<vmem>>, %arg20: memref<200x8xf32, #tpu.memory_space<vmem>>, %arg21: memref<200x64xf32, #tpu.memory_space<vmem>>, %arg22: memref<200x8xf32, #tpu.memory_space<vmem>>) attributes {dimension_semantics = [], scalar_prefetch = 0 : i64, scratch_operands = 2 : i64, tpu.core_type = #tpu.core_type<tc>} {
    %c0 = arith.constant 0 : index
    %c0_0 = arith.constant 0 : index
    %0 = vector.load %arg0[%c0, %c0_0] : memref<200x95xf32, #tpu.memory_space<vmem>>, vector<200x95xf32>
    %c0_1 = arith.constant 0 : index
    %c0_2 = arith.constant 0 : index
    %1 = vector.load %arg1[%c0_1, %c0_2] : memref<95x64xf32, #tpu.memory_space<vmem>>, vector<95x64xf32>
    %cst = arith.constant dense<0.000000e+00> : vector<200x64xf32>
    %2 = tpu.matmul %0, %1, %cst {dimension_numbers = #tpu.dot_dimension_numbers<[1], [0], [0], [1], [0, 0, 1, 1], [], []>} : vector<200x95xf32>, vector<95x64xf32>, vector<200x64xf32> -> vector<200x64xf32>
    %c0_3 = arith.constant 0 : index
    %c0_4 = arith.constant 0 : index
    %3 = vector.load %arg2[%c0_3, %c0_4] : memref<64x64xf32, #tpu.memory_space<vmem>>, vector<64x64xf32>
    %cst_5 = arith.constant dense<0.000000e+00> : vector<200x64xf32>
    %4 = tpu.matmul %2, %3, %cst_5 {dimension_numbers = #tpu.dot_dimension_numbers<[1], [0], [0], [1], [0, 0, 1, 1], [], []>} : vector<200x64xf32>, vector<64x64xf32>, vector<200x64xf32> -> vector<200x64xf32>
    %c0_6 = arith.constant 0 : index
    %c0_7 = arith.constant 0 : index
    %5 = vector.load %arg4[%c0_6, %c0_7] : memref<1x64xf32, #tpu.memory_space<vmem>>, vector<1x64xf32>
    %6 = vector.broadcast %5 : vector<1x64xf32> to vector<200x64xf32>
    %7 = arith.addf %4, %6 : vector<200x64xf32>
    %c0_8 = arith.constant 0 : index
    %c0_9 = arith.constant 0 : index
    %8 = vector.load %arg3[%c0_8, %c0_9] : memref<64x64xf32, #tpu.memory_space<vmem>>, vector<64x64xf32>
    %cst_10 = arith.constant 0.000000e+00 : f32
    %9 = vector.broadcast %cst_10 : f32 to vector<8x64xf32>
    %10 = vector.extract_strided_slice %7 {offsets = [0, 0], sizes = [8, 64], strides = [1, 1]} : vector<200x64xf32> to vector<8x64xf32>
    %cst_11 = arith.constant dense<0.000000e+00> : vector<8x64xf32>
    %11 = tpu.matmul %9, %8, %cst_11 {dimension_numbers = #tpu.dot_dimension_numbers<[1], [0], [0], [1], [0, 0, 1, 1], [], []>} : vector<8x64xf32>, vector<64x64xf32>, vector<8x64xf32> -> vector<8x64xf32>
    %12 = arith.addf %10, %11 : vector<8x64xf32>
    %13 = math.tanh %12 : vector<8x64xf32>
    %c0_12 = arith.constant 0 : index
    %c0_13 = arith.constant 0 : index
    %14 = vector.load %arg21[%c0_12, %c0_13] : memref<200x64xf32, #tpu.memory_space<vmem>>, vector<8x64xf32>
    tpu.vector_store %arg21[%c0_12, %c0_13], %13 {strides = array<i32>} : memref<200x64xf32, #tpu.memory_space<vmem>>, vector<8x64xf32>,
    %15 = vector.extract_strided_slice %7 {offsets = [8, 0], sizes = [8, 64], strides = [1, 1]} : vector<200x64xf32> to vector<8x64xf32>
    %cst_14 = arith.constant dense<0.000000e+00> : vector<8x64xf32>
    %16 = tpu.matmul %13, %8, %cst_14 {dimension_numbers = #tpu.dot_dimension_numbers<[1], [0], [0], [1], [0, 0, 1, 1], [], []>} : vector<8x64xf32>, vector<64x64xf32>, vector<8x64xf32> -> vector<8x64xf32>
    %17 = arith.addf %15, %16 : vector<8x64xf32>
    %18 = math.tanh %17 : vector<8x64xf32>
    %c8 = arith.constant 8 : index
    %c0_15 = arith.constant 0 : index
    %19 = vector.load %arg21[%c8, %c0_15] : memref<200x64xf32, #tpu.memory_space<vmem>>, vector<8x64xf32>
    tpu.vector_store %arg21[%c8, %c0_15], %18 {strides = array<i32>} : memref<200x64xf32, #tpu.memory_space<vmem>>, vector<8x64xf32>,
    %20 = vector.extract_strided_slice %7 {offsets = [16, 0], sizes = [8, 64], strides = [1, 1]} : vector<200x64xf32> to vector<8x64xf32>
    %cst_16 = arith.constant dense<0.000000e+00> : vector<8x64xf32>
    %21 = tpu.matmul %18, %8, %cst_16 {dimension_numbers = #tpu.dot_dimension_numbers<[1], [0], [0], [1], [0, 0, 1, 1], [], []>} : vector<8x64xf32>, vector<64x64xf32>, vector<8x64xf32> -> vector<8x64xf32>
    %22 = arith.addf %20, %21 : vector<8x64xf32>
    %23 = math.tanh %22 : vector<8x64xf32>
    %c16 = arith.constant 16 : index
    %c0_17 = arith.constant 0 : index
    %24 = vector.load %arg21[%c16, %c0_17] : memref<200x64xf32, #tpu.memory_space<vmem>>, vector<8x64xf32>
    tpu.vector_store %arg21[%c16, %c0_17], %23 {strides = array<i32>} : memref<200x64xf32, #tpu.memory_space<vmem>>, vector<8x64xf32>,
    %25 = vector.extract_strided_slice %7 {offsets = [24, 0], sizes = [8, 64], strides = [1, 1]} : vector<200x64xf32> to vector<8x64xf32>
    %cst_18 = arith.constant dense<0.000000e+00> : vector<8x64xf32>
    %26 = tpu.matmul %23, %8, %cst_18 {dimension_numbers = #tpu.dot_dimension_numbers<[1], [0], [0], [1], [0, 0, 1, 1], [], []>} : vector<8x64xf32>, vector<64x64xf32>, vector<8x64xf32> -> vector<8x64xf32>
    %27 = arith.addf %25, %26 : vector<8x64xf32>
    %28 = math.tanh %27 : vector<8x64xf32>
    %c24 = arith.constant 24 : index
    %c0_19 = arith.constant 0 : index
    %29 = vector.load %arg21[%c24, %c0_19] : memref<200x64xf32, #tpu.memory_space<vmem>>, vector<8x64xf32>
    tpu.vector_store %arg21[%c24, %c0_19], %28 {strides = array<i32>} : memref<200x64xf32, #tpu.memory_space<vmem>>, vector<8x64xf32>,
    %30 = vector.extract_strided_slice %7 {offsets = [32, 0], sizes = [8, 64], strides = [1, 1]} : vector<200x64xf32> to vector<8x64xf32>
    %cst_20 = arith.constant dense<0.000000e+00> : vector<8x64xf32>
    %31 = tpu.matmul %28, %8, %cst_20 {dimension_numbers = #tpu.dot_dimension_numbers<[1], [0], [0], [1], [0, 0, 1, 1], [], []>} : vector<8x64xf32>, vector<64x64xf32>, vector<8x64xf32> -> vector<8x64xf32>
    %32 = arith.addf %30, %31 : vector<8x64xf32>
    %33 = math.tanh %32 : vector<8x64xf32>
    %c32 = arith.constant 32 : index
    %c0_21 = arith.constant 0 : index
    %34 = vector.load %arg21[%c32, %c0_21] : memref<200x64xf32, #tpu.memory_space<vmem>>, vector<8x64xf32>
    tpu.vector_store %arg21[%c32, %c0_21], %33 {strides = array<i32>} : memref<200x64xf32, #tpu.memory_space<vmem>>, vector<8x64xf32>,
    %35 = vector.extract_strided_slice %7 {offsets = [40, 0], sizes = [8, 64], strides = [1, 1]} : vector<200x64xf32> to vector<8x64xf32>
    %cst_22 = arith.constant dense<0.000000e+00> : vector<8x64xf32>
    %36 = tpu.matmul %33, %8, %cst_22 {dimension_numbers = #tpu.dot_dimension_numbers<[1], [0], [0], [1], [0, 0, 1, 1], [], []>} : vector<8x64xf32>, vector<64x64xf32>, vector<8x64xf32> -> vector<8x64xf32>
    %37 = arith.addf %35, %36 : vector<8x64xf32>
    %38 = math.tanh %37 : vector<8x64xf32>
    %c40 = arith.constant 40 : index
    %c0_23 = arith.constant 0 : index
    %39 = vector.load %arg21[%c40, %c0_23] : memref<200x64xf32, #tpu.memory_space<vmem>>, vector<8x64xf32>
    tpu.vector_store %arg21[%c40, %c0_23], %38 {strides = array<i32>} : memref<200x64xf32, #tpu.memory_space<vmem>>, vector<8x64xf32>,
    %40 = vector.extract_strided_slice %7 {offsets = [48, 0], sizes = [8, 64], strides = [1, 1]} : vector<200x64xf32> to vector<8x64xf32>
    %cst_24 = arith.constant dense<0.000000e+00> : vector<8x64xf32>
    %41 = tpu.matmul %38, %8, %cst_24 {dimension_numbers = #tpu.dot_dimension_numbers<[1], [0], [0], [1], [0, 0, 1, 1], [], []>} : vector<8x64xf32>, vector<64x64xf32>, vector<8x64xf32> -> vector<8x64xf32>
    %42 = arith.addf %40, %41 : vector<8x64xf32>
    %43 = math.tanh %42 : vector<8x64xf32>
    %c48 = arith.constant 48 : index
    %c0_25 = arith.constant 0 : index
    %44 = vector.load %arg21[%c48, %c0_25] : memref<200x64xf32, #tpu.memory_space<vmem>>, vector<8x64xf32>
    tpu.vector_store %arg21[%c48, %c0_25], %43 {strides = array<i32>} : memref<200x64xf32, #tpu.memory_space<vmem>>, vector<8x64xf32>,
    %45 = vector.extract_strided_slice %7 {offsets = [56, 0], sizes = [8, 64], strides = [1, 1]} : vector<200x64xf32> to vector<8x64xf32>
    %cst_26 = arith.constant dense<0.000000e+00> : vector<8x64xf32>
    %46 = tpu.matmul %43, %8, %cst_26 {dimension_numbers = #tpu.dot_dimension_numbers<[1], [0], [0], [1], [0, 0, 1, 1], [], []>} : vector<8x64xf32>, vector<64x64xf32>, vector<8x64xf32> -> vector<8x64xf32>
    %47 = arith.addf %45, %46 : vector<8x64xf32>
    %48 = math.tanh %47 : vector<8x64xf32>
    %c56 = arith.constant 56 : index
    %c0_27 = arith.constant 0 : index
    %49 = vector.load %arg21[%c56, %c0_27] : memref<200x64xf32, #tpu.memory_space<vmem>>, vector<8x64xf32>
    tpu.vector_store %arg21[%c56, %c0_27], %48 {strides = array<i32>} : memref<200x64xf32, #tpu.memory_space<vmem>>, vector<8x64xf32>,
    %50 = vector.extract_strided_slice %7 {offsets = [64, 0], sizes = [8, 64], strides = [1, 1]} : vector<200x64xf32> to vector<8x64xf32>
    %cst_28 = arith.constant dense<0.000000e+00> : vector<8x64xf32>
    %51 = tpu.matmul %48, %8, %cst_28 {dimension_numbers = #tpu.dot_dimension_numbers<[1], [0], [0], [1], [0, 0, 1, 1], [], []>} : vector<8x64xf32>, vector<64x64xf32>, vector<8x64xf32> -> vector<8x64xf32>
    %52 = arith.addf %50, %51 : vector<8x64xf32>
    %53 = math.tanh %52 : vector<8x64xf32>
    %c64 = arith.constant 64 : index
    %c0_29 = arith.constant 0 : index
    %54 = vector.load %arg21[%c64, %c0_29] : memref<200x64xf32, #tpu.memory_space<vmem>>, vector<8x64xf32>
    tpu.vector_store %arg21[%c64, %c0_29], %53 {strides = array<i32>} : memref<200x64xf32, #tpu.memory_space<vmem>>, vector<8x64xf32>,
    %55 = vector.extract_strided_slice %7 {offsets = [72, 0], sizes = [8, 64], strides = [1, 1]} : vector<200x64xf32> to vector<8x64xf32>
    %cst_30 = arith.constant dense<0.000000e+00> : vector<8x64xf32>
    %56 = tpu.matmul %53, %8, %cst_30 {dimension_numbers = #tpu.dot_dimension_numbers<[1], [0], [0], [1], [0, 0, 1, 1], [], []>} : vector<8x64xf32>, vector<64x64xf32>, vector<8x64xf32> -> vector<8x64xf32>
    %57 = arith.addf %55, %56 : vector<8x64xf32>
    %58 = math.tanh %57 : vector<8x64xf32>
    %c72 = arith.constant 72 : index
    %c0_31 = arith.constant 0 : index
    %59 = vector.load %arg21[%c72, %c0_31] : memref<200x64xf32, #tpu.memory_space<vmem>>, vector<8x64xf32>
    tpu.vector_store %arg21[%c72, %c0_31], %58 {strides = array<i32>} : memref<200x64xf32, #tpu.memory_space<vmem>>, vector<8x64xf32>,
    %60 = vector.extract_strided_slice %7 {offsets = [80, 0], sizes = [8, 64], strides = [1, 1]} : vector<200x64xf32> to vector<8x64xf32>
    %cst_32 = arith.constant dense<0.000000e+00> : vector<8x64xf32>
    %61 = tpu.matmul %58, %8, %cst_32 {dimension_numbers = #tpu.dot_dimension_numbers<[1], [0], [0], [1], [0, 0, 1, 1], [], []>} : vector<8x64xf32>, vector<64x64xf32>, vector<8x64xf32> -> vector<8x64xf32>
    %62 = arith.addf %60, %61 : vector<8x64xf32>
    %63 = math.tanh %62 : vector<8x64xf32>
    %c80 = arith.constant 80 : index
    %c0_33 = arith.constant 0 : index
    %64 = vector.load %arg21[%c80, %c0_33] : memref<200x64xf32, #tpu.memory_space<vmem>>, vector<8x64xf32>
    tpu.vector_store %arg21[%c80, %c0_33], %63 {strides = array<i32>} : memref<200x64xf32, #tpu.memory_space<vmem>>, vector<8x64xf32>,
    %65 = vector.extract_strided_slice %7 {offsets = [88, 0], sizes = [8, 64], strides = [1, 1]} : vector<200x64xf32> to vector<8x64xf32>
    %cst_34 = arith.constant dense<0.000000e+00> : vector<8x64xf32>
    %66 = tpu.matmul %63, %8, %cst_34 {dimension_numbers = #tpu.dot_dimension_numbers<[1], [0], [0], [1], [0, 0, 1, 1], [], []>} : vector<8x64xf32>, vector<64x64xf32>, vector<8x64xf32> -> vector<8x64xf32>
    %67 = arith.addf %65, %66 : vector<8x64xf32>
    %68 = math.tanh %67 : vector<8x64xf32>
    %c88 = arith.constant 88 : index
    %c0_35 = arith.constant 0 : index
    %69 = vector.load %arg21[%c88, %c0_35] : memref<200x64xf32, #tpu.memory_space<vmem>>, vector<8x64xf32>
    tpu.vector_store %arg21[%c88, %c0_35], %68 {strides = array<i32>} : memref<200x64xf32, #tpu.memory_space<vmem>>, vector<8x64xf32>,
    %70 = vector.extract_strided_slice %7 {offsets = [96, 0], sizes = [8, 64], strides = [1, 1]} : vector<200x64xf32> to vector<8x64xf32>
    %cst_36 = arith.constant dense<0.000000e+00> : vector<8x64xf32>
    %71 = tpu.matmul %68, %8, %cst_36 {dimension_numbers = #tpu.dot_dimension_numbers<[1], [0], [0], [1], [0, 0, 1, 1], [], []>} : vector<8x64xf32>, vector<64x64xf32>, vector<8x64xf32> -> vector<8x64xf32>
    %72 = arith.addf %70, %71 : vector<8x64xf32>
    %73 = math.tanh %72 : vector<8x64xf32>
    %c96 = arith.constant 96 : index
    %c0_37 = arith.constant 0 : index
    %74 = vector.load %arg21[%c96, %c0_37] : memref<200x64xf32, #tpu.memory_space<vmem>>, vector<8x64xf32>
    tpu.vector_store %arg21[%c96, %c0_37], %73 {strides = array<i32>} : memref<200x64xf32, #tpu.memory_space<vmem>>, vector<8x64xf32>,
    %75 = vector.extract_strided_slice %7 {offsets = [104, 0], sizes = [8, 64], strides = [1, 1]} : vector<200x64xf32> to vector<8x64xf32>
    %cst_38 = arith.constant dense<0.000000e+00> : vector<8x64xf32>
    %76 = tpu.matmul %73, %8, %cst_38 {dimension_numbers = #tpu.dot_dimension_numbers<[1], [0], [0], [1], [0, 0, 1, 1], [], []>} : vector<8x64xf32>, vector<64x64xf32>, vector<8x64xf32> -> vector<8x64xf32>
    %77 = arith.addf %75, %76 : vector<8x64xf32>
    %78 = math.tanh %77 : vector<8x64xf32>
    %c104 = arith.constant 104 : index
    %c0_39 = arith.constant 0 : index
    %79 = vector.load %arg21[%c104, %c0_39] : memref<200x64xf32, #tpu.memory_space<vmem>>, vector<8x64xf32>
    tpu.vector_store %arg21[%c104, %c0_39], %78 {strides = array<i32>} : memref<200x64xf32, #tpu.memory_space<vmem>>, vector<8x64xf32>,
    %80 = vector.extract_strided_slice %7 {offsets = [112, 0], sizes = [8, 64], strides = [1, 1]} : vector<200x64xf32> to vector<8x64xf32>
    %cst_40 = arith.constant dense<0.000000e+00> : vector<8x64xf32>
    %81 = tpu.matmul %78, %8, %cst_40 {dimension_numbers = #tpu.dot_dimension_numbers<[1], [0], [0], [1], [0, 0, 1, 1], [], []>} : vector<8x64xf32>, vector<64x64xf32>, vector<8x64xf32> -> vector<8x64xf32>
    %82 = arith.addf %80, %81 : vector<8x64xf32>
    %83 = math.tanh %82 : vector<8x64xf32>
    %c112 = arith.constant 112 : index
    %c0_41 = arith.constant 0 : index
    %84 = vector.load %arg21[%c112, %c0_41] : memref<200x64xf32, #tpu.memory_space<vmem>>, vector<8x64xf32>
    tpu.vector_store %arg21[%c112, %c0_41], %83 {strides = array<i32>} : memref<200x64xf32, #tpu.memory_space<vmem>>, vector<8x64xf32>,
    %85 = vector.extract_strided_slice %7 {offsets = [120, 0], sizes = [8, 64], strides = [1, 1]} : vector<200x64xf32> to vector<8x64xf32>
    %cst_42 = arith.constant dense<0.000000e+00> : vector<8x64xf32>
    %86 = tpu.matmul %83, %8, %cst_42 {dimension_numbers = #tpu.dot_dimension_numbers<[1], [0], [0], [1], [0, 0, 1, 1], [], []>} : vector<8x64xf32>, vector<64x64xf32>, vector<8x64xf32> -> vector<8x64xf32>
    %87 = arith.addf %85, %86 : vector<8x64xf32>
    %88 = math.tanh %87 : vector<8x64xf32>
    %c120 = arith.constant 120 : index
    %c0_43 = arith.constant 0 : index
    %89 = vector.load %arg21[%c120, %c0_43] : memref<200x64xf32, #tpu.memory_space<vmem>>, vector<8x64xf32>
    tpu.vector_store %arg21[%c120, %c0_43], %88 {strides = array<i32>} : memref<200x64xf32, #tpu.memory_space<vmem>>, vector<8x64xf32>,
    %90 = vector.extract_strided_slice %7 {offsets = [128, 0], sizes = [8, 64], strides = [1, 1]} : vector<200x64xf32> to vector<8x64xf32>
    %cst_44 = arith.constant dense<0.000000e+00> : vector<8x64xf32>
    %91 = tpu.matmul %88, %8, %cst_44 {dimension_numbers = #tpu.dot_dimension_numbers<[1], [0], [0], [1], [0, 0, 1, 1], [], []>} : vector<8x64xf32>, vector<64x64xf32>, vector<8x64xf32> -> vector<8x64xf32>
    %92 = arith.addf %90, %91 : vector<8x64xf32>
    %93 = math.tanh %92 : vector<8x64xf32>
    %c128 = arith.constant 128 : index
    %c0_45 = arith.constant 0 : index
    %94 = vector.load %arg21[%c128, %c0_45] : memref<200x64xf32, #tpu.memory_space<vmem>>, vector<8x64xf32>
    tpu.vector_store %arg21[%c128, %c0_45], %93 {strides = array<i32>} : memref<200x64xf32, #tpu.memory_space<vmem>>, vector<8x64xf32>,
    %95 = vector.extract_strided_slice %7 {offsets = [136, 0], sizes = [8, 64], strides = [1, 1]} : vector<200x64xf32> to vector<8x64xf32>
    %cst_46 = arith.constant dense<0.000000e+00> : vector<8x64xf32>
    %96 = tpu.matmul %93, %8, %cst_46 {dimension_numbers = #tpu.dot_dimension_numbers<[1], [0], [0], [1], [0, 0, 1, 1], [], []>} : vector<8x64xf32>, vector<64x64xf32>, vector<8x64xf32> -> vector<8x64xf32>
    %97 = arith.addf %95, %96 : vector<8x64xf32>
    %98 = math.tanh %97 : vector<8x64xf32>
    %c136 = arith.constant 136 : index
    %c0_47 = arith.constant 0 : index
    %99 = vector.load %arg21[%c136, %c0_47] : memref<200x64xf32, #tpu.memory_space<vmem>>, vector<8x64xf32>
    tpu.vector_store %arg21[%c136, %c0_47], %98 {strides = array<i32>} : memref<200x64xf32, #tpu.memory_space<vmem>>, vector<8x64xf32>,
    %100 = vector.extract_strided_slice %7 {offsets = [144, 0], sizes = [8, 64], strides = [1, 1]} : vector<200x64xf32> to vector<8x64xf32>
    %cst_48 = arith.constant dense<0.000000e+00> : vector<8x64xf32>
    %101 = tpu.matmul %98, %8, %cst_48 {dimension_numbers = #tpu.dot_dimension_numbers<[1], [0], [0], [1], [0, 0, 1, 1], [], []>} : vector<8x64xf32>, vector<64x64xf32>, vector<8x64xf32> -> vector<8x64xf32>
    %102 = arith.addf %100, %101 : vector<8x64xf32>
    %103 = math.tanh %102 : vector<8x64xf32>
    %c144 = arith.constant 144 : index
    %c0_49 = arith.constant 0 : index
    %104 = vector.load %arg21[%c144, %c0_49] : memref<200x64xf32, #tpu.memory_space<vmem>>, vector<8x64xf32>
    tpu.vector_store %arg21[%c144, %c0_49], %103 {strides = array<i32>} : memref<200x64xf32, #tpu.memory_space<vmem>>, vector<8x64xf32>,
    %105 = vector.extract_strided_slice %7 {offsets = [152, 0], sizes = [8, 64], strides = [1, 1]} : vector<200x64xf32> to vector<8x64xf32>
    %cst_50 = arith.constant dense<0.000000e+00> : vector<8x64xf32>
    %106 = tpu.matmul %103, %8, %cst_50 {dimension_numbers = #tpu.dot_dimension_numbers<[1], [0], [0], [1], [0, 0, 1, 1], [], []>} : vector<8x64xf32>, vector<64x64xf32>, vector<8x64xf32> -> vector<8x64xf32>
    %107 = arith.addf %105, %106 : vector<8x64xf32>
    %108 = math.tanh %107 : vector<8x64xf32>
    %c152 = arith.constant 152 : index
    %c0_51 = arith.constant 0 : index
    %109 = vector.load %arg21[%c152, %c0_51] : memref<200x64xf32, #tpu.memory_space<vmem>>, vector<8x64xf32>
    tpu.vector_store %arg21[%c152, %c0_51], %108 {strides = array<i32>} : memref<200x64xf32, #tpu.memory_space<vmem>>, vector<8x64xf32>,
    %110 = vector.extract_strided_slice %7 {offsets = [160, 0], sizes = [8, 64], strides = [1, 1]} : vector<200x64xf32> to vector<8x64xf32>
    %cst_52 = arith.constant dense<0.000000e+00> : vector<8x64xf32>
    %111 = tpu.matmul %108, %8, %cst_52 {dimension_numbers = #tpu.dot_dimension_numbers<[1], [0], [0], [1], [0, 0, 1, 1], [], []>} : vector<8x64xf32>, vector<64x64xf32>, vector<8x64xf32> -> vector<8x64xf32>
    %112 = arith.addf %110, %111 : vector<8x64xf32>
    %113 = math.tanh %112 : vector<8x64xf32>
    %c160 = arith.constant 160 : index
    %c0_53 = arith.constant 0 : index
    %114 = vector.load %arg21[%c160, %c0_53] : memref<200x64xf32, #tpu.memory_space<vmem>>, vector<8x64xf32>
    tpu.vector_store %arg21[%c160, %c0_53], %113 {strides = array<i32>} : memref<200x64xf32, #tpu.memory_space<vmem>>, vector<8x64xf32>,
    %115 = vector.extract_strided_slice %7 {offsets = [168, 0], sizes = [8, 64], strides = [1, 1]} : vector<200x64xf32> to vector<8x64xf32>
    %cst_54 = arith.constant dense<0.000000e+00> : vector<8x64xf32>
    %116 = tpu.matmul %113, %8, %cst_54 {dimension_numbers = #tpu.dot_dimension_numbers<[1], [0], [0], [1], [0, 0, 1, 1], [], []>} : vector<8x64xf32>, vector<64x64xf32>, vector<8x64xf32> -> vector<8x64xf32>
    %117 = arith.addf %115, %116 : vector<8x64xf32>
    %118 = math.tanh %117 : vector<8x64xf32>
    %c168 = arith.constant 168 : index
    %c0_55 = arith.constant 0 : index
    %119 = vector.load %arg21[%c168, %c0_55] : memref<200x64xf32, #tpu.memory_space<vmem>>, vector<8x64xf32>
    tpu.vector_store %arg21[%c168, %c0_55], %118 {strides = array<i32>} : memref<200x64xf32, #tpu.memory_space<vmem>>, vector<8x64xf32>,
    %120 = vector.extract_strided_slice %7 {offsets = [176, 0], sizes = [8, 64], strides = [1, 1]} : vector<200x64xf32> to vector<8x64xf32>
    %cst_56 = arith.constant dense<0.000000e+00> : vector<8x64xf32>
    %121 = tpu.matmul %118, %8, %cst_56 {dimension_numbers = #tpu.dot_dimension_numbers<[1], [0], [0], [1], [0, 0, 1, 1], [], []>} : vector<8x64xf32>, vector<64x64xf32>, vector<8x64xf32> -> vector<8x64xf32>
    %122 = arith.addf %120, %121 : vector<8x64xf32>
    %123 = math.tanh %122 : vector<8x64xf32>
    %c176 = arith.constant 176 : index
    %c0_57 = arith.constant 0 : index
    %124 = vector.load %arg21[%c176, %c0_57] : memref<200x64xf32, #tpu.memory_space<vmem>>, vector<8x64xf32>
    tpu.vector_store %arg21[%c176, %c0_57], %123 {strides = array<i32>} : memref<200x64xf32, #tpu.memory_space<vmem>>, vector<8x64xf32>,
    %125 = vector.extract_strided_slice %7 {offsets = [184, 0], sizes = [8, 64], strides = [1, 1]} : vector<200x64xf32> to vector<8x64xf32>
    %cst_58 = arith.constant dense<0.000000e+00> : vector<8x64xf32>
    %126 = tpu.matmul %123, %8, %cst_58 {dimension_numbers = #tpu.dot_dimension_numbers<[1], [0], [0], [1], [0, 0, 1, 1], [], []>} : vector<8x64xf32>, vector<64x64xf32>, vector<8x64xf32> -> vector<8x64xf32>
    %127 = arith.addf %125, %126 : vector<8x64xf32>
    %128 = math.tanh %127 : vector<8x64xf32>
    %c184 = arith.constant 184 : index
    %c0_59 = arith.constant 0 : index
    %129 = vector.load %arg21[%c184, %c0_59] : memref<200x64xf32, #tpu.memory_space<vmem>>, vector<8x64xf32>
    tpu.vector_store %arg21[%c184, %c0_59], %128 {strides = array<i32>} : memref<200x64xf32, #tpu.memory_space<vmem>>, vector<8x64xf32>,
    %130 = vector.extract_strided_slice %7 {offsets = [192, 0], sizes = [8, 64], strides = [1, 1]} : vector<200x64xf32> to vector<8x64xf32>
    %cst_60 = arith.constant dense<0.000000e+00> : vector<8x64xf32>
    %131 = tpu.matmul %128, %8, %cst_60 {dimension_numbers = #tpu.dot_dimension_numbers<[1], [0], [0], [1], [0, 0, 1, 1], [], []>} : vector<8x64xf32>, vector<64x64xf32>, vector<8x64xf32> -> vector<8x64xf32>
    %132 = arith.addf %130, %131 : vector<8x64xf32>
    %133 = math.tanh %132 : vector<8x64xf32>
    %c192 = arith.constant 192 : index
    %c0_61 = arith.constant 0 : index
    %134 = vector.load %arg21[%c192, %c0_61] : memref<200x64xf32, #tpu.memory_space<vmem>>, vector<8x64xf32>
    tpu.vector_store %arg21[%c192, %c0_61], %133 {strides = array<i32>} : memref<200x64xf32, #tpu.memory_space<vmem>>, vector<8x64xf32>,
    %c0_62 = arith.constant 0 : index
    %c0_63 = arith.constant 0 : index
    %135 = vector.load %arg21[%c0_62, %c0_63] : memref<200x64xf32, #tpu.memory_space<vmem>>, vector<200x64xf32>
    %c0_64 = arith.constant 0 : index
    %c0_65 = arith.constant 0 : index
    %136 = vector.load %arg5[%c0_64, %c0_65] : memref<64x8xf32, #tpu.memory_space<vmem>>, vector<64x8xf32>
    %cst_66 = arith.constant dense<0.000000e+00> : vector<200x8xf32>
    %137 = tpu.matmul %135, %136, %cst_66 {dimension_numbers = #tpu.dot_dimension_numbers<[1], [0], [0], [1], [0, 0, 1, 1], [], []>} : vector<200x64xf32>, vector<64x8xf32>, vector<200x8xf32> -> vector<200x8xf32>
    %c0_67 = arith.constant 0 : index
    %c0_68 = arith.constant 0 : index
    %138 = vector.load %arg6[%c0_67, %c0_68] : memref<1x8xf32, #tpu.memory_space<vmem>>, vector<1x8xf32>
    %139 = vector.broadcast %138 : vector<1x8xf32> to vector<200x8xf32>
    %140 = arith.addf %137, %139 : vector<200x8xf32>
    %c0_69 = arith.constant 0 : index
    %c0_70 = arith.constant 0 : index
    %141 = vector.load %arg7[%c0_69, %c0_70] : memref<64x8xf32, #tpu.memory_space<vmem>>, vector<64x8xf32>
    %cst_71 = arith.constant dense<0.000000e+00> : vector<200x8xf32>
    %142 = tpu.matmul %135, %141, %cst_71 {dimension_numbers = #tpu.dot_dimension_numbers<[1], [0], [0], [1], [0, 0, 1, 1], [], []>} : vector<200x64xf32>, vector<64x8xf32>, vector<200x8xf32> -> vector<200x8xf32>
    %c0_72 = arith.constant 0 : index
    %c0_73 = arith.constant 0 : index
    %143 = vector.load %arg8[%c0_72, %c0_73] : memref<1x8xf32, #tpu.memory_space<vmem>>, vector<1x8xf32>
    %144 = vector.broadcast %143 : vector<1x8xf32> to vector<200x8xf32>
    %145 = arith.addf %142, %144 : vector<200x8xf32>
    %c0_74 = arith.constant 0 : index
    %c0_75 = arith.constant 0 : index
    %146 = vector.load %arg19[%c0_74, %c0_75] : memref<200x8xf32, #tpu.memory_space<vmem>>, vector<200x8xf32>
    tpu.vector_store %arg19[%c0_74, %c0_75], %140 {strides = array<i32>} : memref<200x8xf32, #tpu.memory_space<vmem>>, vector<200x8xf32>,
    %c0_76 = arith.constant 0 : index
    %c0_77 = arith.constant 0 : index
    %147 = vector.load %arg20[%c0_76, %c0_77] : memref<200x8xf32, #tpu.memory_space<vmem>>, vector<200x8xf32>
    tpu.vector_store %arg20[%c0_76, %c0_77], %145 {strides = array<i32>} : memref<200x8xf32, #tpu.memory_space<vmem>>, vector<200x8xf32>,
    %c0_78 = arith.constant 0 : index
    %c0_79 = arith.constant 0 : index
    %148 = vector.load %arg16[%c0_78, %c0_79] : memref<8x2xf32, #tpu.memory_space<vmem>>, vector<8x2xf32>
    %cst_80 = arith.constant dense<0.000000e+00> : vector<200x2xf32>
    %149 = tpu.matmul %140, %148, %cst_80 {dimension_numbers = #tpu.dot_dimension_numbers<[1], [0], [0], [1], [0, 0, 1, 1], [], []>} : vector<200x8xf32>, vector<8x2xf32>, vector<200x2xf32> -> vector<200x2xf32>
    %c0_81 = arith.constant 0 : index
    %c0_82 = arith.constant 0 : index
    %150 = vector.load %arg18[%c0_81, %c0_82] : memref<200x2xf32, #tpu.memory_space<vmem>>, vector<200x2xf32>
    tpu.vector_store %arg18[%c0_81, %c0_82], %149 {strides = array<i32>} : memref<200x2xf32, #tpu.memory_space<vmem>>, vector<200x2xf32>,
    %c0_83 = arith.constant 0 : index
    %c0_84 = arith.constant 0 : index
    %151 = vector.load %arg9[%c0_83, %c0_84] : memref<8x8xf32, #tpu.memory_space<vmem>>, vector<8x8xf32>
    %cst_85 = arith.constant dense<0.000000e+00> : vector<200x8xf32>
    %152 = tpu.matmul %140, %151, %cst_85 {dimension_numbers = #tpu.dot_dimension_numbers<[1], [0], [0], [1], [0, 0, 1, 1], [], []>} : vector<200x8xf32>, vector<8x8xf32>, vector<200x8xf32> -> vector<200x8xf32>
    %c0_86 = arith.constant 0 : index
    %c0_87 = arith.constant 0 : index
    %153 = vector.load %arg11[%c0_86, %c0_87] : memref<1x8xf32, #tpu.memory_space<vmem>>, vector<1x8xf32>
    %154 = vector.broadcast %153 : vector<1x8xf32> to vector<200x8xf32>
    %155 = arith.addf %152, %154 : vector<200x8xf32>
    %c0_88 = arith.constant 0 : index
    %c0_89 = arith.constant 0 : index
    %156 = vector.load %arg10[%c0_88, %c0_89] : memref<8x8xf32, #tpu.memory_space<vmem>>, vector<8x8xf32>
    %cst_90 = arith.constant 0.000000e+00 : f32
    %157 = vector.broadcast %cst_90 : f32 to vector<8x8xf32>
    %158 = vector.extract_strided_slice %155 {offsets = [0, 0], sizes = [8, 8], strides = [1, 1]} : vector<200x8xf32> to vector<8x8xf32>
    %cst_91 = arith.constant dense<0.000000e+00> : vector<8x8xf32>
    %159 = tpu.matmul %157, %156, %cst_91 {dimension_numbers = #tpu.dot_dimension_numbers<[1], [0], [0], [1], [0, 0, 1, 1], [], []>} : vector<8x8xf32>, vector<8x8xf32>, vector<8x8xf32> -> vector<8x8xf32>
    %160 = arith.addf %158, %159 : vector<8x8xf32>
    %161 = math.tanh %160 : vector<8x8xf32>
    %c0_92 = arith.constant 0 : index
    %c0_93 = arith.constant 0 : index
    %162 = vector.load %arg22[%c0_92, %c0_93] : memref<200x8xf32, #tpu.memory_space<vmem>>, vector<8x8xf32>
    tpu.vector_store %arg22[%c0_92, %c0_93], %161 {strides = array<i32>} : memref<200x8xf32, #tpu.memory_space<vmem>>, vector<8x8xf32>,
    %163 = vector.extract_strided_slice %155 {offsets = [8, 0], sizes = [8, 8], strides = [1, 1]} : vector<200x8xf32> to vector<8x8xf32>
    %cst_94 = arith.constant dense<0.000000e+00> : vector<8x8xf32>
    %164 = tpu.matmul %161, %156, %cst_94 {dimension_numbers = #tpu.dot_dimension_numbers<[1], [0], [0], [1], [0, 0, 1, 1], [], []>} : vector<8x8xf32>, vector<8x8xf32>, vector<8x8xf32> -> vector<8x8xf32>
    %165 = arith.addf %163, %164 : vector<8x8xf32>
    %166 = math.tanh %165 : vector<8x8xf32>
    %c8_95 = arith.constant 8 : index
    %c0_96 = arith.constant 0 : index
    %167 = vector.load %arg22[%c8_95, %c0_96] : memref<200x8xf32, #tpu.memory_space<vmem>>, vector<8x8xf32>
    tpu.vector_store %arg22[%c8_95, %c0_96], %166 {strides = array<i32>} : memref<200x8xf32, #tpu.memory_space<vmem>>, vector<8x8xf32>,
    %168 = vector.extract_strided_slice %155 {offsets = [16, 0], sizes = [8, 8], strides = [1, 1]} : vector<200x8xf32> to vector<8x8xf32>
    %cst_97 = arith.constant dense<0.000000e+00> : vector<8x8xf32>
    %169 = tpu.matmul %166, %156, %cst_97 {dimension_numbers = #tpu.dot_dimension_numbers<[1], [0], [0], [1], [0, 0, 1, 1], [], []>} : vector<8x8xf32>, vector<8x8xf32>, vector<8x8xf32> -> vector<8x8xf32>
    %170 = arith.addf %168, %169 : vector<8x8xf32>
    %171 = math.tanh %170 : vector<8x8xf32>
    %c16_98 = arith.constant 16 : index
    %c0_99 = arith.constant 0 : index
    %172 = vector.load %arg22[%c16_98, %c0_99] : memref<200x8xf32, #tpu.memory_space<vmem>>, vector<8x8xf32>
    tpu.vector_store %arg22[%c16_98, %c0_99], %171 {strides = array<i32>} : memref<200x8xf32, #tpu.memory_space<vmem>>, vector<8x8xf32>,
    %173 = vector.extract_strided_slice %155 {offsets = [24, 0], sizes = [8, 8], strides = [1, 1]} : vector<200x8xf32> to vector<8x8xf32>
    %cst_100 = arith.constant dense<0.000000e+00> : vector<8x8xf32>
    %174 = tpu.matmul %171, %156, %cst_100 {dimension_numbers = #tpu.dot_dimension_numbers<[1], [0], [0], [1], [0, 0, 1, 1], [], []>} : vector<8x8xf32>, vector<8x8xf32>, vector<8x8xf32> -> vector<8x8xf32>
    %175 = arith.addf %173, %174 : vector<8x8xf32>
    %176 = math.tanh %175 : vector<8x8xf32>
    %c24_101 = arith.constant 24 : index
    %c0_102 = arith.constant 0 : index
    %177 = vector.load %arg22[%c24_101, %c0_102] : memref<200x8xf32, #tpu.memory_space<vmem>>, vector<8x8xf32>
    tpu.vector_store %arg22[%c24_101, %c0_102], %176 {strides = array<i32>} : memref<200x8xf32, #tpu.memory_space<vmem>>, vector<8x8xf32>,
    %178 = vector.extract_strided_slice %155 {offsets = [32, 0], sizes = [8, 8], strides = [1, 1]} : vector<200x8xf32> to vector<8x8xf32>
    %cst_103 = arith.constant dense<0.000000e+00> : vector<8x8xf32>
    %179 = tpu.matmul %176, %156, %cst_103 {dimension_numbers = #tpu.dot_dimension_numbers<[1], [0], [0], [1], [0, 0, 1, 1], [], []>} : vector<8x8xf32>, vector<8x8xf32>, vector<8x8xf32> -> vector<8x8xf32>
    %180 = arith.addf %178, %179 : vector<8x8xf32>
    %181 = math.tanh %180 : vector<8x8xf32>
    %c32_104 = arith.constant 32 : index
    %c0_105 = arith.constant 0 : index
    %182 = vector.load %arg22[%c32_104, %c0_105] : memref<200x8xf32, #tpu.memory_space<vmem>>, vector<8x8xf32>
    tpu.vector_store %arg22[%c32_104, %c0_105], %181 {strides = array<i32>} : memref<200x8xf32, #tpu.memory_space<vmem>>, vector<8x8xf32>,
    %183 = vector.extract_strided_slice %155 {offsets = [40, 0], sizes = [8, 8], strides = [1, 1]} : vector<200x8xf32> to vector<8x8xf32>
    %cst_106 = arith.constant dense<0.000000e+00> : vector<8x8xf32>
    %184 = tpu.matmul %181, %156, %cst_106 {dimension_numbers = #tpu.dot_dimension_numbers<[1], [0], [0], [1], [0, 0, 1, 1], [], []>} : vector<8x8xf32>, vector<8x8xf32>, vector<8x8xf32> -> vector<8x8xf32>
    %185 = arith.addf %183, %184 : vector<8x8xf32>
    %186 = math.tanh %185 : vector<8x8xf32>
    %c40_107 = arith.constant 40 : index
    %c0_108 = arith.constant 0 : index
    %187 = vector.load %arg22[%c40_107, %c0_108] : memref<200x8xf32, #tpu.memory_space<vmem>>, vector<8x8xf32>
    tpu.vector_store %arg22[%c40_107, %c0_108], %186 {strides = array<i32>} : memref<200x8xf32, #tpu.memory_space<vmem>>, vector<8x8xf32>,
    %188 = vector.extract_strided_slice %155 {offsets = [48, 0], sizes = [8, 8], strides = [1, 1]} : vector<200x8xf32> to vector<8x8xf32>
    %cst_109 = arith.constant dense<0.000000e+00> : vector<8x8xf32>
    %189 = tpu.matmul %186, %156, %cst_109 {dimension_numbers = #tpu.dot_dimension_numbers<[1], [0], [0], [1], [0, 0, 1, 1], [], []>} : vector<8x8xf32>, vector<8x8xf32>, vector<8x8xf32> -> vector<8x8xf32>
    %190 = arith.addf %188, %189 : vector<8x8xf32>
    %191 = math.tanh %190 : vector<8x8xf32>
    %c48_110 = arith.constant 48 : index
    %c0_111 = arith.constant 0 : index
    %192 = vector.load %arg22[%c48_110, %c0_111] : memref<200x8xf32, #tpu.memory_space<vmem>>, vector<8x8xf32>
    tpu.vector_store %arg22[%c48_110, %c0_111], %191 {strides = array<i32>} : memref<200x8xf32, #tpu.memory_space<vmem>>, vector<8x8xf32>,
    %193 = vector.extract_strided_slice %155 {offsets = [56, 0], sizes = [8, 8], strides = [1, 1]} : vector<200x8xf32> to vector<8x8xf32>
    %cst_112 = arith.constant dense<0.000000e+00> : vector<8x8xf32>
    %194 = tpu.matmul %191, %156, %cst_112 {dimension_numbers = #tpu.dot_dimension_numbers<[1], [0], [0], [1], [0, 0, 1, 1], [], []>} : vector<8x8xf32>, vector<8x8xf32>, vector<8x8xf32> -> vector<8x8xf32>
    %195 = arith.addf %193, %194 : vector<8x8xf32>
    %196 = math.tanh %195 : vector<8x8xf32>
    %c56_113 = arith.constant 56 : index
    %c0_114 = arith.constant 0 : index
    %197 = vector.load %arg22[%c56_113, %c0_114] : memref<200x8xf32, #tpu.memory_space<vmem>>, vector<8x8xf32>
    tpu.vector_store %arg22[%c56_113, %c0_114], %196 {strides = array<i32>} : memref<200x8xf32, #tpu.memory_space<vmem>>, vector<8x8xf32>,
    %198 = vector.extract_strided_slice %155 {offsets = [64, 0], sizes = [8, 8], strides = [1, 1]} : vector<200x8xf32> to vector<8x8xf32>
    %cst_115 = arith.constant dense<0.000000e+00> : vector<8x8xf32>
    %199 = tpu.matmul %196, %156, %cst_115 {dimension_numbers = #tpu.dot_dimension_numbers<[1], [0], [0], [1], [0, 0, 1, 1], [], []>} : vector<8x8xf32>, vector<8x8xf32>, vector<8x8xf32> -> vector<8x8xf32>
    %200 = arith.addf %198, %199 : vector<8x8xf32>
    %201 = math.tanh %200 : vector<8x8xf32>
    %c64_116 = arith.constant 64 : index
    %c0_117 = arith.constant 0 : index
    %202 = vector.load %arg22[%c64_116, %c0_117] : memref<200x8xf32, #tpu.memory_space<vmem>>, vector<8x8xf32>
    tpu.vector_store %arg22[%c64_116, %c0_117], %201 {strides = array<i32>} : memref<200x8xf32, #tpu.memory_space<vmem>>, vector<8x8xf32>,
    %203 = vector.extract_strided_slice %155 {offsets = [72, 0], sizes = [8, 8], strides = [1, 1]} : vector<200x8xf32> to vector<8x8xf32>
    %cst_118 = arith.constant dense<0.000000e+00> : vector<8x8xf32>
    %204 = tpu.matmul %201, %156, %cst_118 {dimension_numbers = #tpu.dot_dimension_numbers<[1], [0], [0], [1], [0, 0, 1, 1], [], []>} : vector<8x8xf32>, vector<8x8xf32>, vector<8x8xf32> -> vector<8x8xf32>
    %205 = arith.addf %203, %204 : vector<8x8xf32>
    %206 = math.tanh %205 : vector<8x8xf32>
    %c72_119 = arith.constant 72 : index
    %c0_120 = arith.constant 0 : index
    %207 = vector.load %arg22[%c72_119, %c0_120] : memref<200x8xf32, #tpu.memory_space<vmem>>, vector<8x8xf32>
    tpu.vector_store %arg22[%c72_119, %c0_120], %206 {strides = array<i32>} : memref<200x8xf32, #tpu.memory_space<vmem>>, vector<8x8xf32>,
    %208 = vector.extract_strided_slice %155 {offsets = [80, 0], sizes = [8, 8], strides = [1, 1]} : vector<200x8xf32> to vector<8x8xf32>
    %cst_121 = arith.constant dense<0.000000e+00> : vector<8x8xf32>
    %209 = tpu.matmul %206, %156, %cst_121 {dimension_numbers = #tpu.dot_dimension_numbers<[1], [0], [0], [1], [0, 0, 1, 1], [], []>} : vector<8x8xf32>, vector<8x8xf32>, vector<8x8xf32> -> vector<8x8xf32>
    %210 = arith.addf %208, %209 : vector<8x8xf32>
    %211 = math.tanh %210 : vector<8x8xf32>
    %c80_122 = arith.constant 80 : index
    %c0_123 = arith.constant 0 : index
    %212 = vector.load %arg22[%c80_122, %c0_123] : memref<200x8xf32, #tpu.memory_space<vmem>>, vector<8x8xf32>
    tpu.vector_store %arg22[%c80_122, %c0_123], %211 {strides = array<i32>} : memref<200x8xf32, #tpu.memory_space<vmem>>, vector<8x8xf32>,
    %213 = vector.extract_strided_slice %155 {offsets = [88, 0], sizes = [8, 8], strides = [1, 1]} : vector<200x8xf32> to vector<8x8xf32>
    %cst_124 = arith.constant dense<0.000000e+00> : vector<8x8xf32>
    %214 = tpu.matmul %211, %156, %cst_124 {dimension_numbers = #tpu.dot_dimension_numbers<[1], [0], [0], [1], [0, 0, 1, 1], [], []>} : vector<8x8xf32>, vector<8x8xf32>, vector<8x8xf32> -> vector<8x8xf32>
    %215 = arith.addf %213, %214 : vector<8x8xf32>
    %216 = math.tanh %215 : vector<8x8xf32>
    %c88_125 = arith.constant 88 : index
    %c0_126 = arith.constant 0 : index
    %217 = vector.load %arg22[%c88_125, %c0_126] : memref<200x8xf32, #tpu.memory_space<vmem>>, vector<8x8xf32>
    tpu.vector_store %arg22[%c88_125, %c0_126], %216 {strides = array<i32>} : memref<200x8xf32, #tpu.memory_space<vmem>>, vector<8x8xf32>,
    %218 = vector.extract_strided_slice %155 {offsets = [96, 0], sizes = [8, 8], strides = [1, 1]} : vector<200x8xf32> to vector<8x8xf32>
    %cst_127 = arith.constant dense<0.000000e+00> : vector<8x8xf32>
    %219 = tpu.matmul %216, %156, %cst_127 {dimension_numbers = #tpu.dot_dimension_numbers<[1], [0], [0], [1], [0, 0, 1, 1], [], []>} : vector<8x8xf32>, vector<8x8xf32>, vector<8x8xf32> -> vector<8x8xf32>
    %220 = arith.addf %218, %219 : vector<8x8xf32>
    %221 = math.tanh %220 : vector<8x8xf32>
    %c96_128 = arith.constant 96 : index
    %c0_129 = arith.constant 0 : index
    %222 = vector.load %arg22[%c96_128, %c0_129] : memref<200x8xf32, #tpu.memory_space<vmem>>, vector<8x8xf32>
    tpu.vector_store %arg22[%c96_128, %c0_129], %221 {strides = array<i32>} : memref<200x8xf32, #tpu.memory_space<vmem>>, vector<8x8xf32>,
    %223 = vector.extract_strided_slice %155 {offsets = [104, 0], sizes = [8, 8], strides = [1, 1]} : vector<200x8xf32> to vector<8x8xf32>
    %cst_130 = arith.constant dense<0.000000e+00> : vector<8x8xf32>
    %224 = tpu.matmul %221, %156, %cst_130 {dimension_numbers = #tpu.dot_dimension_numbers<[1], [0], [0], [1], [0, 0, 1, 1], [], []>} : vector<8x8xf32>, vector<8x8xf32>, vector<8x8xf32> -> vector<8x8xf32>
    %225 = arith.addf %223, %224 : vector<8x8xf32>
    %226 = math.tanh %225 : vector<8x8xf32>
    %c104_131 = arith.constant 104 : index
    %c0_132 = arith.constant 0 : index
    %227 = vector.load %arg22[%c104_131, %c0_132] : memref<200x8xf32, #tpu.memory_space<vmem>>, vector<8x8xf32>
    tpu.vector_store %arg22[%c104_131, %c0_132], %226 {strides = array<i32>} : memref<200x8xf32, #tpu.memory_space<vmem>>, vector<8x8xf32>,
    %228 = vector.extract_strided_slice %155 {offsets = [112, 0], sizes = [8, 8], strides = [1, 1]} : vector<200x8xf32> to vector<8x8xf32>
    %cst_133 = arith.constant dense<0.000000e+00> : vector<8x8xf32>
    %229 = tpu.matmul %226, %156, %cst_133 {dimension_numbers = #tpu.dot_dimension_numbers<[1], [0], [0], [1], [0, 0, 1, 1], [], []>} : vector<8x8xf32>, vector<8x8xf32>, vector<8x8xf32> -> vector<8x8xf32>
    %230 = arith.addf %228, %229 : vector<8x8xf32>
    %231 = math.tanh %230 : vector<8x8xf32>
    %c112_134 = arith.constant 112 : index
    %c0_135 = arith.constant 0 : index
    %232 = vector.load %arg22[%c112_134, %c0_135] : memref<200x8xf32, #tpu.memory_space<vmem>>, vector<8x8xf32>
    tpu.vector_store %arg22[%c112_134, %c0_135], %231 {strides = array<i32>} : memref<200x8xf32, #tpu.memory_space<vmem>>, vector<8x8xf32>,
    %233 = vector.extract_strided_slice %155 {offsets = [120, 0], sizes = [8, 8], strides = [1, 1]} : vector<200x8xf32> to vector<8x8xf32>
    %cst_136 = arith.constant dense<0.000000e+00> : vector<8x8xf32>
    %234 = tpu.matmul %231, %156, %cst_136 {dimension_numbers = #tpu.dot_dimension_numbers<[1], [0], [0], [1], [0, 0, 1, 1], [], []>} : vector<8x8xf32>, vector<8x8xf32>, vector<8x8xf32> -> vector<8x8xf32>
    %235 = arith.addf %233, %234 : vector<8x8xf32>
    %236 = math.tanh %235 : vector<8x8xf32>
    %c120_137 = arith.constant 120 : index
    %c0_138 = arith.constant 0 : index
    %237 = vector.load %arg22[%c120_137, %c0_138] : memref<200x8xf32, #tpu.memory_space<vmem>>, vector<8x8xf32>
    tpu.vector_store %arg22[%c120_137, %c0_138], %236 {strides = array<i32>} : memref<200x8xf32, #tpu.memory_space<vmem>>, vector<8x8xf32>,
    %238 = vector.extract_strided_slice %155 {offsets = [128, 0], sizes = [8, 8], strides = [1, 1]} : vector<200x8xf32> to vector<8x8xf32>
    %cst_139 = arith.constant dense<0.000000e+00> : vector<8x8xf32>
    %239 = tpu.matmul %236, %156, %cst_139 {dimension_numbers = #tpu.dot_dimension_numbers<[1], [0], [0], [1], [0, 0, 1, 1], [], []>} : vector<8x8xf32>, vector<8x8xf32>, vector<8x8xf32> -> vector<8x8xf32>
    %240 = arith.addf %238, %239 : vector<8x8xf32>
    %241 = math.tanh %240 : vector<8x8xf32>
    %c128_140 = arith.constant 128 : index
    %c0_141 = arith.constant 0 : index
    %242 = vector.load %arg22[%c128_140, %c0_141] : memref<200x8xf32, #tpu.memory_space<vmem>>, vector<8x8xf32>
    tpu.vector_store %arg22[%c128_140, %c0_141], %241 {strides = array<i32>} : memref<200x8xf32, #tpu.memory_space<vmem>>, vector<8x8xf32>,
    %243 = vector.extract_strided_slice %155 {offsets = [136, 0], sizes = [8, 8], strides = [1, 1]} : vector<200x8xf32> to vector<8x8xf32>
    %cst_142 = arith.constant dense<0.000000e+00> : vector<8x8xf32>
    %244 = tpu.matmul %241, %156, %cst_142 {dimension_numbers = #tpu.dot_dimension_numbers<[1], [0], [0], [1], [0, 0, 1, 1], [], []>} : vector<8x8xf32>, vector<8x8xf32>, vector<8x8xf32> -> vector<8x8xf32>
    %245 = arith.addf %243, %244 : vector<8x8xf32>
    %246 = math.tanh %245 : vector<8x8xf32>
    %c136_143 = arith.constant 136 : index
    %c0_144 = arith.constant 0 : index
    %247 = vector.load %arg22[%c136_143, %c0_144] : memref<200x8xf32, #tpu.memory_space<vmem>>, vector<8x8xf32>
    tpu.vector_store %arg22[%c136_143, %c0_144], %246 {strides = array<i32>} : memref<200x8xf32, #tpu.memory_space<vmem>>, vector<8x8xf32>,
    %248 = vector.extract_strided_slice %155 {offsets = [144, 0], sizes = [8, 8], strides = [1, 1]} : vector<200x8xf32> to vector<8x8xf32>
    %cst_145 = arith.constant dense<0.000000e+00> : vector<8x8xf32>
    %249 = tpu.matmul %246, %156, %cst_145 {dimension_numbers = #tpu.dot_dimension_numbers<[1], [0], [0], [1], [0, 0, 1, 1], [], []>} : vector<8x8xf32>, vector<8x8xf32>, vector<8x8xf32> -> vector<8x8xf32>
    %250 = arith.addf %248, %249 : vector<8x8xf32>
    %251 = math.tanh %250 : vector<8x8xf32>
    %c144_146 = arith.constant 144 : index
    %c0_147 = arith.constant 0 : index
    %252 = vector.load %arg22[%c144_146, %c0_147] : memref<200x8xf32, #tpu.memory_space<vmem>>, vector<8x8xf32>
    tpu.vector_store %arg22[%c144_146, %c0_147], %251 {strides = array<i32>} : memref<200x8xf32, #tpu.memory_space<vmem>>, vector<8x8xf32>,
    %253 = vector.extract_strided_slice %155 {offsets = [152, 0], sizes = [8, 8], strides = [1, 1]} : vector<200x8xf32> to vector<8x8xf32>
    %cst_148 = arith.constant dense<0.000000e+00> : vector<8x8xf32>
    %254 = tpu.matmul %251, %156, %cst_148 {dimension_numbers = #tpu.dot_dimension_numbers<[1], [0], [0], [1], [0, 0, 1, 1], [], []>} : vector<8x8xf32>, vector<8x8xf32>, vector<8x8xf32> -> vector<8x8xf32>
    %255 = arith.addf %253, %254 : vector<8x8xf32>
    %256 = math.tanh %255 : vector<8x8xf32>
    %c152_149 = arith.constant 152 : index
    %c0_150 = arith.constant 0 : index
    %257 = vector.load %arg22[%c152_149, %c0_150] : memref<200x8xf32, #tpu.memory_space<vmem>>, vector<8x8xf32>
    tpu.vector_store %arg22[%c152_149, %c0_150], %256 {strides = array<i32>} : memref<200x8xf32, #tpu.memory_space<vmem>>, vector<8x8xf32>,
    %258 = vector.extract_strided_slice %155 {offsets = [160, 0], sizes = [8, 8], strides = [1, 1]} : vector<200x8xf32> to vector<8x8xf32>
    %cst_151 = arith.constant dense<0.000000e+00> : vector<8x8xf32>
    %259 = tpu.matmul %256, %156, %cst_151 {dimension_numbers = #tpu.dot_dimension_numbers<[1], [0], [0], [1], [0, 0, 1, 1], [], []>} : vector<8x8xf32>, vector<8x8xf32>, vector<8x8xf32> -> vector<8x8xf32>
    %260 = arith.addf %258, %259 : vector<8x8xf32>
    %261 = math.tanh %260 : vector<8x8xf32>
    %c160_152 = arith.constant 160 : index
    %c0_153 = arith.constant 0 : index
    %262 = vector.load %arg22[%c160_152, %c0_153] : memref<200x8xf32, #tpu.memory_space<vmem>>, vector<8x8xf32>
    tpu.vector_store %arg22[%c160_152, %c0_153], %261 {strides = array<i32>} : memref<200x8xf32, #tpu.memory_space<vmem>>, vector<8x8xf32>,
    %263 = vector.extract_strided_slice %155 {offsets = [168, 0], sizes = [8, 8], strides = [1, 1]} : vector<200x8xf32> to vector<8x8xf32>
    %cst_154 = arith.constant dense<0.000000e+00> : vector<8x8xf32>
    %264 = tpu.matmul %261, %156, %cst_154 {dimension_numbers = #tpu.dot_dimension_numbers<[1], [0], [0], [1], [0, 0, 1, 1], [], []>} : vector<8x8xf32>, vector<8x8xf32>, vector<8x8xf32> -> vector<8x8xf32>
    %265 = arith.addf %263, %264 : vector<8x8xf32>
    %266 = math.tanh %265 : vector<8x8xf32>
    %c168_155 = arith.constant 168 : index
    %c0_156 = arith.constant 0 : index
    %267 = vector.load %arg22[%c168_155, %c0_156] : memref<200x8xf32, #tpu.memory_space<vmem>>, vector<8x8xf32>
    tpu.vector_store %arg22[%c168_155, %c0_156], %266 {strides = array<i32>} : memref<200x8xf32, #tpu.memory_space<vmem>>, vector<8x8xf32>,
    %268 = vector.extract_strided_slice %155 {offsets = [176, 0], sizes = [8, 8], strides = [1, 1]} : vector<200x8xf32> to vector<8x8xf32>
    %cst_157 = arith.constant dense<0.000000e+00> : vector<8x8xf32>
    %269 = tpu.matmul %266, %156, %cst_157 {dimension_numbers = #tpu.dot_dimension_numbers<[1], [0], [0], [1], [0, 0, 1, 1], [], []>} : vector<8x8xf32>, vector<8x8xf32>, vector<8x8xf32> -> vector<8x8xf32>
    %270 = arith.addf %268, %269 : vector<8x8xf32>
    %271 = math.tanh %270 : vector<8x8xf32>
    %c176_158 = arith.constant 176 : index
    %c0_159 = arith.constant 0 : index
    %272 = vector.load %arg22[%c176_158, %c0_159] : memref<200x8xf32, #tpu.memory_space<vmem>>, vector<8x8xf32>
    tpu.vector_store %arg22[%c176_158, %c0_159], %271 {strides = array<i32>} : memref<200x8xf32, #tpu.memory_space<vmem>>, vector<8x8xf32>,
    %273 = vector.extract_strided_slice %155 {offsets = [184, 0], sizes = [8, 8], strides = [1, 1]} : vector<200x8xf32> to vector<8x8xf32>
    %cst_160 = arith.constant dense<0.000000e+00> : vector<8x8xf32>
    %274 = tpu.matmul %271, %156, %cst_160 {dimension_numbers = #tpu.dot_dimension_numbers<[1], [0], [0], [1], [0, 0, 1, 1], [], []>} : vector<8x8xf32>, vector<8x8xf32>, vector<8x8xf32> -> vector<8x8xf32>
    %275 = arith.addf %273, %274 : vector<8x8xf32>
    %276 = math.tanh %275 : vector<8x8xf32>
    %c184_161 = arith.constant 184 : index
    %c0_162 = arith.constant 0 : index
    %277 = vector.load %arg22[%c184_161, %c0_162] : memref<200x8xf32, #tpu.memory_space<vmem>>, vector<8x8xf32>
    tpu.vector_store %arg22[%c184_161, %c0_162], %276 {strides = array<i32>} : memref<200x8xf32, #tpu.memory_space<vmem>>, vector<8x8xf32>,
    %278 = vector.extract_strided_slice %155 {offsets = [192, 0], sizes = [8, 8], strides = [1, 1]} : vector<200x8xf32> to vector<8x8xf32>
    %cst_163 = arith.constant dense<0.000000e+00> : vector<8x8xf32>
    %279 = tpu.matmul %276, %156, %cst_163 {dimension_numbers = #tpu.dot_dimension_numbers<[1], [0], [0], [1], [0, 0, 1, 1], [], []>} : vector<8x8xf32>, vector<8x8xf32>, vector<8x8xf32> -> vector<8x8xf32>
    %280 = arith.addf %278, %279 : vector<8x8xf32>
    %281 = math.tanh %280 : vector<8x8xf32>
    %c192_164 = arith.constant 192 : index
    %c0_165 = arith.constant 0 : index
    %282 = vector.load %arg22[%c192_164, %c0_165] : memref<200x8xf32, #tpu.memory_space<vmem>>, vector<8x8xf32>
    tpu.vector_store %arg22[%c192_164, %c0_165], %281 {strides = array<i32>} : memref<200x8xf32, #tpu.memory_space<vmem>>, vector<8x8xf32>,
    %c0_166 = arith.constant 0 : index
    %c0_167 = arith.constant 0 : index
    %283 = vector.load %arg22[%c0_166, %c0_167] : memref<200x8xf32, #tpu.memory_space<vmem>>, vector<200x8xf32>
    %c0_168 = arith.constant 0 : index
    %c0_169 = arith.constant 0 : index
    %284 = vector.load %arg12[%c0_168, %c0_169] : memref<8x64xf32, #tpu.memory_space<vmem>>, vector<8x64xf32>
    %cst_170 = arith.constant dense<0.000000e+00> : vector<200x64xf32>
    %285 = tpu.matmul %283, %284, %cst_170 {dimension_numbers = #tpu.dot_dimension_numbers<[1], [0], [0], [1], [0, 0, 1, 1], [], []>} : vector<200x8xf32>, vector<8x64xf32>, vector<200x64xf32> -> vector<200x64xf32>
    %c0_171 = arith.constant 0 : index
    %c0_172 = arith.constant 0 : index
    %286 = vector.load %arg13[%c0_171, %c0_172] : memref<1x64xf32, #tpu.memory_space<vmem>>, vector<1x64xf32>
    %287 = vector.broadcast %286 : vector<1x64xf32> to vector<200x64xf32>
    %288 = arith.addf %285, %287 : vector<200x64xf32>
    %c0_173 = arith.constant 0 : index
    %c0_174 = arith.constant 0 : index
    %289 = vector.load %arg14[%c0_173, %c0_174] : memref<64x95xf32, #tpu.memory_space<vmem>>, vector<64x95xf32>
    %cst_175 = arith.constant dense<0.000000e+00> : vector<200x95xf32>
    %290 = tpu.matmul %288, %289, %cst_175 {dimension_numbers = #tpu.dot_dimension_numbers<[1], [0], [0], [1], [0, 0, 1, 1], [], []>} : vector<200x64xf32>, vector<64x95xf32>, vector<200x95xf32> -> vector<200x95xf32>
    %c0_176 = arith.constant 0 : index
    %c0_177 = arith.constant 0 : index
    %291 = vector.load %arg15[%c0_176, %c0_177] : memref<1x95xf32, #tpu.memory_space<vmem>>, vector<1x95xf32>
    %292 = vector.broadcast %291 : vector<1x95xf32> to vector<200x95xf32>
    %293 = arith.addf %290, %292 : vector<200x95xf32>
    %c0_178 = arith.constant 0 : index
    %c0_179 = arith.constant 0 : index
    %294 = vector.load %arg17[%c0_178, %c0_179] : memref<200x95xf32, #tpu.memory_space<vmem>>, vector<200x95xf32>
    tpu.vector_store %arg17[%c0_178, %c0_179], %293 {strides = array<i32>} : memref<200x95xf32, #tpu.memory_space<vmem>>, vector<200x95xf32>,
    return
  }
}

</mosaic_0001>

<llo_original>
// kernel: vae_forward.1
$region0: #{vae_forward.1}
  #allocation0 [shape = 'u32[]', space=smem, size = 0x4, offset = 0x4, fixed_abs, tag = 'smem constant byte address 0x4 - core index']
  #allocation1 [shape = 'u32[72,128]{1,0:T(1,128)}', space=vmem, size = 0x9000, scoped, tag = 'internal scratch']
  #allocation2 [shape = 'f32[200,64]{1,0:T(8,128)}', space=vmem, size = 0x19000, scoped, tag = 'scratch operand']
  #allocation3 [shape = 'f32[200,8]{1,0:T(8,128)}', space=vmem, size = 0x19000, scoped, tag = 'scratch operand']
  %s0 = inlined_call_operand.vmem [shape: f32[200,95], index: 0, kind: input, shape index: {}]
  %s1 = inlined_call_operand.vmem [shape: f32[95,64], index: 1, kind: input, shape index: {}]
  %s2 = inlined_call_operand.vmem [shape: f32[64,64], index: 2, kind: input, shape index: {}]
  %s3 = inlined_call_operand.vmem [shape: f32[64,64], index: 3, kind: input, shape index: {}]
  %s4 = inlined_call_operand.vmem [shape: f32[1,64], index: 4, kind: input, shape index: {}]
  %s5 = inlined_call_operand.vmem [shape: f32[64,8], index: 5, kind: input, shape index: {}]
  %s6 = inlined_call_operand.vmem [shape: f32[1,8], index: 6, kind: input, shape index: {}]
  %s7 = inlined_call_operand.vmem [shape: f32[64,8], index: 7, kind: input, shape index: {}]
  %s8 = inlined_call_operand.vmem [shape: f32[1,8], index: 8, kind: input, shape index: {}]
  %s9 = inlined_call_operand.vmem [shape: f32[8,8], index: 9, kind: input, shape index: {}]
  %s10 = inlined_call_operand.vmem [shape: f32[8,8], index: 10, kind: input, shape index: {}]
  %s11 = inlined_call_operand.vmem [shape: f32[1,8], index: 11, kind: input, shape index: {}]
  %s12 = inlined_call_operand.vmem [shape: f32[8,64], index: 12, kind: input, shape index: {}]
  %s13 = inlined_call_operand.vmem [shape: f32[1,64], index: 13, kind: input, shape index: {}]
  %s14 = inlined_call_operand.vmem [shape: f32[64,95], index: 14, kind: input, shape index: {}]
  %s15 = inlined_call_operand.vmem [shape: f32[1,95], index: 15, kind: input, shape index: {}]
  %s16 = inlined_call_operand.vmem [shape: f32[8,2], index: 16, kind: input, shape index: {}]
  %s17 = inlined_call_operand.vmem [shape: f32[200,95], index: 17, kind: output, shape index: {0}]
  %s18 = inlined_call_operand.vmem [shape: f32[200,2], index: 18, kind: output, shape index: {1}]
  %s19 = inlined_call_operand.vmem [shape: f32[200,8], index: 19, kind: output, shape index: {2}]
  %s20 = inlined_call_operand.vmem [shape: f32[200,8], index: 20, kind: output, shape index: {3}]
  %21 = xla_tuple %s17, %s18, %s19, %s20
  %s22 = sld [smem:[#allocation0]]
  $region102: #{vae_forward.1} parent=0
    _
  %s24 = ssub.s32 1, %s22
  %s25 = scalar_select 0, %s24, %s22
  // Predicated region
  $region2: #{vae_forward.1} parent=0 // pred_check
    _
  $region3: #{vae_forward.1} parent=0 // pred_check_branch
    %27 = sbr.rel (0) target = $region5
  $region4: #{vae_forward.1} parent=0 // pred_region
    _
  $region5: #{vae_forward.1} parent=0 // pred_fallthru
    _
  // Predicated region
  $region6: #{vae_forward.1} parent=0 // pred_check
    _
  $region7: #{vae_forward.1} parent=0 // pred_check_branch
    %29 = sbr.rel (0) target = $region9
  $region8: #{vae_forward.1} parent=0 // pred_region
    _
  $region9: #{vae_forward.1} parent=0 // pred_fallthru
    _
  // Predicated region
  $region10: #{vae_forward.1} parent=0 // pred_check
    _
  $region11: #{vae_forward.1} parent=0 // pred_check_branch
    %31 = sbr.rel (0) target = $region13
  $region12: #{vae_forward.1} parent=0 // pred_region
    _
  $region13: #{vae_forward.1} parent=0 // pred_fallthru
    _
  // Predicated region
  $region14: #{vae_forward.1} parent=0 // pred_check
    _
  $region15: #{vae_forward.1} parent=0 // pred_check_branch
    %33 = sbr.rel (0) target = $region17
  $region16: #{vae_forward.1} parent=0 // pred_region
    _
  $region17: #{vae_forward.1} parent=0 // pred_fallthru
    _
  // Predicated region
  $region18: #{vae_forward.1} parent=0 // pred_check
    _
  $region19: #{vae_forward.1} parent=0 // pred_check_branch
    %35 = sbr.rel (0) target = $region21
  $region20: #{vae_forward.1} parent=0 // pred_region
    _
  $region21: #{vae_forward.1} parent=0 // pred_fallthru
    _
  // Predicated region
  $region22: #{vae_forward.1} parent=0 // pred_check
    _
  $region23: #{vae_forward.1} parent=0 // pred_check_branch
    %37 = sbr.rel (0) target = $region25
  $region24: #{vae_forward.1} parent=0 // pred_region
    _
  $region25: #{vae_forward.1} parent=0 // pred_fallthru
    _
  // Predicated region
  $region26: #{vae_forward.1} parent=0 // pred_check
    _
  $region27: #{vae_forward.1} parent=0 // pred_check_branch
    %39 = sbr.rel (0) target = $region29
  $region28: #{vae_forward.1} parent=0 // pred_region
    _
  $region29: #{vae_forward.1} parent=0 // pred_fallthru
    _
  // Predicated region
  $region30: #{vae_forward.1} parent=0 // pred_check
    _
  $region31: #{vae_forward.1} parent=0 // pred_check_branch
    %41 = sbr.rel (0) target = $region33
  $region32: #{vae_forward.1} parent=0 // pred_region
    _
  $region33: #{vae_forward.1} parent=0 // pred_fallthru
    _
  // Predicated region
  $region34: #{vae_forward.1} parent=0 // pred_check
    _
  $region35: #{vae_forward.1} parent=0 // pred_check_branch
    %43 = sbr.rel (0) target = $region37
  $region36: #{vae_forward.1} parent=0 // pred_region
    _
  $region37: #{vae_forward.1} parent=0 // pred_fallthru
    _
  // Predicated region
  $region38: #{vae_forward.1} parent=0 // pred_check
    _
  $region39: #{vae_forward.1} parent=0 // pred_check_branch
    %45 = sbr.rel (0) target = $region41
  $region40: #{vae_forward.1} parent=0 // pred_region
    _
  $region41: #{vae_forward.1} parent=0 // pred_fallthru
    _
  // Predicated region
  $region42: #{vae_forward.1} parent=0 // pred_check
    _
  $region43: #{vae_forward.1} parent=0 // pred_check_branch
    %47 = sbr.rel (0) target = $region45
  $region44: #{vae_forward.1} parent=0 // pred_region
    _
  $region45: #{vae_forward.1} parent=0 // pred_fallthru
    _
  // Predicated region
  $region46: #{vae_forward.1} parent=0 // pred_check
    _
  $region47: #{vae_forward.1} parent=0 // pred_check_branch
    %49 = sbr.rel (0) target = $region49
  $region48: #{vae_forward.1} parent=0 // pred_region
    _
  $region49: #{vae_forward.1} parent=0 // pred_fallthru
    _
  // Predicated region
  $region50: #{vae_forward.1} parent=0 // pred_check
    _
  $region51: #{vae_forward.1} parent=0 // pred_check_branch
    %51 = sbr.rel (0) target = $region53
  $region52: #{vae_forward.1} parent=0 // pred_region
    _
  $region53: #{vae_forward.1} parent=0 // pred_fallthru
    _
  // Predicated region
  $region54: #{vae_forward.1} parent=0 // pred_check
    _
  $region55: #{vae_forward.1} parent=0 // pred_check_branch
    %53 = sbr.rel (0) target = $region57
  $region56: #{vae_forward.1} parent=0 // pred_region
    _
  $region57: #{vae_forward.1} parent=0 // pred_fallthru
    _
  // Predicated region
  $region58: #{vae_forward.1} parent=0 // pred_check
    _
  $region59: #{vae_forward.1} parent=0 // pred_check_branch
    %55 = sbr.rel (0) target = $region61
  $region60: #{vae_forward.1} parent=0 // pred_region
    _
  $region61: #{vae_forward.1} parent=0 // pred_fallthru
    _
  // Predicated region
  $region62: #{vae_forward.1} parent=0 // pred_check
    _
  $region63: #{vae_forward.1} parent=0 // pred_check_branch
    %57 = sbr.rel (0) target = $region65
  $region64: #{vae_forward.1} parent=0 // pred_region
    _
  $region65: #{vae_forward.1} parent=0 // pred_fallthru
    _
  // Predicated region
  $region66: #{vae_forward.1} parent=0 // pred_check
    _
  $region67: #{vae_forward.1} parent=0 // pred_check_branch
    %59 = sbr.rel (0) target = $region69
  $region68: #{vae_forward.1} parent=0 // pred_region
    _
  $region69: #{vae_forward.1} parent=0 // pred_fallthru
    _
  %v60 = vld [vmem:[%s0] sm:$0xff]
  %v61 = vld [vmem:[%s0 + $0x8] sm:$0xff]
  %v62 = vld [vmem:[%s0 + $0x10] sm:$0xff]
  %v63 = vld [vmem:[%s0 + $0x18] sm:$0xff]
  %v64 = vld [vmem:[%s0 + $0x20] sm:$0xff]
  %v65 = vld [vmem:[%s0 + $0x28] sm:$0xff]
  %v66 = vld [vmem:[%s0 + $0x30] sm:$0xff]
  %v67 = vld [vmem:[%s0 + $0x38] sm:$0xff]
  %v68 = vld [vmem:[%s0 + $0x40] sm:$0xff]
  %v69 = vld [vmem:[%s0 + $0x48] sm:$0xff]
  %v70 = vld [vmem:[%s0 + $0x50] sm:$0xff]
  %v71 = vld [vmem:[%s0 + $0x58] sm:$0xff]
  %v72 = vld [vmem:[%s0 + $0x60] sm:$0xff]
  %v73 = vld [vmem:[%s0 + $0x68] sm:$0xff]
  %v74 = vld [vmem:[%s0 + $0x70] sm:$0xff]
  %v75 = vld [vmem:[%s0 + $0x78] sm:$0xff]
  %v76 = vld [vmem:[%s0 + $0x80] sm:$0xff]
  %v77 = vld [vmem:[%s0 + $0x88] sm:$0xff]
  %v78 = vld [vmem:[%s0 + $0x90] sm:$0xff]
  %v79 = vld [vmem:[%s0 + $0x98] sm:$0xff]
  %v80 = vld [vmem:[%s0 + $0xa0] sm:$0xff]
  %v81 = vld [vmem:[%s0 + $0xa8] sm:$0xff]
  %v82 = vld [vmem:[%s0 + $0xb0] sm:$0xff]
  %v83 = vld [vmem:[%s0 + $0xb8] sm:$0xff]
  %v84 = vld [vmem:[%s0 + $0xc0] sm:$0xff]
  %v85 = vld [vmem:[%s1] sm:$0xff]
  %v86 = vld [vmem:[%s1 + $0x8] sm:$0xff]
  %v87 = vld [vmem:[%s1 + $0x10] sm:$0xff]
  %v88 = vld [vmem:[%s1 + $0x18] sm:$0xff]
  %v89 = vld [vmem:[%s1 + $0x20] sm:$0xff]
  %v90 = vld [vmem:[%s1 + $0x28] sm:$0xff]
  %v91 = vld [vmem:[%s1 + $0x30] sm:$0xff]
  %v92 = vld [vmem:[%s1 + $0x38] sm:$0xff]
  %v93 = vld [vmem:[%s1 + $0x40] sm:$0xff]
  %v94 = vld [vmem:[%s1 + $0x48] sm:$0xff]
  %v95 = vld [vmem:[%s1 + $0x50] sm:$0xff]
  %v96 = vld [vmem:[%s1 + $0x58] sm:$0x7f]
  %vm97 = vcmask 777216
  %v99 = vsel %vm97, %v60, 0
  %v102 = vsel %vm97, %v61, 0
  %v105 = vsel %vm97, %v62, 0
  %v108 = vsel %vm97, %v63, 0
  %v111 = vsel %vm97, %v64, 0
  %v114 = vsel %vm97, %v65, 0
  %v117 = vsel %vm97, %v66, 0
  %v120 = vsel %vm97, %v67, 0
  %v123 = vsel %vm97, %v68, 0
  %v126 = vsel %vm97, %v69, 0
  %v129 = vsel %vm97, %v70, 0
  %v132 = vsel %vm97, %v71, 0
  %v135 = vsel %vm97, %v72, 0
  %v138 = vsel %vm97, %v73, 0
  %v141 = vsel %vm97, %v74, 0
  %v144 = vsel %vm97, %v75, 0
  %v147 = vsel %vm97, %v76, 0
  %v150 = vsel %vm97, %v77, 0
  %v153 = vsel %vm97, %v78, 0
  %v156 = vsel %vm97, %v79, 0
  %v159 = vsel %vm97, %v80, 0
  %v162 = vsel %vm97, %v81, 0
  %v165 = vsel %vm97, %v82, 0
  %v168 = vsel %vm97, %v83, 0
  %v171 = vsel %vm97, %v84, 0
  %vm173 = vcmask 1046528
  %v175 = vsel %vm173, %v96, 0
  %177 = vmatpush.msra.mxu0 0.0
  %178 = vmatpush.msra.mxu0 0.0
  %179 = vmatpush.msra.mxu0 0.0
  %180 = vmatpush.msra.mxu0 0.0
  %181 = vmatpush.msra.mxu0 %v175
  %182 = vmatpush.msra.mxu0 %v95
  %183 = vmatpush.msra.mxu0 %v94
  %184 = vmatpush.msra.mxu0 %v93
  %185 = vmatpush.msra.mxu0 %v92
  %186 = vmatpush.msra.mxu0 %v91
  %187 = vmatpush.msra.mxu0 %v90
  %188 = vmatpush.msra.mxu0 %v89
  %189 = vmatpush.msra.mxu0 %v88
  %190 = vmatpush.msra.mxu0 %v87
  %191 = vmatpush.msra.mxu0 %v86
  %192 = vmatpush.msra.mxu0 %v85
  %193 = vmatmul.f32.gmra.mxu0 %v99
  %v194 = vpop.f32.mrf.mxu0
  %v195 = vadd.f32 0.0, %v194
  %196 = vmatmul.f32.gmra.mxu0 %v102
  %v197 = vpop.f32.mrf.mxu0
  %v198 = vadd.f32 0.0, %v197
  %199 = vmatmul.f32.gmra.mxu0 %v105
  %v200 = vpop.f32.mrf.mxu0
  %v201 = vadd.f32 0.0, %v200
  %202 = vmatmul.f32.gmra.mxu0 %v108
  %v203 = vpop.f32.mrf.mxu0
  %v204 = vadd.f32 0.0, %v203
  %205 = vmatmul.f32.gmra.mxu0 %v111
  %v206 = vpop.f32.mrf.mxu0
  %v207 = vadd.f32 0.0, %v206
  %208 = vmatmul.f32.gmra.mxu0 %v114
  %v209 = vpop.f32.mrf.mxu0
  %v210 = vadd.f32 0.0, %v209
  %211 = vmatmul.f32.gmra.mxu0 %v117
  %v212 = vpop.f32.mrf.mxu0
  %v213 = vadd.f32 0.0, %v212
  %214 = vmatmul.f32.gmra.mxu0 %v120
  %v215 = vpop.f32.mrf.mxu0
  %v216 = vadd.f32 0.0, %v215
  %217 = vmatmul.f32.gmra.mxu0 %v123
  %v218 = vpop.f32.mrf.mxu0
  %v219 = vadd.f32 0.0, %v218
  %220 = vmatmul.f32.gmra.mxu0 %v126
  %v221 = vpop.f32.mrf.mxu0
  %v222 = vadd.f32 0.0, %v221
  %223 = vmatmul.f32.gmra.mxu0 %v129
  %v224 = vpop.f32.mrf.mxu0
  %v225 = vadd.f32 0.0, %v224
  %226 = vmatmul.f32.gmra.mxu0 %v132
  %v227 = vpop.f32.mrf.mxu0
  %v228 = vadd.f32 0.0, %v227
  %229 = vmatmul.f32.gmra.mxu0 %v135
  %v230 = vpop.f32.mrf.mxu0
  %v231 = vadd.f32 0.0, %v230
  %232 = vmatmul.f32.gmra.mxu0 %v138
  %v233 = vpop.f32.mrf.mxu0
  %v234 = vadd.f32 0.0, %v233
  %235 = vmatmul.f32.gmra.mxu0 %v141
  %v236 = vpop.f32.mrf.mxu0
  %v237 = vadd.f32 0.0, %v236
  %238 = vmatmul.f32.gmra.mxu0 %v144
  %v239 = vpop.f32.mrf.mxu0
  %v240 = vadd.f32 0.0, %v239
  %241 = vmatmul.f32.gmra.mxu0 %v147
  %v242 = vpop.f32.mrf.mxu0
  %v243 = vadd.f32 0.0, %v242
  %244 = vmatmul.f32.gmra.mxu0 %v150
  %v245 = vpop.f32.mrf.mxu0
  %v246 = vadd.f32 0.0, %v245
  %247 = vmatmul.f32.gmra.mxu0 %v153
  %v248 = vpop.f32.mrf.mxu0
  %v249 = vadd.f32 0.0, %v248
  %250 = vmatmul.f32.gmra.mxu0 %v156
  %v251 = vpop.f32.mrf.mxu0
  %v252 = vadd.f32 0.0, %v251
  %253 = vmatmul.f32.gmra.mxu0 %v159
  %v254 = vpop.f32.mrf.mxu0
  %v255 = vadd.f32 0.0, %v254
  %256 = vmatmul.f32.gmra.mxu0 %v162
  %v257 = vpop.f32.mrf.mxu0
  %v258 = vadd.f32 0.0, %v257
  %259 = vmatmul.f32.gmra.mxu0 %v165
  %v260 = vpop.f32.mrf.mxu0
  %v261 = vadd.f32 0.0, %v260
  %262 = vmatmul.f32.gmra.mxu0 %v168
  %v263 = vpop.f32.mrf.mxu0
  %v264 = vadd.f32 0.0, %v263
  %265 = vmatmul.f32.gmra.mxu0 %v171
  %v266 = vpop.f32.mrf.mxu0
  %v267 = vadd.f32 0.0, %v266
  %268 = vdwg.mxu0
  %v269 = vld [vmem:[%s2] sm:$0xff]
  %v270 = vld [vmem:[%s2 + $0x8] sm:$0xff]
  %v271 = vld [vmem:[%s2 + $0x10] sm:$0xff]
  %v272 = vld [vmem:[%s2 + $0x18] sm:$0xff]
  %v273 = vld [vmem:[%s2 + $0x20] sm:$0xff]
  %v274 = vld [vmem:[%s2 + $0x28] sm:$0xff]
  %v275 = vld [vmem:[%s2 + $0x30] sm:$0xff]
  %v276 = vld [vmem:[%s2 + $0x38] sm:$0xff]
  %v277 = vld [vmem:[%s4] sm:$0x1]
  %v279 = vperm.slane %v277, 0
  %vm281 = vcmask 523264
  %v283 = vsel %vm281, %v195, 0
  %v286 = vsel %vm281, %v198, 0
  %v289 = vsel %vm281, %v201, 0
  %v292 = vsel %vm281, %v204, 0
  %v295 = vsel %vm281, %v207, 0
  %v298 = vsel %vm281, %v210, 0
  %v301 = vsel %vm281, %v213, 0
  %v304 = vsel %vm281, %v216, 0
  %v307 = vsel %vm281, %v219, 0
  %v310 = vsel %vm281, %v222, 0
  %v313 = vsel %vm281, %v225, 0
  %v316 = vsel %vm281, %v228, 0
  %v319 = vsel %vm281, %v231, 0
  %v322 = vsel %vm281, %v234, 0
  %v325 = vsel %vm281, %v237, 0
  %v328 = vsel %vm281, %v240, 0
  %v331 = vsel %vm281, %v243, 0
  %v334 = vsel %vm281, %v246, 0
  %v337 = vsel %vm281, %v249, 0
  %v340 = vsel %vm281, %v252, 0
  %v343 = vsel %vm281, %v255, 0
  %v346 = vsel %vm281, %v258, 0
  %v349 = vsel %vm281, %v261, 0
  %v352 = vsel %vm281, %v264, 0
  %v355 = vsel %vm281, %v267, 0
  %357 = vmatpush.msra.mxu0 0.0
  %358 = vmatpush.msra.mxu0 0.0
  %359 = vmatpush.msra.mxu0 0.0
  %360 = vmatpush.msra.mxu0 0.0
  %361 = vmatpush.msra.mxu0 0.0
  %362 = vmatpush.msra.mxu0 0.0
  %363 = vmatpush.msra.mxu0 0.0
  %364 = vmatpush.msra.mxu0 0.0
  %365 = vmatpush.msra.mxu0 %v276
  %366 = vmatpush.msra.mxu0 %v275
  %367 = vmatpush.msra.mxu0 %v274
  %368 = vmatpush.msra.mxu0 %v273
  %369 = vmatpush.msra.mxu0 %v272
  %370 = vmatpush.msra.mxu0 %v271
  %371 = vmatpush.msra.mxu0 %v270
  %372 = vmatpush.msra.mxu0 %v269
  %373 = vmatmul.f32.gmra.mxu0 %v283
  %v374 = vpop.f32.mrf.mxu0
  %v375 = vadd.f32 %v279, %v374
  %376 = vmatmul.f32.gmra.mxu0 %v286
  %v377 = vpop.f32.mrf.mxu0
  %v378 = vadd.f32 %v279, %v377
  %379 = vmatmul.f32.gmra.mxu0 %v289
  %v380 = vpop.f32.mrf.mxu0
  %v381 = vadd.f32 %v279, %v380
  %382 = vmatmul.f32.gmra.mxu0 %v292
  %v383 = vpop.f32.mrf.mxu0
  %v384 = vadd.f32 %v279, %v383
  %385 = vmatmul.f32.gmra.mxu0 %v295
  %v386 = vpop.f32.mrf.mxu0
  %v387 = vadd.f32 %v279, %v386
  %388 = vmatmul.f32.gmra.mxu0 %v298
  %v389 = vpop.f32.mrf.mxu0
  %v390 = vadd.f32 %v279, %v389
  %391 = vmatmul.f32.gmra.mxu0 %v301
  %v392 = vpop.f32.mrf.mxu0
  %v393 = vadd.f32 %v279, %v392
  %394 = vmatmul.f32.gmra.mxu0 %v304
  %v395 = vpop.f32.mrf.mxu0
  %v396 = vadd.f32 %v279, %v395
  %397 = vmatmul.f32.gmra.mxu0 %v307
  %v398 = vpop.f32.mrf.mxu0
  %v399 = vadd.f32 %v279, %v398
  %400 = vmatmul.f32.gmra.mxu0 %v310
  %v401 = vpop.f32.mrf.mxu0
  %v402 = vadd.f32 %v279, %v401
  %403 = vmatmul.f32.gmra.mxu0 %v313
  %v404 = vpop.f32.mrf.mxu0
  %v405 = vadd.f32 %v279, %v404
  %406 = vmatmul.f32.gmra.mxu0 %v316
  %v407 = vpop.f32.mrf.mxu0
  %v408 = vadd.f32 %v279, %v407
  %409 = vmatmul.f32.gmra.mxu0 %v319
  %v410 = vpop.f32.mrf.mxu0
  %v411 = vadd.f32 %v279, %v410
  %412 = vmatmul.f32.gmra.mxu0 %v322
  %v413 = vpop.f32.mrf.mxu0
  %v414 = vadd.f32 %v279, %v413
  %415 = vmatmul.f32.gmra.mxu0 %v325
  %v416 = vpop.f32.mrf.mxu0
  %v417 = vadd.f32 %v279, %v416
  %418 = vmatmul.f32.gmra.mxu0 %v328
  %v419 = vpop.f32.mrf.mxu0
  %v420 = vadd.f32 %v279, %v419
  %421 = vmatmul.f32.gmra.mxu0 %v331
  %v422 = vpop.f32.mrf.mxu0
  %v423 = vadd.f32 %v279, %v422
  %424 = vmatmul.f32.gmra.mxu0 %v334
  %v425 = vpop.f32.mrf.mxu0
  %v426 = vadd.f32 %v279, %v425
  %427 = vmatmul.f32.gmra.mxu0 %v337
  %v428 = vpop.f32.mrf.mxu0
  %v429 = vadd.f32 %v279, %v428
  %430 = vmatmul.f32.gmra.mxu0 %v340
  %v431 = vpop.f32.mrf.mxu0
  %v432 = vadd.f32 %v279, %v431
  %433 = vmatmul.f32.gmra.mxu0 %v343
  %v434 = vpop.f32.mrf.mxu0
  %v435 = vadd.f32 %v279, %v434
  %436 = vmatmul.f32.gmra.mxu0 %v346
  %v437 = vpop.f32.mrf.mxu0
  %v438 = vadd.f32 %v279, %v437
  %439 = vmatmul.f32.gmra.mxu0 %v349
  %v440 = vpop.f32.mrf.mxu0
  %v441 = vadd.f32 %v279, %v440
  %442 = vmatmul.f32.gmra.mxu0 %v352
  %v443 = vpop.f32.mrf.mxu0
  %v444 = vadd.f32 %v279, %v443
  %445 = vmatmul.f32.gmra.mxu0 %v355
  %v446 = vpop.f32.mrf.mxu0
  %v447 = vadd.f32 %v279, %v446
  %448 = vdwg.mxu0
  %v449 = vld [vmem:[%s3] sm:$0xff]
  %v450 = vld [vmem:[%s3 + $0x8] sm:$0xff]
  %v451 = vld [vmem:[%s3 + $0x10] sm:$0xff]
  %v452 = vld [vmem:[%s3 + $0x18] sm:$0xff]
  %v453 = vld [vmem:[%s3 + $0x20] sm:$0xff]
  %v454 = vld [vmem:[%s3 + $0x28] sm:$0xff]
  %v455 = vld [vmem:[%s3 + $0x30] sm:$0xff]
  %v456 = vld [vmem:[%s3 + $0x38] sm:$0xff]
  %v458 = vsel %vm281, 0.0, 0
  %460 = vmatpush.msra.mxu0 0.0
  %461 = vmatpush.msra.mxu0 0.0
  %462 = vmatpush.msra.mxu0 0.0
  %463 = vmatpush.msra.mxu0 0.0
  %464 = vmatpush.msra.mxu0 0.0
  %465 = vmatpush.msra.mxu0 0.0
  %466 = vmatpush.msra.mxu0 0.0
  %467 = vmatpush.msra.mxu0 0.0
  %468 = vmatpush.msra.mxu0 %v456
  %469 = vmatpush.msra.mxu0 %v455
  %470 = vmatpush.msra.mxu0 %v454
  %471 = vmatpush.msra.mxu0 %v453
  %472 = vmatpush.msra.mxu0 %v452
  %473 = vmatpush.msra.mxu0 %v451
  %474 = vmatpush.msra.mxu0 %v450
  %475 = vmatpush.msra.mxu0 %v449
  %476 = vmatmul.f32.gmra.mxu0 %v458
  %v477 = vpop.f32.mrf.mxu0
  %v478 = vadd.f32 0.0, %v477
  %479 = vdwg.mxu0
  %v480 = vadd.f32 %v375, %v478
  %v481 = vtanh.pop %v480
  %482 = vst.msk [vmem:[#allocation2] sm:$0xff] %vm281, %v481
  %v484 = vsel %vm281, %v481, 0
  %486 = vmatpush.msra.mxu0 0.0
  %487 = vmatpush.msra.mxu0 0.0
  %488 = vmatpush.msra.mxu0 0.0
  %489 = vmatpush.msra.mxu0 0.0
  %490 = vmatpush.msra.mxu0 0.0
  %491 = vmatpush.msra.mxu0 0.0
  %492 = vmatpush.msra.mxu0 0.0
  %493 = vmatpush.msra.mxu0 0.0
  %494 = vmatpush.msra.mxu0 %v456
  %495 = vmatpush.msra.mxu0 %v455
  %496 = vmatpush.msra.mxu0 %v454
  %497 = vmatpush.msra.mxu0 %v453
  %498 = vmatpush.msra.mxu0 %v452
  %499 = vmatpush.msra.mxu0 %v451
  %500 = vmatpush.msra.mxu0 %v450
  %501 = vmatpush.msra.mxu0 %v449
  %502 = vmatmul.f32.gmra.mxu0 %v484
  %v503 = vpop.f32.mrf.mxu0
  %v504 = vadd.f32 0.0, %v503
  %505 = vdwg.mxu0
  %v506 = vadd.f32 %v378, %v504
  %v507 = vtanh.pop %v506
  %508 = vst.msk [vmem:[#allocation2 + $0x8] sm:$0xff] %vm281, %v507
  %v510 = vsel %vm281, %v507, 0
  %512 = vmatpush.msra.mxu0 0.0
  %513 = vmatpush.msra.mxu0 0.0
  %514 = vmatpush.msra.mxu0 0.0
  %515 = vmatpush.msra.mxu0 0.0
  %516 = vmatpush.msra.mxu0 0.0
  %517 = vmatpush.msra.mxu0 0.0
  %518 = vmatpush.msra.mxu0 0.0
  %519 = vmatpush.msra.mxu0 0.0
  %520 = vmatpush.msra.mxu0 %v456
  %521 = vmatpush.msra.mxu0 %v455
  %522 = vmatpush.msra.mxu0 %v454
  %523 = vmatpush.msra.mxu0 %v453
  %524 = vmatpush.msra.mxu0 %v452
  %525 = vmatpush.msra.mxu0 %v451
  %526 = vmatpush.msra.mxu0 %v450
  %527 = vmatpush.msra.mxu0 %v449
  %528 = vmatmul.f32.gmra.mxu0 %v510
  %v529 = vpop.f32.mrf.mxu0
  %v530 = vadd.f32 0.0, %v529
  %531 = vdwg.mxu0
  %v532 = vadd.f32 %v381, %v530
  %v533 = vtanh.pop %v532
  %534 = vst.msk [vmem:[#allocation2 + $0x10] sm:$0xff] %vm281, %v533
  %v536 = vsel %vm281, %v533, 0
  %538 = vmatpush.msra.mxu0 0.0
  %539 = vmatpush.msra.mxu0 0.0
  %540 = vmatpush.msra.mxu0 0.0
  %541 = vmatpush.msra.mxu0 0.0
  %542 = vmatpush.msra.mxu0 0.0
  %543 = vmatpush.msra.mxu0 0.0
  %544 = vmatpush.msra.mxu0 0.0
  %545 = vmatpush.msra.mxu0 0.0
  %546 = vmatpush.msra.mxu0 %v456
  %547 = vmatpush.msra.mxu0 %v455
  %548 = vmatpush.msra.mxu0 %v454
  %549 = vmatpush.msra.mxu0 %v453
  %550 = vmatpush.msra.mxu0 %v452
  %551 = vmatpush.msra.mxu0 %v451
  %552 = vmatpush.msra.mxu0 %v450
  %553 = vmatpush.msra.mxu0 %v449
  %554 = vmatmul.f32.gmra.mxu0 %v536
  %v555 = vpop.f32.mrf.mxu0
  %v556 = vadd.f32 0.0, %v555
  %557 = vdwg.mxu0
  %v558 = vadd.f32 %v384, %v556
  %v559 = vtanh.pop %v558
  %560 = vst.msk [vmem:[#allocation2 + $0x18] sm:$0xff] %vm281, %v559
  %v562 = vsel %vm281, %v559, 0
  %564 = vmatpush.msra.mxu0 0.0
  %565 = vmatpush.msra.mxu0 0.0
  %566 = vmatpush.msra.mxu0 0.0
  %567 = vmatpush.msra.mxu0 0.0
  %568 = vmatpush.msra.mxu0 0.0
  %569 = vmatpush.msra.mxu0 0.0
  %570 = vmatpush.msra.mxu0 0.0
  %571 = vmatpush.msra.mxu0 0.0
  %572 = vmatpush.msra.mxu0 %v456
  %573 = vmatpush.msra.mxu0 %v455
  %574 = vmatpush.msra.mxu0 %v454
  %575 = vmatpush.msra.mxu0 %v453
  %576 = vmatpush.msra.mxu0 %v452
  %577 = vmatpush.msra.mxu0 %v451
  %578 = vmatpush.msra.mxu0 %v450
  %579 = vmatpush.msra.mxu0 %v449
  %580 = vmatmul.f32.gmra.mxu0 %v562
  %v581 = vpop.f32.mrf.mxu0
  %v582 = vadd.f32 0.0, %v581
  %583 = vdwg.mxu0
  %v584 = vadd.f32 %v387, %v582
  %v585 = vtanh.pop %v584
  %586 = vst.msk [vmem:[#allocation2 + $0x20] sm:$0xff] %vm281, %v585
  %v588 = vsel %vm281, %v585, 0
  %590 = vmatpush.msra.mxu0 0.0
  %591 = vmatpush.msra.mxu0 0.0
  %592 = vmatpush.msra.mxu0 0.0
  %593 = vmatpush.msra.mxu0 0.0
  %594 = vmatpush.msra.mxu0 0.0
  %595 = vmatpush.msra.mxu0 0.0
  %596 = vmatpush.msra.mxu0 0.0
  %597 = vmatpush.msra.mxu0 0.0
  %598 = vmatpush.msra.mxu0 %v456
  %599 = vmatpush.msra.mxu0 %v455
  %600 = vmatpush.msra.mxu0 %v454
  %601 = vmatpush.msra.mxu0 %v453
  %602 = vmatpush.msra.mxu0 %v452
  %603 = vmatpush.msra.mxu0 %v451
  %604 = vmatpush.msra.mxu0 %v450
  %605 = vmatpush.msra.mxu0 %v449
  %606 = vmatmul.f32.gmra.mxu0 %v588
  %v607 = vpop.f32.mrf.mxu0
  %v608 = vadd.f32 0.0, %v607
  %609 = vdwg.mxu0
  %v610 = vadd.f32 %v390, %v608
  %v611 = vtanh.pop %v610
  %612 = vst.msk [vmem:[#allocation2 + $0x28] sm:$0xff] %vm281, %v611
  %v614 = vsel %vm281, %v611, 0
  %616 = vmatpush.msra.mxu0 0.0
  %617 = vmatpush.msra.mxu0 0.0
  %618 = vmatpush.msra.mxu0 0.0
  %619 = vmatpush.msra.mxu0 0.0
  %620 = vmatpush.msra.mxu0 0.0
  %621 = vmatpush.msra.mxu0 0.0
  %622 = vmatpush.msra.mxu0 0.0
  %623 = vmatpush.msra.mxu0 0.0
  %624 = vmatpush.msra.mxu0 %v456
  %625 = vmatpush.msra.mxu0 %v455
  %626 = vmatpush.msra.mxu0 %v454
  %627 = vmatpush.msra.mxu0 %v453
  %628 = vmatpush.msra.mxu0 %v452
  %629 = vmatpush.msra.mxu0 %v451
  %630 = vmatpush.msra.mxu0 %v450
  %631 = vmatpush.msra.mxu0 %v449
  %632 = vmatmul.f32.gmra.mxu0 %v614
  %v633 = vpop.f32.mrf.mxu0
  %v634 = vadd.f32 0.0, %v633
  %635 = vdwg.mxu0
  %v636 = vadd.f32 %v393, %v634
  %v637 = vtanh.pop %v636
  %638 = vst.msk [vmem:[#allocation2 + $0x30] sm:$0xff] %vm281, %v637
  %v640 = vsel %vm281, %v637, 0
  %642 = vmatpush.msra.mxu0 0.0
  %643 = vmatpush.msra.mxu0 0.0
  %644 = vmatpush.msra.mxu0 0.0
  %645 = vmatpush.msra.mxu0 0.0
  %646 = vmatpush.msra.mxu0 0.0
  %647 = vmatpush.msra.mxu0 0.0
  %648 = vmatpush.msra.mxu0 0.0
  %649 = vmatpush.msra.mxu0 0.0
  %650 = vmatpush.msra.mxu0 %v456
  %651 = vmatpush.msra.mxu0 %v455
  %652 = vmatpush.msra.mxu0 %v454
  %653 = vmatpush.msra.mxu0 %v453
  %654 = vmatpush.msra.mxu0 %v452
  %655 = vmatpush.msra.mxu0 %v451
  %656 = vmatpush.msra.mxu0 %v450
  %657 = vmatpush.msra.mxu0 %v449
  %658 = vmatmul.f32.gmra.mxu0 %v640
  %v659 = vpop.f32.mrf.mxu0
  %v660 = vadd.f32 0.0, %v659
  %661 = vdwg.mxu0
  %v662 = vadd.f32 %v396, %v660
  %v663 = vtanh.pop %v662
  %664 = vst.msk [vmem:[#allocation2 + $0x38] sm:$0xff] %vm281, %v663
  %v666 = vsel %vm281, %v663, 0
  %668 = vmatpush.msra.mxu0 0.0
  %669 = vmatpush.msra.mxu0 0.0
  %670 = vmatpush.msra.mxu0 0.0
  %671 = vmatpush.msra.mxu0 0.0
  %672 = vmatpush.msra.mxu0 0.0
  %673 = vmatpush.msra.mxu0 0.0
  %674 = vmatpush.msra.mxu0 0.0
  %675 = vmatpush.msra.mxu0 0.0
  %676 = vmatpush.msra.mxu0 %v456
  %677 = vmatpush.msra.mxu0 %v455
  %678 = vmatpush.msra.mxu0 %v454
  %679 = vmatpush.msra.mxu0 %v453
  %680 = vmatpush.msra.mxu0 %v452
  %681 = vmatpush.msra.mxu0 %v451
  %682 = vmatpush.msra.mxu0 %v450
  %683 = vmatpush.msra.mxu0 %v449
  %684 = vmatmul.f32.gmra.mxu0 %v666
  %v685 = vpop.f32.mrf.mxu0
  %v686 = vadd.f32 0.0, %v685
  %687 = vdwg.mxu0
  %v688 = vadd.f32 %v399, %v686
  %v689 = vtanh.pop %v688
  %690 = vst.msk [vmem:[#allocation2 + $0x40] sm:$0xff] %vm281, %v689
  %v692 = vsel %vm281, %v689, 0
  %694 = vmatpush.msra.mxu0 0.0
  %695 = vmatpush.msra.mxu0 0.0
  %696 = vmatpush.msra.mxu0 0.0
  %697 = vmatpush.msra.mxu0 0.0
  %698 = vmatpush.msra.mxu0 0.0
  %699 = vmatpush.msra.mxu0 0.0
  %700 = vmatpush.msra.mxu0 0.0
  %701 = vmatpush.msra.mxu0 0.0
  %702 = vmatpush.msra.mxu0 %v456
  %703 = vmatpush.msra.mxu0 %v455
  %704 = vmatpush.msra.mxu0 %v454
  %705 = vmatpush.msra.mxu0 %v453
  %706 = vmatpush.msra.mxu0 %v452
  %707 = vmatpush.msra.mxu0 %v451
  %708 = vmatpush.msra.mxu0 %v450
  %709 = vmatpush.msra.mxu0 %v449
  %710 = vmatmul.f32.gmra.mxu0 %v692
  %v711 = vpop.f32.mrf.mxu0
  %v712 = vadd.f32 0.0, %v711
  %713 = vdwg.mxu0
  %v714 = vadd.f32 %v402, %v712
  %v715 = vtanh.pop %v714
  %716 = vst.msk [vmem:[#allocation2 + $0x48] sm:$0xff] %vm281, %v715
  %v718 = vsel %vm281, %v715, 0
  %720 = vmatpush.msra.mxu0 0.0
  %721 = vmatpush.msra.mxu0 0.0
  %722 = vmatpush.msra.mxu0 0.0
  %723 = vmatpush.msra.mxu0 0.0
  %724 = vmatpush.msra.mxu0 0.0
  %725 = vmatpush.msra.mxu0 0.0
  %726 = vmatpush.msra.mxu0 0.0
  %727 = vmatpush.msra.mxu0 0.0
  %728 = vmatpush.msra.mxu0 %v456
  %729 = vmatpush.msra.mxu0 %v455
  %730 = vmatpush.msra.mxu0 %v454
  %731 = vmatpush.msra.mxu0 %v453
  %732 = vmatpush.msra.mxu0 %v452
  %733 = vmatpush.msra.mxu0 %v451
  %734 = vmatpush.msra.mxu0 %v450
  %735 = vmatpush.msra.mxu0 %v449
  %736 = vmatmul.f32.gmra.mxu0 %v718
  %v737 = vpop.f32.mrf.mxu0
  %v738 = vadd.f32 0.0, %v737
  %739 = vdwg.mxu0
  %v740 = vadd.f32 %v405, %v738
  %v741 = vtanh.pop %v740
  %742 = vst.msk [vmem:[#allocation2 + $0x50] sm:$0xff] %vm281, %v741
  %v744 = vsel %vm281, %v741, 0
  %746 = vmatpush.msra.mxu0 0.0
  %747 = vmatpush.msra.mxu0 0.0
  %748 = vmatpush.msra.mxu0 0.0
  %749 = vmatpush.msra.mxu0 0.0
  %750 = vmatpush.msra.mxu0 0.0
  %751 = vmatpush.msra.mxu0 0.0
  %752 = vmatpush.msra.mxu0 0.0
  %753 = vmatpush.msra.mxu0 0.0
  %754 = vmatpush.msra.mxu0 %v456
  %755 = vmatpush.msra.mxu0 %v455
  %756 = vmatpush.msra.mxu0 %v454
  %757 = vmatpush.msra.mxu0 %v453
  %758 = vmatpush.msra.mxu0 %v452
  %759 = vmatpush.msra.mxu0 %v451
  %760 = vmatpush.msra.mxu0 %v450
  %761 = vmatpush.msra.mxu0 %v449
  %762 = vmatmul.f32.gmra.mxu0 %v744
  %v763 = vpop.f32.mrf.mxu0
  %v764 = vadd.f32 0.0, %v763
  %765 = vdwg.mxu0
  %v766 = vadd.f32 %v408, %v764
  %v767 = vtanh.pop %v766
  %768 = vst.msk [vmem:[#allocation2 + $0x58] sm:$0xff] %vm281, %v767
  %v770 = vsel %vm281, %v767, 0
  %772 = vmatpush.msra.mxu0 0.0
  %773 = vmatpush.msra.mxu0 0.0
  %774 = vmatpush.msra.mxu0 0.0
  %775 = vmatpush.msra.mxu0 0.0
  %776 = vmatpush.msra.mxu0 0.0
  %777 = vmatpush.msra.mxu0 0.0
  %778 = vmatpush.msra.mxu0 0.0
  %779 = vmatpush.msra.mxu0 0.0
  %780 = vmatpush.msra.mxu0 %v456
  %781 = vmatpush.msra.mxu0 %v455
  %782 = vmatpush.msra.mxu0 %v454
  %783 = vmatpush.msra.mxu0 %v453
  %784 = vmatpush.msra.mxu0 %v452
  %785 = vmatpush.msra.mxu0 %v451
  %786 = vmatpush.msra.mxu0 %v450
  %787 = vmatpush.msra.mxu0 %v449
  %788 = vmatmul.f32.gmra.mxu0 %v770
  %v789 = vpop.f32.mrf.mxu0
  %v790 = vadd.f32 0.0, %v789
  %791 = vdwg.mxu0
  %v792 = vadd.f32 %v411, %v790
  %v793 = vtanh.pop %v792
  %794 = vst.msk [vmem:[#allocation2 + $0x60] sm:$0xff] %vm281, %v793
  %v796 = vsel %vm281, %v793, 0
  %798 = vmatpush.msra.mxu0 0.0
  %799 = vmatpush.msra.mxu0 0.0
  %800 = vmatpush.msra.mxu0 0.0
  %801 = vmatpush.msra.mxu0 0.0
  %802 = vmatpush.msra.mxu0 0.0
  %803 = vmatpush.msra.mxu0 0.0
  %804 = vmatpush.msra.mxu0 0.0
  %805 = vmatpush.msra.mxu0 0.0
  %806 = vmatpush.msra.mxu0 %v456
  %807 = vmatpush.msra.mxu0 %v455
  %808 = vmatpush.msra.mxu0 %v454
  %809 = vmatpush.msra.mxu0 %v453
  %810 = vmatpush.msra.mxu0 %v452
  %811 = vmatpush.msra.mxu0 %v451
  %812 = vmatpush.msra.mxu0 %v450
  %813 = vmatpush.msra.mxu0 %v449
  %814 = vmatmul.f32.gmra.mxu0 %v796
  %v815 = vpop.f32.mrf.mxu0
  %v816 = vadd.f32 0.0, %v815
  %817 = vdwg.mxu0
  %v818 = vadd.f32 %v414, %v816
  %v819 = vtanh.pop %v818
  %820 = vst.msk [vmem:[#allocation2 + $0x68] sm:$0xff] %vm281, %v819
  %v822 = vsel %vm281, %v819, 0
  %824 = vmatpush.msra.mxu0 0.0
  %825 = vmatpush.msra.mxu0 0.0
  %826 = vmatpush.msra.mxu0 0.0
  %827 = vmatpush.msra.mxu0 0.0
  %828 = vmatpush.msra.mxu0 0.0
  %829 = vmatpush.msra.mxu0 0.0
  %830 = vmatpush.msra.mxu0 0.0
  %831 = vmatpush.msra.mxu0 0.0
  %832 = vmatpush.msra.mxu0 %v456
  %833 = vmatpush.msra.mxu0 %v455
  %834 = vmatpush.msra.mxu0 %v454
  %835 = vmatpush.msra.mxu0 %v453
  %836 = vmatpush.msra.mxu0 %v452
  %837 = vmatpush.msra.mxu0 %v451
  %838 = vmatpush.msra.mxu0 %v450
  %839 = vmatpush.msra.mxu0 %v449
  %840 = vmatmul.f32.gmra.mxu0 %v822
  %v841 = vpop.f32.mrf.mxu0
  %v842 = vadd.f32 0.0, %v841
  %843 = vdwg.mxu0
  %v844 = vadd.f32 %v417, %v842
  %v845 = vtanh.pop %v844
  %846 = vst.msk [vmem:[#allocation2 + $0x70] sm:$0xff] %vm281, %v845
  %v848 = vsel %vm281, %v845, 0
  %850 = vmatpush.msra.mxu0 0.0
  %851 = vmatpush.msra.mxu0 0.0
  %852 = vmatpush.msra.mxu0 0.0
  %853 = vmatpush.msra.mxu0 0.0
  %854 = vmatpush.msra.mxu0 0.0
  %855 = vmatpush.msra.mxu0 0.0
  %856 = vmatpush.msra.mxu0 0.0
  %857 = vmatpush.msra.mxu0 0.0
  %858 = vmatpush.msra.mxu0 %v456
  %859 = vmatpush.msra.mxu0 %v455
  %860 = vmatpush.msra.mxu0 %v454
  %861 = vmatpush.msra.mxu0 %v453
  %862 = vmatpush.msra.mxu0 %v452
  %863 = vmatpush.msra.mxu0 %v451
  %864 = vmatpush.msra.mxu0 %v450
  %865 = vmatpush.msra.mxu0 %v449
  %866 = vmatmul.f32.gmra.mxu0 %v848
  %v867 = vpop.f32.mrf.mxu0
  %v868 = vadd.f32 0.0, %v867
  %869 = vdwg.mxu0
  %v870 = vadd.f32 %v420, %v868
  %v871 = vtanh.pop %v870
  %872 = vst.msk [vmem:[#allocation2 + $0x78] sm:$0xff] %vm281, %v871
  %v874 = vsel %vm281, %v871, 0
  %876 = vmatpush.msra.mxu0 0.0
  %877 = vmatpush.msra.mxu0 0.0
  %878 = vmatpush.msra.mxu0 0.0
  %879 = vmatpush.msra.mxu0 0.0
  %880 = vmatpush.msra.mxu0 0.0
  %881 = vmatpush.msra.mxu0 0.0
  %882 = vmatpush.msra.mxu0 0.0
  %883 = vmatpush.msra.mxu0 0.0
  %884 = vmatpush.msra.mxu0 %v456
  %885 = vmatpush.msra.mxu0 %v455
  %886 = vmatpush.msra.mxu0 %v454
  %887 = vmatpush.msra.mxu0 %v453
  %888 = vmatpush.msra.mxu0 %v452
  %889 = vmatpush.msra.mxu0 %v451
  %890 = vmatpush.msra.mxu0 %v450
  %891 = vmatpush.msra.mxu0 %v449
  %892 = vmatmul.f32.gmra.mxu0 %v874
  %v893 = vpop.f32.mrf.mxu0
  %v894 = vadd.f32 0.0, %v893
  %895 = vdwg.mxu0
  %v896 = vadd.f32 %v423, %v894
  %v897 = vtanh.pop %v896
  %898 = vst.msk [vmem:[#allocation2 + $0x80] sm:$0xff] %vm281, %v897
  %v900 = vsel %vm281, %v897, 0
  %902 = vmatpush.msra.mxu0 0.0
  %903 = vmatpush.msra.mxu0 0.0
  %904 = vmatpush.msra.mxu0 0.0
  %905 = vmatpush.msra.mxu0 0.0
  %906 = vmatpush.msra.mxu0 0.0
  %907 = vmatpush.msra.mxu0 0.0
  %908 = vmatpush.msra.mxu0 0.0
  %909 = vmatpush.msra.mxu0 0.0
  %910 = vmatpush.msra.mxu0 %v456
  %911 = vmatpush.msra.mxu0 %v455
  %912 = vmatpush.msra.mxu0 %v454
  %913 = vmatpush.msra.mxu0 %v453
  %914 = vmatpush.msra.mxu0 %v452
  %915 = vmatpush.msra.mxu0 %v451
  %916 = vmatpush.msra.mxu0 %v450
  %917 = vmatpush.msra.mxu0 %v449
  %918 = vmatmul.f32.gmra.mxu0 %v900
  %v919 = vpop.f32.mrf.mxu0
  %v920 = vadd.f32 0.0, %v919
  %921 = vdwg.mxu0
  %v922 = vadd.f32 %v426, %v920
  %v923 = vtanh.pop %v922
  %924 = vst.msk [vmem:[#allocation2 + $0x88] sm:$0xff] %vm281, %v923
  %v926 = vsel %vm281, %v923, 0
  %928 = vmatpush.msra.mxu0 0.0
  %929 = vmatpush.msra.mxu0 0.0
  %930 = vmatpush.msra.mxu0 0.0
  %931 = vmatpush.msra.mxu0 0.0
  %932 = vmatpush.msra.mxu0 0.0
  %933 = vmatpush.msra.mxu0 0.0
  %934 = vmatpush.msra.mxu0 0.0
  %935 = vmatpush.msra.mxu0 0.0
  %936 = vmatpush.msra.mxu0 %v456
  %937 = vmatpush.msra.mxu0 %v455
  %938 = vmatpush.msra.mxu0 %v454
  %939 = vmatpush.msra.mxu0 %v453
  %940 = vmatpush.msra.mxu0 %v452
  %941 = vmatpush.msra.mxu0 %v451
  %942 = vmatpush.msra.mxu0 %v450
  %943 = vmatpush.msra.mxu0 %v449
  %944 = vmatmul.f32.gmra.mxu0 %v926
  %v945 = vpop.f32.mrf.mxu0
  %v946 = vadd.f32 0.0, %v945
  %947 = vdwg.mxu0
  %v948 = vadd.f32 %v429, %v946
  %v949 = vtanh.pop %v948
  %950 = vst.msk [vmem:[#allocation2 + $0x90] sm:$0xff] %vm281, %v949
  %v952 = vsel %vm281, %v949, 0
  %954 = vmatpush.msra.mxu0 0.0
  %955 = vmatpush.msra.mxu0 0.0
  %956 = vmatpush.msra.mxu0 0.0
  %957 = vmatpush.msra.mxu0 0.0
  %958 = vmatpush.msra.mxu0 0.0
  %959 = vmatpush.msra.mxu0 0.0
  %960 = vmatpush.msra.mxu0 0.0
  %961 = vmatpush.msra.mxu0 0.0
  %962 = vmatpush.msra.mxu0 %v456
  %963 = vmatpush.msra.mxu0 %v455
  %964 = vmatpush.msra.mxu0 %v454
  %965 = vmatpush.msra.mxu0 %v453
  %966 = vmatpush.msra.mxu0 %v452
  %967 = vmatpush.msra.mxu0 %v451
  %968 = vmatpush.msra.mxu0 %v450
  %969 = vmatpush.msra.mxu0 %v449
  %970 = vmatmul.f32.gmra.mxu0 %v952
  %v971 = vpop.f32.mrf.mxu0
  %v972 = vadd.f32 0.0, %v971
  %973 = vdwg.mxu0
  %v974 = vadd.f32 %v432, %v972
  %v975 = vtanh.pop %v974
  %976 = vst.msk [vmem:[#allocation2 + $0x98] sm:$0xff] %vm281, %v975
  %v978 = vsel %vm281, %v975, 0
  %980 = vmatpush.msra.mxu0 0.0
  %981 = vmatpush.msra.mxu0 0.0
  %982 = vmatpush.msra.mxu0 0.0
  %983 = vmatpush.msra.mxu0 0.0
  %984 = vmatpush.msra.mxu0 0.0
  %985 = vmatpush.msra.mxu0 0.0
  %986 = vmatpush.msra.mxu0 0.0
  %987 = vmatpush.msra.mxu0 0.0
  %988 = vmatpush.msra.mxu0 %v456
  %989 = vmatpush.msra.mxu0 %v455
  %990 = vmatpush.msra.mxu0 %v454
  %991 = vmatpush.msra.mxu0 %v453
  %992 = vmatpush.msra.mxu0 %v452
  %993 = vmatpush.msra.mxu0 %v451
  %994 = vmatpush.msra.mxu0 %v450
  %995 = vmatpush.msra.mxu0 %v449
  %996 = vmatmul.f32.gmra.mxu0 %v978
  %v997 = vpop.f32.mrf.mxu0
  %v998 = vadd.f32 0.0, %v997
  %999 = vdwg.mxu0
  %v1000 = vadd.f32 %v435, %v998
  %v1001 = vtanh.pop %v1000
  %1002 = vst.msk [vmem:[#allocation2 + $0xa0] sm:$0xff] %vm281, %v1001
  %v1004 = vsel %vm281, %v1001, 0
  %1006 = vmatpush.msra.mxu0 0.0
  %1007 = vmatpush.msra.mxu0 0.0
  %1008 = vmatpush.msra.mxu0 0.0
  %1009 = vmatpush.msra.mxu0 0.0
  %1010 = vmatpush.msra.mxu0 0.0
  %1011 = vmatpush.msra.mxu0 0.0
  %1012 = vmatpush.msra.mxu0 0.0
  %1013 = vmatpush.msra.mxu0 0.0
  %1014 = vmatpush.msra.mxu0 %v456
  %1015 = vmatpush.msra.mxu0 %v455
  %1016 = vmatpush.msra.mxu0 %v454
  %1017 = vmatpush.msra.mxu0 %v453
  %1018 = vmatpush.msra.mxu0 %v452
  %1019 = vmatpush.msra.mxu0 %v451
  %1020 = vmatpush.msra.mxu0 %v450
  %1021 = vmatpush.msra.mxu0 %v449
  %1022 = vmatmul.f32.gmra.mxu0 %v1004
  %v1023 = vpop.f32.mrf.mxu0
  %v1024 = vadd.f32 0.0, %v1023
  %1025 = vdwg.mxu0
  %v1026 = vadd.f32 %v438, %v1024
  %v1027 = vtanh.pop %v1026
  %1028 = vst.msk [vmem:[#allocation2 + $0xa8] sm:$0xff] %vm281, %v1027
  %v1030 = vsel %vm281, %v1027, 0
  %1032 = vmatpush.msra.mxu0 0.0
  %1033 = vmatpush.msra.mxu0 0.0
  %1034 = vmatpush.msra.mxu0 0.0
  %1035 = vmatpush.msra.mxu0 0.0
  %1036 = vmatpush.msra.mxu0 0.0
  %1037 = vmatpush.msra.mxu0 0.0
  %1038 = vmatpush.msra.mxu0 0.0
  %1039 = vmatpush.msra.mxu0 0.0
  %1040 = vmatpush.msra.mxu0 %v456
  %1041 = vmatpush.msra.mxu0 %v455
  %1042 = vmatpush.msra.mxu0 %v454
  %1043 = vmatpush.msra.mxu0 %v453
  %1044 = vmatpush.msra.mxu0 %v452
  %1045 = vmatpush.msra.mxu0 %v451
  %1046 = vmatpush.msra.mxu0 %v450
  %1047 = vmatpush.msra.mxu0 %v449
  %1048 = vmatmul.f32.gmra.mxu0 %v1030
  %v1049 = vpop.f32.mrf.mxu0
  %v1050 = vadd.f32 0.0, %v1049
  %1051 = vdwg.mxu0
  %v1052 = vadd.f32 %v441, %v1050
  %v1053 = vtanh.pop %v1052
  %1054 = vst.msk [vmem:[#allocation2 + $0xb0] sm:$0xff] %vm281, %v1053
  %v1056 = vsel %vm281, %v1053, 0
  %1058 = vmatpush.msra.mxu0 0.0
  %1059 = vmatpush.msra.mxu0 0.0
  %1060 = vmatpush.msra.mxu0 0.0
  %1061 = vmatpush.msra.mxu0 0.0
  %1062 = vmatpush.msra.mxu0 0.0
  %1063 = vmatpush.msra.mxu0 0.0
  %1064 = vmatpush.msra.mxu0 0.0
  %1065 = vmatpush.msra.mxu0 0.0
  %1066 = vmatpush.msra.mxu0 %v456
  %1067 = vmatpush.msra.mxu0 %v455
  %1068 = vmatpush.msra.mxu0 %v454
  %1069 = vmatpush.msra.mxu0 %v453
  %1070 = vmatpush.msra.mxu0 %v452
  %1071 = vmatpush.msra.mxu0 %v451
  %1072 = vmatpush.msra.mxu0 %v450
  %1073 = vmatpush.msra.mxu0 %v449
  %1074 = vmatmul.f32.gmra.mxu0 %v1056
  %v1075 = vpop.f32.mrf.mxu0
  %v1076 = vadd.f32 0.0, %v1075
  %1077 = vdwg.mxu0
  %v1078 = vadd.f32 %v444, %v1076
  %v1079 = vtanh.pop %v1078
  %1080 = vst.msk [vmem:[#allocation2 + $0xb8] sm:$0xff] %vm281, %v1079
  %v1082 = vsel %vm281, %v1079, 0
  %1084 = vmatpush.msra.mxu0 0.0
  %1085 = vmatpush.msra.mxu0 0.0
  %1086 = vmatpush.msra.mxu0 0.0
  %1087 = vmatpush.msra.mxu0 0.0
  %1088 = vmatpush.msra.mxu0 0.0
  %1089 = vmatpush.msra.mxu0 0.0
  %1090 = vmatpush.msra.mxu0 0.0
  %1091 = vmatpush.msra.mxu0 0.0
  %1092 = vmatpush.msra.mxu0 %v456
  %1093 = vmatpush.msra.mxu0 %v455
  %1094 = vmatpush.msra.mxu0 %v454
  %1095 = vmatpush.msra.mxu0 %v453
  %1096 = vmatpush.msra.mxu0 %v452
  %1097 = vmatpush.msra.mxu0 %v451
  %1098 = vmatpush.msra.mxu0 %v450
  %1099 = vmatpush.msra.mxu0 %v449
  %1100 = vmatmul.f32.gmra.mxu0 %v1082
  %v1101 = vpop.f32.mrf.mxu0
  %v1102 = vadd.f32 0.0, %v1101
  %1103 = vdwg.mxu0
  %v1104 = vadd.f32 %v447, %v1102
  %v1105 = vtanh.pop %v1104
  %1106 = vst.msk [vmem:[#allocation2 + $0xc0] sm:$0xff] %vm281, %v1105
  %v1107 = vld [vmem:[#allocation2] sm:$0xff]
  %v1108 = vld [vmem:[#allocation2 + $0x8] sm:$0xff]
  %v1109 = vld [vmem:[#allocation2 + $0x10] sm:$0xff]
  %v1110 = vld [vmem:[#allocation2 + $0x18] sm:$0xff]
  %v1111 = vld [vmem:[#allocation2 + $0x20] sm:$0xff]
  %v1112 = vld [vmem:[#allocation2 + $0x28] sm:$0xff]
  %v1113 = vld [vmem:[#allocation2 + $0x30] sm:$0xff]
  %v1114 = vld [vmem:[#allocation2 + $0x38] sm:$0xff]
  %v1115 = vld [vmem:[#allocation2 + $0x40] sm:$0xff]
  %v1116 = vld [vmem:[#allocation2 + $0x48] sm:$0xff]
  %v1117 = vld [vmem:[#allocation2 + $0x50] sm:$0xff]
  %v1118 = vld [vmem:[#allocation2 + $0x58] sm:$0xff]
  %v1119 = vld [vmem:[#allocation2 + $0x60] sm:$0xff]
  %v1120 = vld [vmem:[#allocation2 + $0x68] sm:$0xff]
  %v1121 = vld [vmem:[#allocation2 + $0x70] sm:$0xff]
  %v1122 = vld [vmem:[#allocation2 + $0x78] sm:$0xff]
  %v1123 = vld [vmem:[#allocation2 + $0x80] sm:$0xff]
  %v1124 = vld [vmem:[#allocation2 + $0x88] sm:$0xff]
  %v1125 = vld [vmem:[#allocation2 + $0x90] sm:$0xff]
  %v1126 = vld [vmem:[#allocation2 + $0x98] sm:$0xff]
  %v1127 = vld [vmem:[#allocation2 + $0xa0] sm:$0xff]
  %v1128 = vld [vmem:[#allocation2 + $0xa8] sm:$0xff]
  %v1129 = vld [vmem:[#allocation2 + $0xb0] sm:$0xff]
  %v1130 = vld [vmem:[#allocation2 + $0xb8] sm:$0xff]
  %v1131 = vld [vmem:[#allocation2 + $0xc0] sm:$0xff]
  %v1132 = vld [vmem:[%s5] sm:$0xff]
  %v1133 = vld [vmem:[%s5 + $0x8] sm:$0xff]
  %v1134 = vld [vmem:[%s5 + $0x10] sm:$0xff]
  %v1135 = vld [vmem:[%s5 + $0x18] sm:$0xff]
  %v1136 = vld [vmem:[%s5 + $0x20] sm:$0xff]
  %v1137 = vld [vmem:[%s5 + $0x28] sm:$0xff]
  %v1138 = vld [vmem:[%s5 + $0x30] sm:$0xff]
  %v1139 = vld [vmem:[%s5 + $0x38] sm:$0xff]
  %v1140 = vld [vmem:[%s6] sm:$0x1]
  %v1142 = vperm.slane %v1140, 0
  %v1145 = vsel %vm281, %v1107, 0
  %v1148 = vsel %vm281, %v1108, 0
  %v1151 = vsel %vm281, %v1109, 0
  %v1154 = vsel %vm281, %v1110, 0
  %v1157 = vsel %vm281, %v1111, 0
  %v1160 = vsel %vm281, %v1112, 0
  %v1163 = vsel %vm281, %v1113, 0
  %v1166 = vsel %vm281, %v1114, 0
  %v1169 = vsel %vm281, %v1115, 0
  %v1172 = vsel %vm281, %v1116, 0
  %v1175 = vsel %vm281, %v1117, 0
  %v1178 = vsel %vm281, %v1118, 0
  %v1181 = vsel %vm281, %v1119, 0
  %v1184 = vsel %vm281, %v1120, 0
  %v1187 = vsel %vm281, %v1121, 0
  %v1190 = vsel %vm281, %v1122, 0
  %v1193 = vsel %vm281, %v1123, 0
  %v1196 = vsel %vm281, %v1124, 0
  %v1199 = vsel %vm281, %v1125, 0
  %v1202 = vsel %vm281, %v1126, 0
  %v1205 = vsel %vm281, %v1127, 0
  %v1208 = vsel %vm281, %v1128, 0
  %v1211 = vsel %vm281, %v1129, 0
  %v1214 = vsel %vm281, %v1130, 0
  %v1217 = vsel %vm281, %v1131, 0
  %1219 = vmatpush.msra.mxu0 0.0
  %1220 = vmatpush.msra.mxu0 0.0
  %1221 = vmatpush.msra.mxu0 0.0
  %1222 = vmatpush.msra.mxu0 0.0
  %1223 = vmatpush.msra.mxu0 0.0
  %1224 = vmatpush.msra.mxu0 0.0
  %1225 = vmatpush.msra.mxu0 0.0
  %1226 = vmatpush.msra.mxu0 0.0
  %1227 = vmatpush.msra.mxu0 %v1139
  %1228 = vmatpush.msra.mxu0 %v1138
  %1229 = vmatpush.msra.mxu0 %v1137
  %1230 = vmatpush.msra.mxu0 %v1136
  %1231 = vmatpush.msra.mxu0 %v1135
  %1232 = vmatpush.msra.mxu0 %v1134
  %1233 = vmatpush.msra.mxu0 %v1133
  %1234 = vmatpush.msra.mxu0 %v1132
  %1235 = vmatmul.f32.gmra.mxu0 %v1145
  %v1236 = vpop.f32.mrf.mxu0
  %v1237 = vadd.f32 %v1142, %v1236
  %1238 = vmatmul.f32.gmra.mxu0 %v1148
  %v1239 = vpop.f32.mrf.mxu0
  %v1240 = vadd.f32 %v1142, %v1239
  %1241 = vmatmul.f32.gmra.mxu0 %v1151
  %v1242 = vpop.f32.mrf.mxu0
  %v1243 = vadd.f32 %v1142, %v1242
  %1244 = vmatmul.f32.gmra.mxu0 %v1154
  %v1245 = vpop.f32.mrf.mxu0
  %v1246 = vadd.f32 %v1142, %v1245
  %1247 = vmatmul.f32.gmra.mxu0 %v1157
  %v1248 = vpop.f32.mrf.mxu0
  %v1249 = vadd.f32 %v1142, %v1248
  %1250 = vmatmul.f32.gmra.mxu0 %v1160
  %v1251 = vpop.f32.mrf.mxu0
  %v1252 = vadd.f32 %v1142, %v1251
  %1253 = vmatmul.f32.gmra.mxu0 %v1163
  %v1254 = vpop.f32.mrf.mxu0
  %v1255 = vadd.f32 %v1142, %v1254
  %1256 = vmatmul.f32.gmra.mxu0 %v1166
  %v1257 = vpop.f32.mrf.mxu0
  %v1258 = vadd.f32 %v1142, %v1257
  %1259 = vmatmul.f32.gmra.mxu0 %v1169
  %v1260 = vpop.f32.mrf.mxu0
  %v1261 = vadd.f32 %v1142, %v1260
  %1262 = vmatmul.f32.gmra.mxu0 %v1172
  %v1263 = vpop.f32.mrf.mxu0
  %v1264 = vadd.f32 %v1142, %v1263
  %1265 = vmatmul.f32.gmra.mxu0 %v1175
  %v1266 = vpop.f32.mrf.mxu0
  %v1267 = vadd.f32 %v1142, %v1266
  %1268 = vmatmul.f32.gmra.mxu0 %v1178
  %v1269 = vpop.f32.mrf.mxu0
  %v1270 = vadd.f32 %v1142, %v1269
  %1271 = vmatmul.f32.gmra.mxu0 %v1181
  %v1272 = vpop.f32.mrf.mxu0
  %v1273 = vadd.f32 %v1142, %v1272
  %1274 = vmatmul.f32.gmra.mxu0 %v1184
  %v1275 = vpop.f32.mrf.mxu0
  %v1276 = vadd.f32 %v1142, %v1275
  %1277 = vmatmul.f32.gmra.mxu0 %v1187
  %v1278 = vpop.f32.mrf.mxu0
  %v1279 = vadd.f32 %v1142, %v1278
  %1280 = vmatmul.f32.gmra.mxu0 %v1190
  %v1281 = vpop.f32.mrf.mxu0
  %v1282 = vadd.f32 %v1142, %v1281
  %1283 = vmatmul.f32.gmra.mxu0 %v1193
  %v1284 = vpop.f32.mrf.mxu0
  %v1285 = vadd.f32 %v1142, %v1284
  %1286 = vmatmul.f32.gmra.mxu0 %v1196
  %v1287 = vpop.f32.mrf.mxu0
  %v1288 = vadd.f32 %v1142, %v1287
  %1289 = vmatmul.f32.gmra.mxu0 %v1199
  %v1290 = vpop.f32.mrf.mxu0
  %v1291 = vadd.f32 %v1142, %v1290
  %1292 = vmatmul.f32.gmra.mxu0 %v1202
  %v1293 = vpop.f32.mrf.mxu0
  %v1294 = vadd.f32 %v1142, %v1293
  %1295 = vmatmul.f32.gmra.mxu0 %v1205
  %v1296 = vpop.f32.mrf.mxu0
  %v1297 = vadd.f32 %v1142, %v1296
  %1298 = vmatmul.f32.gmra.mxu0 %v1208
  %v1299 = vpop.f32.mrf.mxu0
  %v1300 = vadd.f32 %v1142, %v1299
  %1301 = vmatmul.f32.gmra.mxu0 %v1211
  %v1302 = vpop.f32.mrf.mxu0
  %v1303 = vadd.f32 %v1142, %v1302
  %1304 = vmatmul.f32.gmra.mxu0 %v1214
  %v1305 = vpop.f32.mrf.mxu0
  %v1306 = vadd.f32 %v1142, %v1305
  %1307 = vmatmul.f32.gmra.mxu0 %v1217
  %v1308 = vpop.f32.mrf.mxu0
  %v1309 = vadd.f32 %v1142, %v1308
  %1310 = vdwg.mxu0
  %v1311 = vld [vmem:[%s7] sm:$0xff]
  %v1312 = vld [vmem:[%s7 + $0x8] sm:$0xff]
  %v1313 = vld [vmem:[%s7 + $0x10] sm:$0xff]
  %v1314 = vld [vmem:[%s7 + $0x18] sm:$0xff]
  %v1315 = vld [vmem:[%s7 + $0x20] sm:$0xff]
  %v1316 = vld [vmem:[%s7 + $0x28] sm:$0xff]
  %v1317 = vld [vmem:[%s7 + $0x30] sm:$0xff]
  %v1318 = vld [vmem:[%s7 + $0x38] sm:$0xff]
  %v1319 = vld [vmem:[%s8] sm:$0x1]
  %v1321 = vperm.slane %v1319, 0
  %1323 = vmatpush.msra.mxu0 0.0
  %1324 = vmatpush.msra.mxu0 0.0
  %1325 = vmatpush.msra.mxu0 0.0
  %1326 = vmatpush.msra.mxu0 0.0
  %1327 = vmatpush.msra.mxu0 0.0
  %1328 = vmatpush.msra.mxu0 0.0
  %1329 = vmatpush.msra.mxu0 0.0
  %1330 = vmatpush.msra.mxu0 0.0
  %1331 = vmatpush.msra.mxu0 %v1318
  %1332 = vmatpush.msra.mxu0 %v1317
  %1333 = vmatpush.msra.mxu0 %v1316
  %1334 = vmatpush.msra.mxu0 %v1315
  %1335 = vmatpush.msra.mxu0 %v1314
  %1336 = vmatpush.msra.mxu0 %v1313
  %1337 = vmatpush.msra.mxu0 %v1312
  %1338 = vmatpush.msra.mxu0 %v1311
  %1339 = vmatmul.f32.gmra.mxu0 %v1145
  %v1340 = vpop.f32.mrf.mxu0
  %v1341 = vadd.f32 %v1321, %v1340
  %1342 = vmatmul.f32.gmra.mxu0 %v1148
  %v1343 = vpop.f32.mrf.mxu0
  %v1344 = vadd.f32 %v1321, %v1343
  %1345 = vmatmul.f32.gmra.mxu0 %v1151
  %v1346 = vpop.f32.mrf.mxu0
  %v1347 = vadd.f32 %v1321, %v1346
  %1348 = vmatmul.f32.gmra.mxu0 %v1154
  %v1349 = vpop.f32.mrf.mxu0
  %v1350 = vadd.f32 %v1321, %v1349
  %1351 = vmatmul.f32.gmra.mxu0 %v1157
  %v1352 = vpop.f32.mrf.mxu0
  %v1353 = vadd.f32 %v1321, %v1352
  %1354 = vmatmul.f32.gmra.mxu0 %v1160
  %v1355 = vpop.f32.mrf.mxu0
  %v1356 = vadd.f32 %v1321, %v1355
  %1357 = vmatmul.f32.gmra.mxu0 %v1163
  %v1358 = vpop.f32.mrf.mxu0
  %v1359 = vadd.f32 %v1321, %v1358
  %1360 = vmatmul.f32.gmra.mxu0 %v1166
  %v1361 = vpop.f32.mrf.mxu0
  %v1362 = vadd.f32 %v1321, %v1361
  %1363 = vmatmul.f32.gmra.mxu0 %v1169
  %v1364 = vpop.f32.mrf.mxu0
  %v1365 = vadd.f32 %v1321, %v1364
  %1366 = vmatmul.f32.gmra.mxu0 %v1172
  %v1367 = vpop.f32.mrf.mxu0
  %v1368 = vadd.f32 %v1321, %v1367
  %1369 = vmatmul.f32.gmra.mxu0 %v1175
  %v1370 = vpop.f32.mrf.mxu0
  %v1371 = vadd.f32 %v1321, %v1370
  %1372 = vmatmul.f32.gmra.mxu0 %v1178
  %v1373 = vpop.f32.mrf.mxu0
  %v1374 = vadd.f32 %v1321, %v1373
  %1375 = vmatmul.f32.gmra.mxu0 %v1181
  %v1376 = vpop.f32.mrf.mxu0
  %v1377 = vadd.f32 %v1321, %v1376
  %1378 = vmatmul.f32.gmra.mxu0 %v1184
  %v1379 = vpop.f32.mrf.mxu0
  %v1380 = vadd.f32 %v1321, %v1379
  %1381 = vmatmul.f32.gmra.mxu0 %v1187
  %v1382 = vpop.f32.mrf.mxu0
  %v1383 = vadd.f32 %v1321, %v1382
  %1384 = vmatmul.f32.gmra.mxu0 %v1190
  %v1385 = vpop.f32.mrf.mxu0
  %v1386 = vadd.f32 %v1321, %v1385
  %1387 = vmatmul.f32.gmra.mxu0 %v1193
  %v1388 = vpop.f32.mrf.mxu0
  %v1389 = vadd.f32 %v1321, %v1388
  %1390 = vmatmul.f32.gmra.mxu0 %v1196
  %v1391 = vpop.f32.mrf.mxu0
  %v1392 = vadd.f32 %v1321, %v1391
  %1393 = vmatmul.f32.gmra.mxu0 %v1199
  %v1394 = vpop.f32.mrf.mxu0
  %v1395 = vadd.f32 %v1321, %v1394
  %1396 = vmatmul.f32.gmra.mxu0 %v1202
  %v1397 = vpop.f32.mrf.mxu0
  %v1398 = vadd.f32 %v1321, %v1397
  %1399 = vmatmul.f32.gmra.mxu0 %v1205
  %v1400 = vpop.f32.mrf.mxu0
  %v1401 = vadd.f32 %v1321, %v1400
  %1402 = vmatmul.f32.gmra.mxu0 %v1208
  %v1403 = vpop.f32.mrf.mxu0
  %v1404 = vadd.f32 %v1321, %v1403
  %1405 = vmatmul.f32.gmra.mxu0 %v1211
  %v1406 = vpop.f32.mrf.mxu0
  %v1407 = vadd.f32 %v1321, %v1406
  %1408 = vmatmul.f32.gmra.mxu0 %v1214
  %v1409 = vpop.f32.mrf.mxu0
  %v1410 = vadd.f32 %v1321, %v1409
  %1411 = vmatmul.f32.gmra.mxu0 %v1217
  %v1412 = vpop.f32.mrf.mxu0
  %v1413 = vadd.f32 %v1321, %v1412
  %1414 = vdwg.mxu0
  %vm1415 = vcmask 64512
  %1416 = vst.msk [vmem:[%s19] sm:$0xff] %vm1415, %v1237
  %1417 = vst.msk [vmem:[%s19 + $0x8] sm:$0xff] %vm1415, %v1240
  %1418 = vst.msk [vmem:[%s19 + $0x10] sm:$0xff] %vm1415, %v1243
  %1419 = vst.msk [vmem:[%s19 + $0x18] sm:$0xff] %vm1415, %v1246
  %1420 = vst.msk [vmem:[%s19 + $0x20] sm:$0xff] %vm1415, %v1249
  %1421 = vst.msk [vmem:[%s19 + $0x28] sm:$0xff] %vm1415, %v1252
  %1422 = vst.msk [vmem:[%s19 + $0x30] sm:$0xff] %vm1415, %v1255
  %1423 = vst.msk [vmem:[%s19 + $0x38] sm:$0xff] %vm1415, %v1258
  %1424 = vst.msk [vmem:[%s19 + $0x40] sm:$0xff] %vm1415, %v1261
  %1425 = vst.msk [vmem:[%s19 + $0x48] sm:$0xff] %vm1415, %v1264
  %1426 = vst.msk [vmem:[%s19 + $0x50] sm:$0xff] %vm1415, %v1267
  %1427 = vst.msk [vmem:[%s19 + $0x58] sm:$0xff] %vm1415, %v1270
  %1428 = vst.msk [vmem:[%s19 + $0x60] sm:$0xff] %vm1415, %v1273
  %1429 = vst.msk [vmem:[%s19 + $0x68] sm:$0xff] %vm1415, %v1276
  %1430 = vst.msk [vmem:[%s19 + $0x70] sm:$0xff] %vm1415, %v1279
  %1431 = vst.msk [vmem:[%s19 + $0x78] sm:$0xff] %vm1415, %v1282
  %1432 = vst.msk [vmem:[%s19 + $0x80] sm:$0xff] %vm1415, %v1285
  %1433 = vst.msk [vmem:[%s19 + $0x88] sm:$0xff] %vm1415, %v1288
  %1434 = vst.msk [vmem:[%s19 + $0x90] sm:$0xff] %vm1415, %v1291
  %1435 = vst.msk [vmem:[%s19 + $0x98] sm:$0xff] %vm1415, %v1294
  %1436 = vst.msk [vmem:[%s19 + $0xa0] sm:$0xff] %vm1415, %v1297
  %1437 = vst.msk [vmem:[%s19 + $0xa8] sm:$0xff] %vm1415, %v1300
  %1438 = vst.msk [vmem:[%s19 + $0xb0] sm:$0xff] %vm1415, %v1303
  %1439 = vst.msk [vmem:[%s19 + $0xb8] sm:$0xff] %vm1415, %v1306
  %1440 = vst.msk [vmem:[%s19 + $0xc0] sm:$0xff] %vm1415, %v1309
  %1441 = vst.msk [vmem:[%s20] sm:$0xff] %vm1415, %v1341
  %1442 = vst.msk [vmem:[%s20 + $0x8] sm:$0xff] %vm1415, %v1344
  %1443 = vst.msk [vmem:[%s20 + $0x10] sm:$0xff] %vm1415, %v1347
  %1444 = vst.msk [vmem:[%s20 + $0x18] sm:$0xff] %vm1415, %v1350
  %1445 = vst.msk [vmem:[%s20 + $0x20] sm:$0xff] %vm1415, %v1353
  %1446 = vst.msk [vmem:[%s20 + $0x28] sm:$0xff] %vm1415, %v1356
  %1447 = vst.msk [vmem:[%s20 + $0x30] sm:$0xff] %vm1415, %v1359
  %1448 = vst.msk [vmem:[%s20 + $0x38] sm:$0xff] %vm1415, %v1362
  %1449 = vst.msk [vmem:[%s20 + $0x40] sm:$0xff] %vm1415, %v1365
  %1450 = vst.msk [vmem:[%s20 + $0x48] sm:$0xff] %vm1415, %v1368
  %1451 = vst.msk [vmem:[%s20 + $0x50] sm:$0xff] %vm1415, %v1371
  %1452 = vst.msk [vmem:[%s20 + $0x58] sm:$0xff] %vm1415, %v1374
  %1453 = vst.msk [vmem:[%s20 + $0x60] sm:$0xff] %vm1415, %v1377
  %1454 = vst.msk [vmem:[%s20 + $0x68] sm:$0xff] %vm1415, %v1380
  %1455 = vst.msk [vmem:[%s20 + $0x70] sm:$0xff] %vm1415, %v1383
  %1456 = vst.msk [vmem:[%s20 + $0x78] sm:$0xff] %vm1415, %v1386
  %1457 = vst.msk [vmem:[%s20 + $0x80] sm:$0xff] %vm1415, %v1389
  %1458 = vst.msk [vmem:[%s20 + $0x88] sm:$0xff] %vm1415, %v1392
  %1459 = vst.msk [vmem:[%s20 + $0x90] sm:$0xff] %vm1415, %v1395
  %1460 = vst.msk [vmem:[%s20 + $0x98] sm:$0xff] %vm1415, %v1398
  %1461 = vst.msk [vmem:[%s20 + $0xa0] sm:$0xff] %vm1415, %v1401
  %1462 = vst.msk [vmem:[%s20 + $0xa8] sm:$0xff] %vm1415, %v1404
  %1463 = vst.msk [vmem:[%s20 + $0xb0] sm:$0xff] %vm1415, %v1407
  %1464 = vst.msk [vmem:[%s20 + $0xb8] sm:$0xff] %vm1415, %v1410
  %1465 = vst.msk [vmem:[%s20 + $0xc0] sm:$0xff] %vm1415, %v1413
  %v1466 = vld [vmem:[%s16] sm:$0xff]
  %v1468 = vsel %vm1415, %v1237, 0
  %v1471 = vsel %vm1415, %v1240, 0
  %v1474 = vsel %vm1415, %v1243, 0
  %v1477 = vsel %vm1415, %v1246, 0
  %v1480 = vsel %vm1415, %v1249, 0
  %v1483 = vsel %vm1415, %v1252, 0
  %v1486 = vsel %vm1415, %v1255, 0
  %v1489 = vsel %vm1415, %v1258, 0
  %v1492 = vsel %vm1415, %v1261, 0
  %v1495 = vsel %vm1415, %v1264, 0
  %v1498 = vsel %vm1415, %v1267, 0
  %v1501 = vsel %vm1415, %v1270, 0
  %v1504 = vsel %vm1415, %v1273, 0
  %v1507 = vsel %vm1415, %v1276, 0
  %v1510 = vsel %vm1415, %v1279, 0
  %v1513 = vsel %vm1415, %v1282, 0
  %v1516 = vsel %vm1415, %v1285, 0
  %v1519 = vsel %vm1415, %v1288, 0
  %v1522 = vsel %vm1415, %v1291, 0
  %v1525 = vsel %vm1415, %v1294, 0
  %v1528 = vsel %vm1415, %v1297, 0
  %v1531 = vsel %vm1415, %v1300, 0
  %v1534 = vsel %vm1415, %v1303, 0
  %v1537 = vsel %vm1415, %v1306, 0
  %v1540 = vsel %vm1415, %v1309, 0
  %1542 = vmatpush.msra.mxu0 0.0
  %1543 = vmatpush.msra.mxu0 0.0
  %1544 = vmatpush.msra.mxu0 0.0
  %1545 = vmatpush.msra.mxu0 0.0
  %1546 = vmatpush.msra.mxu0 0.0
  %1547 = vmatpush.msra.mxu0 0.0
  %1548 = vmatpush.msra.mxu0 0.0
  %1549 = vmatpush.msra.mxu0 0.0
  %1550 = vmatpush.msra.mxu0 0.0
  %1551 = vmatpush.msra.mxu0 0.0
  %1552 = vmatpush.msra.mxu0 0.0
  %1553 = vmatpush.msra.mxu0 0.0
  %1554 = vmatpush.msra.mxu0 0.0
  %1555 = vmatpush.msra.mxu0 0.0
  %1556 = vmatpush.msra.mxu0 0.0
  %1557 = vmatpush.msra.mxu0 %v1466
  %1558 = vmatmul.f32.gmra.mxu0 %v1468
  %v1559 = vpop.f32.mrf.mxu0
  %v1560 = vadd.f32 0.0, %v1559
  %1561 = vmatmul.f32.gmra.mxu0 %v1471
  %v1562 = vpop.f32.mrf.mxu0
  %v1563 = vadd.f32 0.0, %v1562
  %1564 = vmatmul.f32.gmra.mxu0 %v1474
  %v1565 = vpop.f32.mrf.mxu0
  %v1566 = vadd.f32 0.0, %v1565
  %1567 = vmatmul.f32.gmra.mxu0 %v1477
  %v1568 = vpop.f32.mrf.mxu0
  %v1569 = vadd.f32 0.0, %v1568
  %1570 = vmatmul.f32.gmra.mxu0 %v1480
  %v1571 = vpop.f32.mrf.mxu0
  %v1572 = vadd.f32 0.0, %v1571
  %1573 = vmatmul.f32.gmra.mxu0 %v1483
  %v1574 = vpop.f32.mrf.mxu0
  %v1575 = vadd.f32 0.0, %v1574
  %1576 = vmatmul.f32.gmra.mxu0 %v1486
  %v1577 = vpop.f32.mrf.mxu0
  %v1578 = vadd.f32 0.0, %v1577
  %1579 = vmatmul.f32.gmra.mxu0 %v1489
  %v1580 = vpop.f32.mrf.mxu0
  %v1581 = vadd.f32 0.0, %v1580
  %1582 = vmatmul.f32.gmra.mxu0 %v1492
  %v1583 = vpop.f32.mrf.mxu0
  %v1584 = vadd.f32 0.0, %v1583
  %1585 = vmatmul.f32.gmra.mxu0 %v1495
  %v1586 = vpop.f32.mrf.mxu0
  %v1587 = vadd.f32 0.0, %v1586
  %1588 = vmatmul.f32.gmra.mxu0 %v1498
  %v1589 = vpop.f32.mrf.mxu0
  %v1590 = vadd.f32 0.0, %v1589
  %1591 = vmatmul.f32.gmra.mxu0 %v1501
  %v1592 = vpop.f32.mrf.mxu0
  %v1593 = vadd.f32 0.0, %v1592
  %1594 = vmatmul.f32.gmra.mxu0 %v1504
  %v1595 = vpop.f32.mrf.mxu0
  %v1596 = vadd.f32 0.0, %v1595
  %1597 = vmatmul.f32.gmra.mxu0 %v1507
  %v1598 = vpop.f32.mrf.mxu0
  %v1599 = vadd.f32 0.0, %v1598
  %1600 = vmatmul.f32.gmra.mxu0 %v1510
  %v1601 = vpop.f32.mrf.mxu0
  %v1602 = vadd.f32 0.0, %v1601
  %1603 = vmatmul.f32.gmra.mxu0 %v1513
  %v1604 = vpop.f32.mrf.mxu0
  %v1605 = vadd.f32 0.0, %v1604
  %1606 = vmatmul.f32.gmra.mxu0 %v1516
  %v1607 = vpop.f32.mrf.mxu0
  %v1608 = vadd.f32 0.0, %v1607
  %1609 = vmatmul.f32.gmra.mxu0 %v1519
  %v1610 = vpop.f32.mrf.mxu0
  %v1611 = vadd.f32 0.0, %v1610
  %1612 = vmatmul.f32.gmra.mxu0 %v1522
  %v1613 = vpop.f32.mrf.mxu0
  %v1614 = vadd.f32 0.0, %v1613
  %1615 = vmatmul.f32.gmra.mxu0 %v1525
  %v1616 = vpop.f32.mrf.mxu0
  %v1617 = vadd.f32 0.0, %v1616
  %1618 = vmatmul.f32.gmra.mxu0 %v1528
  %v1619 = vpop.f32.mrf.mxu0
  %v1620 = vadd.f32 0.0, %v1619
  %1621 = vmatmul.f32.gmra.mxu0 %v1531
  %v1622 = vpop.f32.mrf.mxu0
  %v1623 = vadd.f32 0.0, %v1622
  %1624 = vmatmul.f32.gmra.mxu0 %v1534
  %v1625 = vpop.f32.mrf.mxu0
  %v1626 = vadd.f32 0.0, %v1625
  %1627 = vmatmul.f32.gmra.mxu0 %v1537
  %v1628 = vpop.f32.mrf.mxu0
  %v1629 = vadd.f32 0.0, %v1628
  %1630 = vmatmul.f32.gmra.mxu0 %v1540
  %v1631 = vpop.f32.mrf.mxu0
  %v1632 = vadd.f32 0.0, %v1631
  %1633 = vdwg.mxu0
  %vm1634 = vcmask 15360
  %1635 = vst.msk [vmem:[%s18] sm:$0xff] %vm1634, %v1560
  %1636 = vst.msk [vmem:[%s18 + $0x8] sm:$0xff] %vm1634, %v1563
  %1637 = vst.msk [vmem:[%s18 + $0x10] sm:$0xff] %vm1634, %v1566
  %1638 = vst.msk [vmem:[%s18 + $0x18] sm:$0xff] %vm1634, %v1569
  %1639 = vst.msk [vmem:[%s18 + $0x20] sm:$0xff] %vm1634, %v1572
  %1640 = vst.msk [vmem:[%s18 + $0x28] sm:$0xff] %vm1634, %v1575
  %1641 = vst.msk [vmem:[%s18 + $0x30] sm:$0xff] %vm1634, %v1578
  %1642 = vst.msk [vmem:[%s18 + $0x38] sm:$0xff] %vm1634, %v1581
  %1643 = vst.msk [vmem:[%s18 + $0x40] sm:$0xff] %vm1634, %v1584
  %1644 = vst.msk [vmem:[%s18 + $0x48] sm:$0xff] %vm1634, %v1587
  %1645 = vst.msk [vmem:[%s18 + $0x50] sm:$0xff] %vm1634, %v1590
  %1646 = vst.msk [vmem:[%s18 + $0x58] sm:$0xff] %vm1634, %v1593
  %1647 = vst.msk [vmem:[%s18 + $0x60] sm:$0xff] %vm1634, %v1596
  %1648 = vst.msk [vmem:[%s18 + $0x68] sm:$0xff] %vm1634, %v1599
  %1649 = vst.msk [vmem:[%s18 + $0x70] sm:$0xff] %vm1634, %v1602
  %1650 = vst.msk [vmem:[%s18 + $0x78] sm:$0xff] %vm1634, %v1605
  %1651 = vst.msk [vmem:[%s18 + $0x80] sm:$0xff] %vm1634, %v1608
  %1652 = vst.msk [vmem:[%s18 + $0x88] sm:$0xff] %vm1634, %v1611
  %1653 = vst.msk [vmem:[%s18 + $0x90] sm:$0xff] %vm1634, %v1614
  %1654 = vst.msk [vmem:[%s18 + $0x98] sm:$0xff] %vm1634, %v1617
  %1655 = vst.msk [vmem:[%s18 + $0xa0] sm:$0xff] %vm1634, %v1620
  %1656 = vst.msk [vmem:[%s18 + $0xa8] sm:$0xff] %vm1634, %v1623
  %1657 = vst.msk [vmem:[%s18 + $0xb0] sm:$0xff] %vm1634, %v1626
  %1658 = vst.msk [vmem:[%s18 + $0xb8] sm:$0xff] %vm1634, %v1629
  %1659 = vst.msk [vmem:[%s18 + $0xc0] sm:$0xff] %vm1634, %v1632
  %v1660 = vld [vmem:[%s9] sm:$0xff]
  %v1661 = vld [vmem:[%s11] sm:$0x1]
  %v1663 = vperm.slane %v1661, 0
  %1665 = vmatpush.msra.mxu0 0.0
  %1666 = vmatpush.msra.mxu0 0.0
  %1667 = vmatpush.msra.mxu0 0.0
  %1668 = vmatpush.msra.mxu0 0.0
  %1669 = vmatpush.msra.mxu0 0.0
  %1670 = vmatpush.msra.mxu0 0.0
  %1671 = vmatpush.msra.mxu0 0.0
  %1672 = vmatpush.msra.mxu0 0.0
  %1673 = vmatpush.msra.mxu0 0.0
  %1674 = vmatpush.msra.mxu0 0.0
  %1675 = vmatpush.msra.mxu0 0.0
  %1676 = vmatpush.msra.mxu0 0.0
  %1677 = vmatpush.msra.mxu0 0.0
  %1678 = vmatpush.msra.mxu0 0.0
  %1679 = vmatpush.msra.mxu0 0.0
  %1680 = vmatpush.msra.mxu0 %v1660
  %1681 = vmatmul.f32.gmra.mxu0 %v1468
  %v1682 = vpop.f32.mrf.mxu0
  %v1683 = vadd.f32 %v1663, %v1682
  %1684 = vmatmul.f32.gmra.mxu0 %v1471
  %v1685 = vpop.f32.mrf.mxu0
  %v1686 = vadd.f32 %v1663, %v1685
  %1687 = vmatmul.f32.gmra.mxu0 %v1474
  %v1688 = vpop.f32.mrf.mxu0
  %v1689 = vadd.f32 %v1663, %v1688
  %1690 = vmatmul.f32.gmra.mxu0 %v1477
  %v1691 = vpop.f32.mrf.mxu0
  %v1692 = vadd.f32 %v1663, %v1691
  %1693 = vmatmul.f32.gmra.mxu0 %v1480
  %v1694 = vpop.f32.mrf.mxu0
  %v1695 = vadd.f32 %v1663, %v1694
  %1696 = vmatmul.f32.gmra.mxu0 %v1483
  %v1697 = vpop.f32.mrf.mxu0
  %v1698 = vadd.f32 %v1663, %v1697
  %1699 = vmatmul.f32.gmra.mxu0 %v1486
  %v1700 = vpop.f32.mrf.mxu0
  %v1701 = vadd.f32 %v1663, %v1700
  %1702 = vmatmul.f32.gmra.mxu0 %v1489
  %v1703 = vpop.f32.mrf.mxu0
  %v1704 = vadd.f32 %v1663, %v1703
  %1705 = vmatmul.f32.gmra.mxu0 %v1492
  %v1706 = vpop.f32.mrf.mxu0
  %v1707 = vadd.f32 %v1663, %v1706
  %1708 = vmatmul.f32.gmra.mxu0 %v1495
  %v1709 = vpop.f32.mrf.mxu0
  %v1710 = vadd.f32 %v1663, %v1709
  %1711 = vmatmul.f32.gmra.mxu0 %v1498
  %v1712 = vpop.f32.mrf.mxu0
  %v1713 = vadd.f32 %v1663, %v1712
  %1714 = vmatmul.f32.gmra.mxu0 %v1501
  %v1715 = vpop.f32.mrf.mxu0
  %v1716 = vadd.f32 %v1663, %v1715
  %1717 = vmatmul.f32.gmra.mxu0 %v1504
  %v1718 = vpop.f32.mrf.mxu0
  %v1719 = vadd.f32 %v1663, %v1718
  %1720 = vmatmul.f32.gmra.mxu0 %v1507
  %v1721 = vpop.f32.mrf.mxu0
  %v1722 = vadd.f32 %v1663, %v1721
  %1723 = vmatmul.f32.gmra.mxu0 %v1510
  %v1724 = vpop.f32.mrf.mxu0
  %v1725 = vadd.f32 %v1663, %v1724
  %1726 = vmatmul.f32.gmra.mxu0 %v1513
  %v1727 = vpop.f32.mrf.mxu0
  %v1728 = vadd.f32 %v1663, %v1727
  %1729 = vmatmul.f32.gmra.mxu0 %v1516
  %v1730 = vpop.f32.mrf.mxu0
  %v1731 = vadd.f32 %v1663, %v1730
  %1732 = vmatmul.f32.gmra.mxu0 %v1519
  %v1733 = vpop.f32.mrf.mxu0
  %v1734 = vadd.f32 %v1663, %v1733
  %1735 = vmatmul.f32.gmra.mxu0 %v1522
  %v1736 = vpop.f32.mrf.mxu0
  %v1737 = vadd.f32 %v1663, %v1736
  %1738 = vmatmul.f32.gmra.mxu0 %v1525
  %v1739 = vpop.f32.mrf.mxu0
  %v1740 = vadd.f32 %v1663, %v1739
  %1741 = vmatmul.f32.gmra.mxu0 %v1528
  %v1742 = vpop.f32.mrf.mxu0
  %v1743 = vadd.f32 %v1663, %v1742
  %1744 = vmatmul.f32.gmra.mxu0 %v1531
  %v1745 = vpop.f32.mrf.mxu0
  %v1746 = vadd.f32 %v1663, %v1745
  %1747 = vmatmul.f32.gmra.mxu0 %v1534
  %v1748 = vpop.f32.mrf.mxu0
  %v1749 = vadd.f32 %v1663, %v1748
  %1750 = vmatmul.f32.gmra.mxu0 %v1537
  %v1751 = vpop.f32.mrf.mxu0
  %v1752 = vadd.f32 %v1663, %v1751
  %1753 = vmatmul.f32.gmra.mxu0 %v1540
  %v1754 = vpop.f32.mrf.mxu0
  %v1755 = vadd.f32 %v1663, %v1754
  %1756 = vdwg.mxu0
  %v1757 = vld [vmem:[%s10] sm:$0xff]
  %v1758 = vsel %vm1415, 0.0, 0
  %1760 = vmatpush.msra.mxu0 0.0
  %1761 = vmatpush.msra.mxu0 0.0
  %1762 = vmatpush.msra.mxu0 0.0
  %1763 = vmatpush.msra.mxu0 0.0
  %1764 = vmatpush.msra.mxu0 0.0
  %1765 = vmatpush.msra.mxu0 0.0
  %1766 = vmatpush.msra.mxu0 0.0
  %1767 = vmatpush.msra.mxu0 0.0
  %1768 = vmatpush.msra.mxu0 0.0
  %1769 = vmatpush.msra.mxu0 0.0
  %1770 = vmatpush.msra.mxu0 0.0
  %1771 = vmatpush.msra.mxu0 0.0
  %1772 = vmatpush.msra.mxu0 0.0
  %1773 = vmatpush.msra.mxu0 0.0
  %1774 = vmatpush.msra.mxu0 0.0
  %1775 = vmatpush.msra.mxu0 %v1757
  %1776 = vmatmul.f32.gmra.mxu0 %v1758
  %v1777 = vpop.f32.mrf.mxu0
  %v1778 = vadd.f32 0.0, %v1777
  %1779 = vdwg.mxu0
  %v1780 = vadd.f32 %v1683, %v1778
  %v1781 = vtanh.pop %v1780
  %1782 = vst.msk [vmem:[#allocation3] sm:$0xff] %vm1415, %v1781
  %v1784 = vsel %vm1415, %v1781, 0
  %1786 = vmatpush.msra.mxu0 0.0
  %1787 = vmatpush.msra.mxu0 0.0
  %1788 = vmatpush.msra.mxu0 0.0
  %1789 = vmatpush.msra.mxu0 0.0
  %1790 = vmatpush.msra.mxu0 0.0
  %1791 = vmatpush.msra.mxu0 0.0
  %1792 = vmatpush.msra.mxu0 0.0
  %1793 = vmatpush.msra.mxu0 0.0
  %1794 = vmatpush.msra.mxu0 0.0
  %1795 = vmatpush.msra.mxu0 0.0
  %1796 = vmatpush.msra.mxu0 0.0
  %1797 = vmatpush.msra.mxu0 0.0
  %1798 = vmatpush.msra.mxu0 0.0
  %1799 = vmatpush.msra.mxu0 0.0
  %1800 = vmatpush.msra.mxu0 0.0
  %1801 = vmatpush.msra.mxu0 %v1757
  %1802 = vmatmul.f32.gmra.mxu0 %v1784
  %v1803 = vpop.f32.mrf.mxu0
  %v1804 = vadd.f32 0.0, %v1803
  %1805 = vdwg.mxu0
  %v1806 = vadd.f32 %v1686, %v1804
  %v1807 = vtanh.pop %v1806
  %1808 = vst.msk [vmem:[#allocation3 + $0x8] sm:$0xff] %vm1415, %v1807
  %v1810 = vsel %vm1415, %v1807, 0
  %1812 = vmatpush.msra.mxu0 0.0
  %1813 = vmatpush.msra.mxu0 0.0
  %1814 = vmatpush.msra.mxu0 0.0
  %1815 = vmatpush.msra.mxu0 0.0
  %1816 = vmatpush.msra.mxu0 0.0
  %1817 = vmatpush.msra.mxu0 0.0
  %1818 = vmatpush.msra.mxu0 0.0
  %1819 = vmatpush.msra.mxu0 0.0
  %1820 = vmatpush.msra.mxu0 0.0
  %1821 = vmatpush.msra.mxu0 0.0
  %1822 = vmatpush.msra.mxu0 0.0
  %1823 = vmatpush.msra.mxu0 0.0
  %1824 = vmatpush.msra.mxu0 0.0
  %1825 = vmatpush.msra.mxu0 0.0
  %1826 = vmatpush.msra.mxu0 0.0
  %1827 = vmatpush.msra.mxu0 %v1757
  %1828 = vmatmul.f32.gmra.mxu0 %v1810
  %v1829 = vpop.f32.mrf.mxu0
  %v1830 = vadd.f32 0.0, %v1829
  %1831 = vdwg.mxu0
  %v1832 = vadd.f32 %v1689, %v1830
  %v1833 = vtanh.pop %v1832
  %1834 = vst.msk [vmem:[#allocation3 + $0x10] sm:$0xff] %vm1415, %v1833
  %v1836 = vsel %vm1415, %v1833, 0
  %1838 = vmatpush.msra.mxu0 0.0
  %1839 = vmatpush.msra.mxu0 0.0
  %1840 = vmatpush.msra.mxu0 0.0
  %1841 = vmatpush.msra.mxu0 0.0
  %1842 = vmatpush.msra.mxu0 0.0
  %1843 = vmatpush.msra.mxu0 0.0
  %1844 = vmatpush.msra.mxu0 0.0
  %1845 = vmatpush.msra.mxu0 0.0
  %1846 = vmatpush.msra.mxu0 0.0
  %1847 = vmatpush.msra.mxu0 0.0
  %1848 = vmatpush.msra.mxu0 0.0
  %1849 = vmatpush.msra.mxu0 0.0
  %1850 = vmatpush.msra.mxu0 0.0
  %1851 = vmatpush.msra.mxu0 0.0
  %1852 = vmatpush.msra.mxu0 0.0
  %1853 = vmatpush.msra.mxu0 %v1757
  %1854 = vmatmul.f32.gmra.mxu0 %v1836
  %v1855 = vpop.f32.mrf.mxu0
  %v1856 = vadd.f32 0.0, %v1855
  %1857 = vdwg.mxu0
  %v1858 = vadd.f32 %v1692, %v1856
  %v1859 = vtanh.pop %v1858
  %1860 = vst.msk [vmem:[#allocation3 + $0x18] sm:$0xff] %vm1415, %v1859
  %v1862 = vsel %vm1415, %v1859, 0
  %1864 = vmatpush.msra.mxu0 0.0
  %1865 = vmatpush.msra.mxu0 0.0
  %1866 = vmatpush.msra.mxu0 0.0
  %1867 = vmatpush.msra.mxu0 0.0
  %1868 = vmatpush.msra.mxu0 0.0
  %1869 = vmatpush.msra.mxu0 0.0
  %1870 = vmatpush.msra.mxu0 0.0
  %1871 = vmatpush.msra.mxu0 0.0
  %1872 = vmatpush.msra.mxu0 0.0
  %1873 = vmatpush.msra.mxu0 0.0
  %1874 = vmatpush.msra.mxu0 0.0
  %1875 = vmatpush.msra.mxu0 0.0
  %1876 = vmatpush.msra.mxu0 0.0
  %1877 = vmatpush.msra.mxu0 0.0
  %1878 = vmatpush.msra.mxu0 0.0
  %1879 = vmatpush.msra.mxu0 %v1757
  %1880 = vmatmul.f32.gmra.mxu0 %v1862
  %v1881 = vpop.f32.mrf.mxu0
  %v1882 = vadd.f32 0.0, %v1881
  %1883 = vdwg.mxu0
  %v1884 = vadd.f32 %v1695, %v1882
  %v1885 = vtanh.pop %v1884
  %1886 = vst.msk [vmem:[#allocation3 + $0x20] sm:$0xff] %vm1415, %v1885
  %v1888 = vsel %vm1415, %v1885, 0
  %1890 = vmatpush.msra.mxu0 0.0
  %1891 = vmatpush.msra.mxu0 0.0
  %1892 = vmatpush.msra.mxu0 0.0
  %1893 = vmatpush.msra.mxu0 0.0
  %1894 = vmatpush.msra.mxu0 0.0
  %1895 = vmatpush.msra.mxu0 0.0
  %1896 = vmatpush.msra.mxu0 0.0
  %1897 = vmatpush.msra.mxu0 0.0
  %1898 = vmatpush.msra.mxu0 0.0
  %1899 = vmatpush.msra.mxu0 0.0
  %1900 = vmatpush.msra.mxu0 0.0
  %1901 = vmatpush.msra.mxu0 0.0
  %1902 = vmatpush.msra.mxu0 0.0
  %1903 = vmatpush.msra.mxu0 0.0
  %1904 = vmatpush.msra.mxu0 0.0
  %1905 = vmatpush.msra.mxu0 %v1757
  %1906 = vmatmul.f32.gmra.mxu0 %v1888
  %v1907 = vpop.f32.mrf.mxu0
  %v1908 = vadd.f32 0.0, %v1907
  %1909 = vdwg.mxu0
  %v1910 = vadd.f32 %v1698, %v1908
  %v1911 = vtanh.pop %v1910
  %1912 = vst.msk [vmem:[#allocation3 + $0x28] sm:$0xff] %vm1415, %v1911
  %v1914 = vsel %vm1415, %v1911, 0
  %1916 = vmatpush.msra.mxu0 0.0
  %1917 = vmatpush.msra.mxu0 0.0
  %1918 = vmatpush.msra.mxu0 0.0
  %1919 = vmatpush.msra.mxu0 0.0
  %1920 = vmatpush.msra.mxu0 0.0
  %1921 = vmatpush.msra.mxu0 0.0
  %1922 = vmatpush.msra.mxu0 0.0
  %1923 = vmatpush.msra.mxu0 0.0
  %1924 = vmatpush.msra.mxu0 0.0
  %1925 = vmatpush.msra.mxu0 0.0
  %1926 = vmatpush.msra.mxu0 0.0
  %1927 = vmatpush.msra.mxu0 0.0
  %1928 = vmatpush.msra.mxu0 0.0
  %1929 = vmatpush.msra.mxu0 0.0
  %1930 = vmatpush.msra.mxu0 0.0
  %1931 = vmatpush.msra.mxu0 %v1757
  %1932 = vmatmul.f32.gmra.mxu0 %v1914
  %v1933 = vpop.f32.mrf.mxu0
  %v1934 = vadd.f32 0.0, %v1933
  %1935 = vdwg.mxu0
  %v1936 = vadd.f32 %v1701, %v1934
  %v1937 = vtanh.pop %v1936
  %1938 = vst.msk [vmem:[#allocation3 + $0x30] sm:$0xff] %vm1415, %v1937
  %v1940 = vsel %vm1415, %v1937, 0
  %1942 = vmatpush.msra.mxu0 0.0
  %1943 = vmatpush.msra.mxu0 0.0
  %1944 = vmatpush.msra.mxu0 0.0
  %1945 = vmatpush.msra.mxu0 0.0
  %1946 = vmatpush.msra.mxu0 0.0
  %1947 = vmatpush.msra.mxu0 0.0
  %1948 = vmatpush.msra.mxu0 0.0
  %1949 = vmatpush.msra.mxu0 0.0
  %1950 = vmatpush.msra.mxu0 0.0
  %1951 = vmatpush.msra.mxu0 0.0
  %1952 = vmatpush.msra.mxu0 0.0
  %1953 = vmatpush.msra.mxu0 0.0
  %1954 = vmatpush.msra.mxu0 0.0
  %1955 = vmatpush.msra.mxu0 0.0
  %1956 = vmatpush.msra.mxu0 0.0
  %1957 = vmatpush.msra.mxu0 %v1757
  %1958 = vmatmul.f32.gmra.mxu0 %v1940
  %v1959 = vpop.f32.mrf.mxu0
  %v1960 = vadd.f32 0.0, %v1959
  %1961 = vdwg.mxu0
  %v1962 = vadd.f32 %v1704, %v1960
  %v1963 = vtanh.pop %v1962
  %1964 = vst.msk [vmem:[#allocation3 + $0x38] sm:$0xff] %vm1415, %v1963
  %v1966 = vsel %vm1415, %v1963, 0
  %1968 = vmatpush.msra.mxu0 0.0
  %1969 = vmatpush.msra.mxu0 0.0
  %1970 = vmatpush.msra.mxu0 0.0
  %1971 = vmatpush.msra.mxu0 0.0
  %1972 = vmatpush.msra.mxu0 0.0
  %1973 = vmatpush.msra.mxu0 0.0
  %1974 = vmatpush.msra.mxu0 0.0
  %1975 = vmatpush.msra.mxu0 0.0
  %1976 = vmatpush.msra.mxu0 0.0
  %1977 = vmatpush.msra.mxu0 0.0
  %1978 = vmatpush.msra.mxu0 0.0
  %1979 = vmatpush.msra.mxu0 0.0
  %1980 = vmatpush.msra.mxu0 0.0
  %1981 = vmatpush.msra.mxu0 0.0
  %1982 = vmatpush.msra.mxu0 0.0
  %1983 = vmatpush.msra.mxu0 %v1757
  %1984 = vmatmul.f32.gmra.mxu0 %v1966
  %v1985 = vpop.f32.mrf.mxu0
  %v1986 = vadd.f32 0.0, %v1985
  %1987 = vdwg.mxu0
  %v1988 = vadd.f32 %v1707, %v1986
  %v1989 = vtanh.pop %v1988
  %1990 = vst.msk [vmem:[#allocation3 + $0x40] sm:$0xff] %vm1415, %v1989
  %v1992 = vsel %vm1415, %v1989, 0
  %1994 = vmatpush.msra.mxu0 0.0
  %1995 = vmatpush.msra.mxu0 0.0
  %1996 = vmatpush.msra.mxu0 0.0
  %1997 = vmatpush.msra.mxu0 0.0
  %1998 = vmatpush.msra.mxu0 0.0
  %1999 = vmatpush.msra.mxu0 0.0
  %2000 = vmatpush.msra.mxu0 0.0
  %2001 = vmatpush.msra.mxu0 0.0
  %2002 = vmatpush.msra.mxu0 0.0
  %2003 = vmatpush.msra.mxu0 0.0
  %2004 = vmatpush.msra.mxu0 0.0
  %2005 = vmatpush.msra.mxu0 0.0
  %2006 = vmatpush.msra.mxu0 0.0
  %2007 = vmatpush.msra.mxu0 0.0
  %2008 = vmatpush.msra.mxu0 0.0
  %2009 = vmatpush.msra.mxu0 %v1757
  %2010 = vmatmul.f32.gmra.mxu0 %v1992
  %v2011 = vpop.f32.mrf.mxu0
  %v2012 = vadd.f32 0.0, %v2011
  %2013 = vdwg.mxu0
  %v2014 = vadd.f32 %v1710, %v2012
  %v2015 = vtanh.pop %v2014
  %2016 = vst.msk [vmem:[#allocation3 + $0x48] sm:$0xff] %vm1415, %v2015
  %v2018 = vsel %vm1415, %v2015, 0
  %2020 = vmatpush.msra.mxu0 0.0
  %2021 = vmatpush.msra.mxu0 0.0
  %2022 = vmatpush.msra.mxu0 0.0
  %2023 = vmatpush.msra.mxu0 0.0
  %2024 = vmatpush.msra.mxu0 0.0
  %2025 = vmatpush.msra.mxu0 0.0
  %2026 = vmatpush.msra.mxu0 0.0
  %2027 = vmatpush.msra.mxu0 0.0
  %2028 = vmatpush.msra.mxu0 0.0
  %2029 = vmatpush.msra.mxu0 0.0
  %2030 = vmatpush.msra.mxu0 0.0
  %2031 = vmatpush.msra.mxu0 0.0
  %2032 = vmatpush.msra.mxu0 0.0
  %2033 = vmatpush.msra.mxu0 0.0
  %2034 = vmatpush.msra.mxu0 0.0
  %2035 = vmatpush.msra.mxu0 %v1757
  %2036 = vmatmul.f32.gmra.mxu0 %v2018
  %v2037 = vpop.f32.mrf.mxu0
  %v2038 = vadd.f32 0.0, %v2037
  %2039 = vdwg.mxu0
  %v2040 = vadd.f32 %v1713, %v2038
  %v2041 = vtanh.pop %v2040
  %2042 = vst.msk [vmem:[#allocation3 + $0x50] sm:$0xff] %vm1415, %v2041
  %v2044 = vsel %vm1415, %v2041, 0
  %2046 = vmatpush.msra.mxu0 0.0
  %2047 = vmatpush.msra.mxu0 0.0
  %2048 = vmatpush.msra.mxu0 0.0
  %2049 = vmatpush.msra.mxu0 0.0
  %2050 = vmatpush.msra.mxu0 0.0
  %2051 = vmatpush.msra.mxu0 0.0
  %2052 = vmatpush.msra.mxu0 0.0
  %2053 = vmatpush.msra.mxu0 0.0
  %2054 = vmatpush.msra.mxu0 0.0
  %2055 = vmatpush.msra.mxu0 0.0
  %2056 = vmatpush.msra.mxu0 0.0
  %2057 = vmatpush.msra.mxu0 0.0
  %2058 = vmatpush.msra.mxu0 0.0
  %2059 = vmatpush.msra.mxu0 0.0
  %2060 = vmatpush.msra.mxu0 0.0
  %2061 = vmatpush.msra.mxu0 %v1757
  %2062 = vmatmul.f32.gmra.mxu0 %v2044
  %v2063 = vpop.f32.mrf.mxu0
  %v2064 = vadd.f32 0.0, %v2063
  %2065 = vdwg.mxu0
  %v2066 = vadd.f32 %v1716, %v2064
  %v2067 = vtanh.pop %v2066
  %2068 = vst.msk [vmem:[#allocation3 + $0x58] sm:$0xff] %vm1415, %v2067
  %v2070 = vsel %vm1415, %v2067, 0
  %2072 = vmatpush.msra.mxu0 0.0
  %2073 = vmatpush.msra.mxu0 0.0
  %2074 = vmatpush.msra.mxu0 0.0
  %2075 = vmatpush.msra.mxu0 0.0
  %2076 = vmatpush.msra.mxu0 0.0
  %2077 = vmatpush.msra.mxu0 0.0
  %2078 = vmatpush.msra.mxu0 0.0
  %2079 = vmatpush.msra.mxu0 0.0
  %2080 = vmatpush.msra.mxu0 0.0
  %2081 = vmatpush.msra.mxu0 0.0
  %2082 = vmatpush.msra.mxu0 0.0
  %2083 = vmatpush.msra.mxu0 0.0
  %2084 = vmatpush.msra.mxu0 0.0
  %2085 = vmatpush.msra.mxu0 0.0
  %2086 = vmatpush.msra.mxu0 0.0
  %2087 = vmatpush.msra.mxu0 %v1757
  %2088 = vmatmul.f32.gmra.mxu0 %v2070
  %v2089 = vpop.f32.mrf.mxu0
  %v2090 = vadd.f32 0.0, %v2089
  %2091 = vdwg.mxu0
  %v2092 = vadd.f32 %v1719, %v2090
  %v2093 = vtanh.pop %v2092
  %2094 = vst.msk [vmem:[#allocation3 + $0x60] sm:$0xff] %vm1415, %v2093
  %v2096 = vsel %vm1415, %v2093, 0
  %2098 = vmatpush.msra.mxu0 0.0
  %2099 = vmatpush.msra.mxu0 0.0
  %2100 = vmatpush.msra.mxu0 0.0
  %2101 = vmatpush.msra.mxu0 0.0
  %2102 = vmatpush.msra.mxu0 0.0
  %2103 = vmatpush.msra.mxu0 0.0
  %2104 = vmatpush.msra.mxu0 0.0
  %2105 = vmatpush.msra.mxu0 0.0
  %2106 = vmatpush.msra.mxu0 0.0
  %2107 = vmatpush.msra.mxu0 0.0
  %2108 = vmatpush.msra.mxu0 0.0
  %2109 = vmatpush.msra.mxu0 0.0
  %2110 = vmatpush.msra.mxu0 0.0
  %2111 = vmatpush.msra.mxu0 0.0
  %2112 = vmatpush.msra.mxu0 0.0
  %2113 = vmatpush.msra.mxu0 %v1757
  %2114 = vmatmul.f32.gmra.mxu0 %v2096
  %v2115 = vpop.f32.mrf.mxu0
  %v2116 = vadd.f32 0.0, %v2115
  %2117 = vdwg.mxu0
  %v2118 = vadd.f32 %v1722, %v2116
  %v2119 = vtanh.pop %v2118
  %2120 = vst.msk [vmem:[#allocation3 + $0x68] sm:$0xff] %vm1415, %v2119
  %v2122 = vsel %vm1415, %v2119, 0
  %2124 = vmatpush.msra.mxu0 0.0
  %2125 = vmatpush.msra.mxu0 0.0
  %2126 = vmatpush.msra.mxu0 0.0
  %2127 = vmatpush.msra.mxu0 0.0
  %2128 = vmatpush.msra.mxu0 0.0
  %2129 = vmatpush.msra.mxu0 0.0
  %2130 = vmatpush.msra.mxu0 0.0
  %2131 = vmatpush.msra.mxu0 0.0
  %2132 = vmatpush.msra.mxu0 0.0
  %2133 = vmatpush.msra.mxu0 0.0
  %2134 = vmatpush.msra.mxu0 0.0
  %2135 = vmatpush.msra.mxu0 0.0
  %2136 = vmatpush.msra.mxu0 0.0
  %2137 = vmatpush.msra.mxu0 0.0
  %2138 = vmatpush.msra.mxu0 0.0
  %2139 = vmatpush.msra.mxu0 %v1757
  %2140 = vmatmul.f32.gmra.mxu0 %v2122
  %v2141 = vpop.f32.mrf.mxu0
  %v2142 = vadd.f32 0.0, %v2141
  %2143 = vdwg.mxu0
  %v2144 = vadd.f32 %v1725, %v2142
  %v2145 = vtanh.pop %v2144
  %2146 = vst.msk [vmem:[#allocation3 + $0x70] sm:$0xff] %vm1415, %v2145
  %v2148 = vsel %vm1415, %v2145, 0
  %2150 = vmatpush.msra.mxu0 0.0
  %2151 = vmatpush.msra.mxu0 0.0
  %2152 = vmatpush.msra.mxu0 0.0
  %2153 = vmatpush.msra.mxu0 0.0
  %2154 = vmatpush.msra.mxu0 0.0
  %2155 = vmatpush.msra.mxu0 0.0
  %2156 = vmatpush.msra.mxu0 0.0
  %2157 = vmatpush.msra.mxu0 0.0
  %2158 = vmatpush.msra.mxu0 0.0
  %2159 = vmatpush.msra.mxu0 0.0
  %2160 = vmatpush.msra.mxu0 0.0
  %2161 = vmatpush.msra.mxu0 0.0
  %2162 = vmatpush.msra.mxu0 0.0
  %2163 = vmatpush.msra.mxu0 0.0
  %2164 = vmatpush.msra.mxu0 0.0
  %2165 = vmatpush.msra.mxu0 %v1757
  %2166 = vmatmul.f32.gmra.mxu0 %v2148
  %v2167 = vpop.f32.mrf.mxu0
  %v2168 = vadd.f32 0.0, %v2167
  %2169 = vdwg.mxu0
  %v2170 = vadd.f32 %v1728, %v2168
  %v2171 = vtanh.pop %v2170
  %2172 = vst.msk [vmem:[#allocation3 + $0x78] sm:$0xff] %vm1415, %v2171
  %v2174 = vsel %vm1415, %v2171, 0
  %2176 = vmatpush.msra.mxu0 0.0
  %2177 = vmatpush.msra.mxu0 0.0
  %2178 = vmatpush.msra.mxu0 0.0
  %2179 = vmatpush.msra.mxu0 0.0
  %2180 = vmatpush.msra.mxu0 0.0
  %2181 = vmatpush.msra.mxu0 0.0
  %2182 = vmatpush.msra.mxu0 0.0
  %2183 = vmatpush.msra.mxu0 0.0
  %2184 = vmatpush.msra.mxu0 0.0
  %2185 = vmatpush.msra.mxu0 0.0
  %2186 = vmatpush.msra.mxu0 0.0
  %2187 = vmatpush.msra.mxu0 0.0
  %2188 = vmatpush.msra.mxu0 0.0
  %2189 = vmatpush.msra.mxu0 0.0
  %2190 = vmatpush.msra.mxu0 0.0
  %2191 = vmatpush.msra.mxu0 %v1757
  %2192 = vmatmul.f32.gmra.mxu0 %v2174
  %v2193 = vpop.f32.mrf.mxu0
  %v2194 = vadd.f32 0.0, %v2193
  %2195 = vdwg.mxu0
  %v2196 = vadd.f32 %v1731, %v2194
  %v2197 = vtanh.pop %v2196
  %2198 = vst.msk [vmem:[#allocation3 + $0x80] sm:$0xff] %vm1415, %v2197
  %v2200 = vsel %vm1415, %v2197, 0
  %2202 = vmatpush.msra.mxu0 0.0
  %2203 = vmatpush.msra.mxu0 0.0
  %2204 = vmatpush.msra.mxu0 0.0
  %2205 = vmatpush.msra.mxu0 0.0
  %2206 = vmatpush.msra.mxu0 0.0
  %2207 = vmatpush.msra.mxu0 0.0
  %2208 = vmatpush.msra.mxu0 0.0
  %2209 = vmatpush.msra.mxu0 0.0
  %2210 = vmatpush.msra.mxu0 0.0
  %2211 = vmatpush.msra.mxu0 0.0
  %2212 = vmatpush.msra.mxu0 0.0
  %2213 = vmatpush.msra.mxu0 0.0
  %2214 = vmatpush.msra.mxu0 0.0
  %2215 = vmatpush.msra.mxu0 0.0
  %2216 = vmatpush.msra.mxu0 0.0
  %2217 = vmatpush.msra.mxu0 %v1757
  %2218 = vmatmul.f32.gmra.mxu0 %v2200
  %v2219 = vpop.f32.mrf.mxu0
  %v2220 = vadd.f32 0.0, %v2219
  %2221 = vdwg.mxu0
  %v2222 = vadd.f32 %v1734, %v2220
  %v2223 = vtanh.pop %v2222
  %2224 = vst.msk [vmem:[#allocation3 + $0x88] sm:$0xff] %vm1415, %v2223
  %v2226 = vsel %vm1415, %v2223, 0
  %2228 = vmatpush.msra.mxu0 0.0
  %2229 = vmatpush.msra.mxu0 0.0
  %2230 = vmatpush.msra.mxu0 0.0
  %2231 = vmatpush.msra.mxu0 0.0
  %2232 = vmatpush.msra.mxu0 0.0
  %2233 = vmatpush.msra.mxu0 0.0
  %2234 = vmatpush.msra.mxu0 0.0
  %2235 = vmatpush.msra.mxu0 0.0
  %2236 = vmatpush.msra.mxu0 0.0
  %2237 = vmatpush.msra.mxu0 0.0
  %2238 = vmatpush.msra.mxu0 0.0
  %2239 = vmatpush.msra.mxu0 0.0
  %2240 = vmatpush.msra.mxu0 0.0
  %2241 = vmatpush.msra.mxu0 0.0
  %2242 = vmatpush.msra.mxu0 0.0
  %2243 = vmatpush.msra.mxu0 %v1757
  %2244 = vmatmul.f32.gmra.mxu0 %v2226
  %v2245 = vpop.f32.mrf.mxu0
  %v2246 = vadd.f32 0.0, %v2245
  %2247 = vdwg.mxu0
  %v2248 = vadd.f32 %v1737, %v2246
  %v2249 = vtanh.pop %v2248
  %2250 = vst.msk [vmem:[#allocation3 + $0x90] sm:$0xff] %vm1415, %v2249
  %v2252 = vsel %vm1415, %v2249, 0
  %2254 = vmatpush.msra.mxu0 0.0
  %2255 = vmatpush.msra.mxu0 0.0
  %2256 = vmatpush.msra.mxu0 0.0
  %2257 = vmatpush.msra.mxu0 0.0
  %2258 = vmatpush.msra.mxu0 0.0
  %2259 = vmatpush.msra.mxu0 0.0
  %2260 = vmatpush.msra.mxu0 0.0
  %2261 = vmatpush.msra.mxu0 0.0
  %2262 = vmatpush.msra.mxu0 0.0
  %2263 = vmatpush.msra.mxu0 0.0
  %2264 = vmatpush.msra.mxu0 0.0
  %2265 = vmatpush.msra.mxu0 0.0
  %2266 = vmatpush.msra.mxu0 0.0
  %2267 = vmatpush.msra.mxu0 0.0
  %2268 = vmatpush.msra.mxu0 0.0
  %2269 = vmatpush.msra.mxu0 %v1757
  %2270 = vmatmul.f32.gmra.mxu0 %v2252
  %v2271 = vpop.f32.mrf.mxu0
  %v2272 = vadd.f32 0.0, %v2271
  %2273 = vdwg.mxu0
  %v2274 = vadd.f32 %v1740, %v2272
  %v2275 = vtanh.pop %v2274
  %2276 = vst.msk [vmem:[#allocation3 + $0x98] sm:$0xff] %vm1415, %v2275
  %v2278 = vsel %vm1415, %v2275, 0
  %2280 = vmatpush.msra.mxu0 0.0
  %2281 = vmatpush.msra.mxu0 0.0
  %2282 = vmatpush.msra.mxu0 0.0
  %2283 = vmatpush.msra.mxu0 0.0
  %2284 = vmatpush.msra.mxu0 0.0
  %2285 = vmatpush.msra.mxu0 0.0
  %2286 = vmatpush.msra.mxu0 0.0
  %2287 = vmatpush.msra.mxu0 0.0
  %2288 = vmatpush.msra.mxu0 0.0
  %2289 = vmatpush.msra.mxu0 0.0
  %2290 = vmatpush.msra.mxu0 0.0
  %2291 = vmatpush.msra.mxu0 0.0
  %2292 = vmatpush.msra.mxu0 0.0
  %2293 = vmatpush.msra.mxu0 0.0
  %2294 = vmatpush.msra.mxu0 0.0
  %2295 = vmatpush.msra.mxu0 %v1757
  %2296 = vmatmul.f32.gmra.mxu0 %v2278
  %v2297 = vpop.f32.mrf.mxu0
  %v2298 = vadd.f32 0.0, %v2297
  %2299 = vdwg.mxu0
  %v2300 = vadd.f32 %v1743, %v2298
  %v2301 = vtanh.pop %v2300
  %2302 = vst.msk [vmem:[#allocation3 + $0xa0] sm:$0xff] %vm1415, %v2301
  %v2304 = vsel %vm1415, %v2301, 0
  %2306 = vmatpush.msra.mxu0 0.0
  %2307 = vmatpush.msra.mxu0 0.0
  %2308 = vmatpush.msra.mxu0 0.0
  %2309 = vmatpush.msra.mxu0 0.0
  %2310 = vmatpush.msra.mxu0 0.0
  %2311 = vmatpush.msra.mxu0 0.0
  %2312 = vmatpush.msra.mxu0 0.0
  %2313 = vmatpush.msra.mxu0 0.0
  %2314 = vmatpush.msra.mxu0 0.0
  %2315 = vmatpush.msra.mxu0 0.0
  %2316 = vmatpush.msra.mxu0 0.0
  %2317 = vmatpush.msra.mxu0 0.0
  %2318 = vmatpush.msra.mxu0 0.0
  %2319 = vmatpush.msra.mxu0 0.0
  %2320 = vmatpush.msra.mxu0 0.0
  %2321 = vmatpush.msra.mxu0 %v1757
  %2322 = vmatmul.f32.gmra.mxu0 %v2304
  %v2323 = vpop.f32.mrf.mxu0
  %v2324 = vadd.f32 0.0, %v2323
  %2325 = vdwg.mxu0
  %v2326 = vadd.f32 %v1746, %v2324
  %v2327 = vtanh.pop %v2326
  %2328 = vst.msk [vmem:[#allocation3 + $0xa8] sm:$0xff] %vm1415, %v2327
  %v2330 = vsel %vm1415, %v2327, 0
  %2332 = vmatpush.msra.mxu0 0.0
  %2333 = vmatpush.msra.mxu0 0.0
  %2334 = vmatpush.msra.mxu0 0.0
  %2335 = vmatpush.msra.mxu0 0.0
  %2336 = vmatpush.msra.mxu0 0.0
  %2337 = vmatpush.msra.mxu0 0.0
  %2338 = vmatpush.msra.mxu0 0.0
  %2339 = vmatpush.msra.mxu0 0.0
  %2340 = vmatpush.msra.mxu0 0.0
  %2341 = vmatpush.msra.mxu0 0.0
  %2342 = vmatpush.msra.mxu0 0.0
  %2343 = vmatpush.msra.mxu0 0.0
  %2344 = vmatpush.msra.mxu0 0.0
  %2345 = vmatpush.msra.mxu0 0.0
  %2346 = vmatpush.msra.mxu0 0.0
  %2347 = vmatpush.msra.mxu0 %v1757
  %2348 = vmatmul.f32.gmra.mxu0 %v2330
  %v2349 = vpop.f32.mrf.mxu0
  %v2350 = vadd.f32 0.0, %v2349
  %2351 = vdwg.mxu0
  %v2352 = vadd.f32 %v1749, %v2350
  %v2353 = vtanh.pop %v2352
  %2354 = vst.msk [vmem:[#allocation3 + $0xb0] sm:$0xff] %vm1415, %v2353
  %v2356 = vsel %vm1415, %v2353, 0
  %2358 = vmatpush.msra.mxu0 0.0
  %2359 = vmatpush.msra.mxu0 0.0
  %2360 = vmatpush.msra.mxu0 0.0
  %2361 = vmatpush.msra.mxu0 0.0
  %2362 = vmatpush.msra.mxu0 0.0
  %2363 = vmatpush.msra.mxu0 0.0
  %2364 = vmatpush.msra.mxu0 0.0
  %2365 = vmatpush.msra.mxu0 0.0
  %2366 = vmatpush.msra.mxu0 0.0
  %2367 = vmatpush.msra.mxu0 0.0
  %2368 = vmatpush.msra.mxu0 0.0
  %2369 = vmatpush.msra.mxu0 0.0
  %2370 = vmatpush.msra.mxu0 0.0
  %2371 = vmatpush.msra.mxu0 0.0
  %2372 = vmatpush.msra.mxu0 0.0
  %2373 = vmatpush.msra.mxu0 %v1757
  %2374 = vmatmul.f32.gmra.mxu0 %v2356
  %v2375 = vpop.f32.mrf.mxu0
  %v2376 = vadd.f32 0.0, %v2375
  %2377 = vdwg.mxu0
  %v2378 = vadd.f32 %v1752, %v2376
  %v2379 = vtanh.pop %v2378
  %2380 = vst.msk [vmem:[#allocation3 + $0xb8] sm:$0xff] %vm1415, %v2379
  %v2382 = vsel %vm1415, %v2379, 0
  %2384 = vmatpush.msra.mxu0 0.0
  %2385 = vmatpush.msra.mxu0 0.0
  %2386 = vmatpush.msra.mxu0 0.0
  %2387 = vmatpush.msra.mxu0 0.0
  %2388 = vmatpush.msra.mxu0 0.0
  %2389 = vmatpush.msra.mxu0 0.0
  %2390 = vmatpush.msra.mxu0 0.0
  %2391 = vmatpush.msra.mxu0 0.0
  %2392 = vmatpush.msra.mxu0 0.0
  %2393 = vmatpush.msra.mxu0 0.0
  %2394 = vmatpush.msra.mxu0 0.0
  %2395 = vmatpush.msra.mxu0 0.0
  %2396 = vmatpush.msra.mxu0 0.0
  %2397 = vmatpush.msra.mxu0 0.0
  %2398 = vmatpush.msra.mxu0 0.0
  %2399 = vmatpush.msra.mxu0 %v1757
  %2400 = vmatmul.f32.gmra.mxu0 %v2382
  %v2401 = vpop.f32.mrf.mxu0
  %v2402 = vadd.f32 0.0, %v2401
  %2403 = vdwg.mxu0
  %v2404 = vadd.f32 %v1755, %v2402
  %v2405 = vtanh.pop %v2404
  %2406 = vst.msk [vmem:[#allocation3 + $0xc0] sm:$0xff] %vm1415, %v2405
  %v2407 = vld [vmem:[#allocation3] sm:$0xff]
  %v2408 = vld [vmem:[#allocation3 + $0x8] sm:$0xff]
  %v2409 = vld [vmem:[#allocation3 + $0x10] sm:$0xff]
  %v2410 = vld [vmem:[#allocation3 + $0x18] sm:$0xff]
  %v2411 = vld [vmem:[#allocation3 + $0x20] sm:$0xff]
  %v2412 = vld [vmem:[#allocation3 + $0x28] sm:$0xff]
  %v2413 = vld [vmem:[#allocation3 + $0x30] sm:$0xff]
  %v2414 = vld [vmem:[#allocation3 + $0x38] sm:$0xff]
  %v2415 = vld [vmem:[#allocation3 + $0x40] sm:$0xff]
  %v2416 = vld [vmem:[#allocation3 + $0x48] sm:$0xff]
  %v2417 = vld [vmem:[#allocation3 + $0x50] sm:$0xff]
  %v2418 = vld [vmem:[#allocation3 + $0x58] sm:$0xff]
  %v2419 = vld [vmem:[#allocation3 + $0x60] sm:$0xff]
  %v2420 = vld [vmem:[#allocation3 + $0x68] sm:$0xff]
  %v2421 = vld [vmem:[#allocation3 + $0x70] sm:$0xff]
  %v2422 = vld [vmem:[#allocation3 + $0x78] sm:$0xff]
  %v2423 = vld [vmem:[#allocation3 + $0x80] sm:$0xff]
  %v2424 = vld [vmem:[#allocation3 + $0x88] sm:$0xff]
  %v2425 = vld [vmem:[#allocation3 + $0x90] sm:$0xff]
  %v2426 = vld [vmem:[#allocation3 + $0x98] sm:$0xff]
  %v2427 = vld [vmem:[#allocation3 + $0xa0] sm:$0xff]
  %v2428 = vld [vmem:[#allocation3 + $0xa8] sm:$0xff]
  %v2429 = vld [vmem:[#allocation3 + $0xb0] sm:$0xff]
  %v2430 = vld [vmem:[#allocation3 + $0xb8] sm:$0xff]
  %v2431 = vld [vmem:[#allocation3 + $0xc0] sm:$0xff]
  %v2432 = vld [vmem:[%s12] sm:$0xff]
  %v2433 = vld [vmem:[%s13] sm:$0x1]
  %v2435 = vperm.slane %v2433, 0
  %v2438 = vsel %vm1415, %v2407, 0
  %v2441 = vsel %vm1415, %v2408, 0
  %v2444 = vsel %vm1415, %v2409, 0
  %v2447 = vsel %vm1415, %v2410, 0
  %v2450 = vsel %vm1415, %v2411, 0
  %v2453 = vsel %vm1415, %v2412, 0
  %v2456 = vsel %vm1415, %v2413, 0
  %v2459 = vsel %vm1415, %v2414, 0
  %v2462 = vsel %vm1415, %v2415, 0
  %v2465 = vsel %vm1415, %v2416, 0
  %v2468 = vsel %vm1415, %v2417, 0
  %v2471 = vsel %vm1415, %v2418, 0
  %v2474 = vsel %vm1415, %v2419, 0
  %v2477 = vsel %vm1415, %v2420, 0
  %v2480 = vsel %vm1415, %v2421, 0
  %v2483 = vsel %vm1415, %v2422, 0
  %v2486 = vsel %vm1415, %v2423, 0
  %v2489 = vsel %vm1415, %v2424, 0
  %v2492 = vsel %vm1415, %v2425, 0
  %v2495 = vsel %vm1415, %v2426, 0
  %v2498 = vsel %vm1415, %v2427, 0
  %v2501 = vsel %vm1415, %v2428, 0
  %v2504 = vsel %vm1415, %v2429, 0
  %v2507 = vsel %vm1415, %v2430, 0
  %v2510 = vsel %vm1415, %v2431, 0
  %2512 = vmatpush.msra.mxu0 0.0
  %2513 = vmatpush.msra.mxu0 0.0
  %2514 = vmatpush.msra.mxu0 0.0
  %2515 = vmatpush.msra.mxu0 0.0
  %2516 = vmatpush.msra.mxu0 0.0
  %2517 = vmatpush.msra.mxu0 0.0
  %2518 = vmatpush.msra.mxu0 0.0
  %2519 = vmatpush.msra.mxu0 0.0
  %2520 = vmatpush.msra.mxu0 0.0
  %2521 = vmatpush.msra.mxu0 0.0
  %2522 = vmatpush.msra.mxu0 0.0
  %2523 = vmatpush.msra.mxu0 0.0
  %2524 = vmatpush.msra.mxu0 0.0
  %2525 = vmatpush.msra.mxu0 0.0
  %2526 = vmatpush.msra.mxu0 0.0
  %2527 = vmatpush.msra.mxu0 %v2432
  %2528 = vmatmul.f32.gmra.mxu0 %v2438
  %v2529 = vpop.f32.mrf.mxu0
  %v2530 = vadd.f32 %v2435, %v2529
  %2531 = vmatmul.f32.gmra.mxu0 %v2441
  %v2532 = vpop.f32.mrf.mxu0
  %v2533 = vadd.f32 %v2435, %v2532
  %2534 = vmatmul.f32.gmra.mxu0 %v2444
  %v2535 = vpop.f32.mrf.mxu0
  %v2536 = vadd.f32 %v2435, %v2535
  %2537 = vmatmul.f32.gmra.mxu0 %v2447
  %v2538 = vpop.f32.mrf.mxu0
  %v2539 = vadd.f32 %v2435, %v2538
  %2540 = vmatmul.f32.gmra.mxu0 %v2450
  %v2541 = vpop.f32.mrf.mxu0
  %v2542 = vadd.f32 %v2435, %v2541
  %2543 = vmatmul.f32.gmra.mxu0 %v2453
  %v2544 = vpop.f32.mrf.mxu0
  %v2545 = vadd.f32 %v2435, %v2544
  %2546 = vmatmul.f32.gmra.mxu0 %v2456
  %v2547 = vpop.f32.mrf.mxu0
  %v2548 = vadd.f32 %v2435, %v2547
  %2549 = vmatmul.f32.gmra.mxu0 %v2459
  %v2550 = vpop.f32.mrf.mxu0
  %v2551 = vadd.f32 %v2435, %v2550
  %2552 = vmatmul.f32.gmra.mxu0 %v2462
  %v2553 = vpop.f32.mrf.mxu0
  %v2554 = vadd.f32 %v2435, %v2553
  %2555 = vmatmul.f32.gmra.mxu0 %v2465
  %v2556 = vpop.f32.mrf.mxu0
  %v2557 = vadd.f32 %v2435, %v2556
  %2558 = vmatmul.f32.gmra.mxu0 %v2468
  %v2559 = vpop.f32.mrf.mxu0
  %v2560 = vadd.f32 %v2435, %v2559
  %2561 = vmatmul.f32.gmra.mxu0 %v2471
  %v2562 = vpop.f32.mrf.mxu0
  %v2563 = vadd.f32 %v2435, %v2562
  %2564 = vmatmul.f32.gmra.mxu0 %v2474
  %v2565 = vpop.f32.mrf.mxu0
  %v2566 = vadd.f32 %v2435, %v2565
  %2567 = vmatmul.f32.gmra.mxu0 %v2477
  %v2568 = vpop.f32.mrf.mxu0
  %v2569 = vadd.f32 %v2435, %v2568
  %2570 = vmatmul.f32.gmra.mxu0 %v2480
  %v2571 = vpop.f32.mrf.mxu0
  %v2572 = vadd.f32 %v2435, %v2571
  %2573 = vmatmul.f32.gmra.mxu0 %v2483
  %v2574 = vpop.f32.mrf.mxu0
  %v2575 = vadd.f32 %v2435, %v2574
  %2576 = vmatmul.f32.gmra.mxu0 %v2486
  %v2577 = vpop.f32.mrf.mxu0
  %v2578 = vadd.f32 %v2435, %v2577
  %2579 = vmatmul.f32.gmra.mxu0 %v2489
  %v2580 = vpop.f32.mrf.mxu0
  %v2581 = vadd.f32 %v2435, %v2580
  %2582 = vmatmul.f32.gmra.mxu0 %v2492
  %v2583 = vpop.f32.mrf.mxu0
  %v2584 = vadd.f32 %v2435, %v2583
  %2585 = vmatmul.f32.gmra.mxu0 %v2495
  %v2586 = vpop.f32.mrf.mxu0
  %v2587 = vadd.f32 %v2435, %v2586
  %2588 = vmatmul.f32.gmra.mxu0 %v2498
  %v2589 = vpop.f32.mrf.mxu0
  %v2590 = vadd.f32 %v2435, %v2589
  %2591 = vmatmul.f32.gmra.mxu0 %v2501
  %v2592 = vpop.f32.mrf.mxu0
  %v2593 = vadd.f32 %v2435, %v2592
  %2594 = vmatmul.f32.gmra.mxu0 %v2504
  %v2595 = vpop.f32.mrf.mxu0
  %v2596 = vadd.f32 %v2435, %v2595
  %2597 = vmatmul.f32.gmra.mxu0 %v2507
  %v2598 = vpop.f32.mrf.mxu0
  %v2599 = vadd.f32 %v2435, %v2598
  %2600 = vmatmul.f32.gmra.mxu0 %v2510
  %v2601 = vpop.f32.mrf.mxu0
  %v2602 = vadd.f32 %v2435, %v2601
  %2603 = vdwg.mxu0
  %v2604 = vld [vmem:[%s14] sm:$0xff]
  %v2605 = vld [vmem:[%s14 + $0x8] sm:$0xff]
  %v2606 = vld [vmem:[%s14 + $0x10] sm:$0xff]
  %v2607 = vld [vmem:[%s14 + $0x18] sm:$0xff]
  %v2608 = vld [vmem:[%s14 + $0x20] sm:$0xff]
  %v2609 = vld [vmem:[%s14 + $0x28] sm:$0xff]
  %v2610 = vld [vmem:[%s14 + $0x30] sm:$0xff]
  %v2611 = vld [vmem:[%s14 + $0x38] sm:$0xff]
  %v2612 = vld [vmem:[%s15] sm:$0x1]
  %v2614 = vperm.slane %v2612, 0
  %v2617 = vsel %vm281, %v2530, 0
  %v2620 = vsel %vm281, %v2533, 0
  %v2623 = vsel %vm281, %v2536, 0
  %v2626 = vsel %vm281, %v2539, 0
  %v2629 = vsel %vm281, %v2542, 0
  %v2632 = vsel %vm281, %v2545, 0
  %v2635 = vsel %vm281, %v2548, 0
  %v2638 = vsel %vm281, %v2551, 0
  %v2641 = vsel %vm281, %v2554, 0
  %v2644 = vsel %vm281, %v2557, 0
  %v2647 = vsel %vm281, %v2560, 0
  %v2650 = vsel %vm281, %v2563, 0
  %v2653 = vsel %vm281, %v2566, 0
  %v2656 = vsel %vm281, %v2569, 0
  %v2659 = vsel %vm281, %v2572, 0
  %v2662 = vsel %vm281, %v2575, 0
  %v2665 = vsel %vm281, %v2578, 0
  %v2668 = vsel %vm281, %v2581, 0
  %v2671 = vsel %vm281, %v2584, 0
  %v2674 = vsel %vm281, %v2587, 0
  %v2677 = vsel %vm281, %v2590, 0
  %v2680 = vsel %vm281, %v2593, 0
  %v2683 = vsel %vm281, %v2596, 0
  %v2686 = vsel %vm281, %v2599, 0
  %v2689 = vsel %vm281, %v2602, 0
  %2691 = vmatpush.msra.mxu0 0.0
  %2692 = vmatpush.msra.mxu0 0.0
  %2693 = vmatpush.msra.mxu0 0.0
  %2694 = vmatpush.msra.mxu0 0.0
  %2695 = vmatpush.msra.mxu0 0.0
  %2696 = vmatpush.msra.mxu0 0.0
  %2697 = vmatpush.msra.mxu0 0.0
  %2698 = vmatpush.msra.mxu0 0.0
  %2699 = vmatpush.msra.mxu0 %v2611
  %2700 = vmatpush.msra.mxu0 %v2610
  %2701 = vmatpush.msra.mxu0 %v2609
  %2702 = vmatpush.msra.mxu0 %v2608
  %2703 = vmatpush.msra.mxu0 %v2607
  %2704 = vmatpush.msra.mxu0 %v2606
  %2705 = vmatpush.msra.mxu0 %v2605
  %2706 = vmatpush.msra.mxu0 %v2604
  %2707 = vmatmul.f32.gmra.mxu0 %v2617
  %v2708 = vpop.f32.mrf.mxu0
  %v2709 = vadd.f32 %v2614, %v2708
  %2710 = vmatmul.f32.gmra.mxu0 %v2620
  %v2711 = vpop.f32.mrf.mxu0
  %v2712 = vadd.f32 %v2614, %v2711
  %2713 = vmatmul.f32.gmra.mxu0 %v2623
  %v2714 = vpop.f32.mrf.mxu0
  %v2715 = vadd.f32 %v2614, %v2714
  %2716 = vmatmul.f32.gmra.mxu0 %v2626
  %v2717 = vpop.f32.mrf.mxu0
  %v2718 = vadd.f32 %v2614, %v2717
  %2719 = vmatmul.f32.gmra.mxu0 %v2629
  %v2720 = vpop.f32.mrf.mxu0
  %v2721 = vadd.f32 %v2614, %v2720
  %2722 = vmatmul.f32.gmra.mxu0 %v2632
  %v2723 = vpop.f32.mrf.mxu0
  %v2724 = vadd.f32 %v2614, %v2723
  %2725 = vmatmul.f32.gmra.mxu0 %v2635
  %v2726 = vpop.f32.mrf.mxu0
  %v2727 = vadd.f32 %v2614, %v2726
  %2728 = vmatmul.f32.gmra.mxu0 %v2638
  %v2729 = vpop.f32.mrf.mxu0
  %v2730 = vadd.f32 %v2614, %v2729
  %2731 = vmatmul.f32.gmra.mxu0 %v2641
  %v2732 = vpop.f32.mrf.mxu0
  %v2733 = vadd.f32 %v2614, %v2732
  %2734 = vmatmul.f32.gmra.mxu0 %v2644
  %v2735 = vpop.f32.mrf.mxu0
  %v2736 = vadd.f32 %v2614, %v2735
  %2737 = vmatmul.f32.gmra.mxu0 %v2647
  %v2738 = vpop.f32.mrf.mxu0
  %v2739 = vadd.f32 %v2614, %v2738
  %2740 = vmatmul.f32.gmra.mxu0 %v2650
  %v2741 = vpop.f32.mrf.mxu0
  %v2742 = vadd.f32 %v2614, %v2741
  %2743 = vmatmul.f32.gmra.mxu0 %v2653
  %v2744 = vpop.f32.mrf.mxu0
  %v2745 = vadd.f32 %v2614, %v2744
  %2746 = vmatmul.f32.gmra.mxu0 %v2656
  %v2747 = vpop.f32.mrf.mxu0
  %v2748 = vadd.f32 %v2614, %v2747
  %2749 = vmatmul.f32.gmra.mxu0 %v2659
  %v2750 = vpop.f32.mrf.mxu0
  %v2751 = vadd.f32 %v2614, %v2750
  %2752 = vmatmul.f32.gmra.mxu0 %v2662
  %v2753 = vpop.f32.mrf.mxu0
  %v2754 = vadd.f32 %v2614, %v2753
  %2755 = vmatmul.f32.gmra.mxu0 %v2665
  %v2756 = vpop.f32.mrf.mxu0
  %v2757 = vadd.f32 %v2614, %v2756
  %2758 = vmatmul.f32.gmra.mxu0 %v2668
  %v2759 = vpop.f32.mrf.mxu0
  %v2760 = vadd.f32 %v2614, %v2759
  %2761 = vmatmul.f32.gmra.mxu0 %v2671
  %v2762 = vpop.f32.mrf.mxu0
  %v2763 = vadd.f32 %v2614, %v2762
  %2764 = vmatmul.f32.gmra.mxu0 %v2674
  %v2765 = vpop.f32.mrf.mxu0
  %v2766 = vadd.f32 %v2614, %v2765
  %2767 = vmatmul.f32.gmra.mxu0 %v2677
  %v2768 = vpop.f32.mrf.mxu0
  %v2769 = vadd.f32 %v2614, %v2768
  %2770 = vmatmul.f32.gmra.mxu0 %v2680
  %v2771 = vpop.f32.mrf.mxu0
  %v2772 = vadd.f32 %v2614, %v2771
  %2773 = vmatmul.f32.gmra.mxu0 %v2683
  %v2774 = vpop.f32.mrf.mxu0
  %v2775 = vadd.f32 %v2614, %v2774
  %2776 = vmatmul.f32.gmra.mxu0 %v2686
  %v2777 = vpop.f32.mrf.mxu0
  %v2778 = vadd.f32 %v2614, %v2777
  %2779 = vmatmul.f32.gmra.mxu0 %v2689
  %v2780 = vpop.f32.mrf.mxu0
  %v2781 = vadd.f32 %v2614, %v2780
  %2782 = vdwg.mxu0
  %2783 = vst.msk [vmem:[%s17] sm:$0xff] %vm97, %v2709
  %2784 = vst.msk [vmem:[%s17 + $0x8] sm:$0xff] %vm97, %v2712
  %2785 = vst.msk [vmem:[%s17 + $0x10] sm:$0xff] %vm97, %v2715
  %2786 = vst.msk [vmem:[%s17 + $0x18] sm:$0xff] %vm97, %v2718
  %2787 = vst.msk [vmem:[%s17 + $0x20] sm:$0xff] %vm97, %v2721
  %2788 = vst.msk [vmem:[%s17 + $0x28] sm:$0xff] %vm97, %v2724
  %2789 = vst.msk [vmem:[%s17 + $0x30] sm:$0xff] %vm97, %v2727
  %2790 = vst.msk [vmem:[%s17 + $0x38] sm:$0xff] %vm97, %v2730
  %2791 = vst.msk [vmem:[%s17 + $0x40] sm:$0xff] %vm97, %v2733
  %2792 = vst.msk [vmem:[%s17 + $0x48] sm:$0xff] %vm97, %v2736
  %2793 = vst.msk [vmem:[%s17 + $0x50] sm:$0xff] %vm97, %v2739
  %2794 = vst.msk [vmem:[%s17 + $0x58] sm:$0xff] %vm97, %v2742
  %2795 = vst.msk [vmem:[%s17 + $0x60] sm:$0xff] %vm97, %v2745
  %2796 = vst.msk [vmem:[%s17 + $0x68] sm:$0xff] %vm97, %v2748
  %2797 = vst.msk [vmem:[%s17 + $0x70] sm:$0xff] %vm97, %v2751
  %2798 = vst.msk [vmem:[%s17 + $0x78] sm:$0xff] %vm97, %v2754
  %2799 = vst.msk [vmem:[%s17 + $0x80] sm:$0xff] %vm97, %v2757
  %2800 = vst.msk [vmem:[%s17 + $0x88] sm:$0xff] %vm97, %v2760
  %2801 = vst.msk [vmem:[%s17 + $0x90] sm:$0xff] %vm97, %v2763
  %2802 = vst.msk [vmem:[%s17 + $0x98] sm:$0xff] %vm97, %v2766
  %2803 = vst.msk [vmem:[%s17 + $0xa0] sm:$0xff] %vm97, %v2769
  %2804 = vst.msk [vmem:[%s17 + $0xa8] sm:$0xff] %vm97, %v2772
  %2805 = vst.msk [vmem:[%s17 + $0xb0] sm:$0xff] %vm97, %v2775
  %2806 = vst.msk [vmem:[%s17 + $0xb8] sm:$0xff] %vm97, %v2778
  %2807 = vst.msk [vmem:[%s17 + $0xc0] sm:$0xff] %vm97, %v2781
  // Predicated region
  $region70: #{vae_forward.1} parent=0 // pred_check
    _
  $region71: #{vae_forward.1} parent=0 // pred_check_branch
    %2809 = sbr.rel (0) target = $region73
  $region72: #{vae_forward.1} parent=0 // pred_region
    _
  $region73: #{vae_forward.1} parent=0 // pred_fallthru
    _
  // Predicated region
  $region74: #{vae_forward.1} parent=0 // pred_check
    _
  $region75: #{vae_forward.1} parent=0 // pred_check_branch
    %2811 = sbr.rel (0) target = $region77
  $region76: #{vae_forward.1} parent=0 // pred_region
    _
  $region77: #{vae_forward.1} parent=0 // pred_fallthru
    _
  // Predicated region
  $region78: #{vae_forward.1} parent=0 // pred_check
    _
  $region79: #{vae_forward.1} parent=0 // pred_check_branch
    %2813 = sbr.rel (0) target = $region81
  $region80: #{vae_forward.1} parent=0 // pred_region
    _
  $region81: #{vae_forward.1} parent=0 // pred_fallthru
    _
  // Predicated region
  $region82: #{vae_forward.1} parent=0 // pred_check
    _
  $region83: #{vae_forward.1} parent=0 // pred_check_branch
    %2815 = sbr.rel (0) target = $region85
  $region84: #{vae_forward.1} parent=0 // pred_region
    _
  $region85: #{vae_forward.1} parent=0 // pred_fallthru
    _
  // Predicated region
  $region86: #{vae_forward.1} parent=0 // pred_check
    _
  $region87: #{vae_forward.1} parent=0 // pred_check_branch
    %2817 = sbr.rel (0) target = $region89
  $region88: #{vae_forward.1} parent=0 // pred_region
    _
  $region89: #{vae_forward.1} parent=0 // pred_fallthru
    _
  // Predicated region
  $region90: #{vae_forward.1} parent=0 // pred_check
    _
  $region91: #{vae_forward.1} parent=0 // pred_check_branch
    %2819 = sbr.rel (0) target = $region93
  $region92: #{vae_forward.1} parent=0 // pred_region
    _
  $region93: #{vae_forward.1} parent=0 // pred_fallthru
    _
  // Predicated region
  $region94: #{vae_forward.1} parent=0 // pred_check
    _
  $region95: #{vae_forward.1} parent=0 // pred_check_branch
    %2821 = sbr.rel (0) target = $region97
  $region96: #{vae_forward.1} parent=0 // pred_region
    _
  $region97: #{vae_forward.1} parent=0 // pred_fallthru
    _
  // Predicated region
  $region98: #{vae_forward.1} parent=0 // pred_check
    _
  $region99: #{vae_forward.1} parent=0 // pred_check_branch
    %2823 = sbr.rel (0) target = $region101
  $region100: #{vae_forward.1} parent=0 // pred_region
    _
  $region101: #{vae_forward.1} parent=0 // pred_fallthru
    _

</llo_original>
